<compile_context>
chip_gen: v6e
topology: v6e:2x2x1
jax: 0.10.0
libtpu: 0.0.40
codegen_flags: <defaults>
</compile_context>

<pallas_src>
import functools

import jax
import jax.numpy as jnp
from jax import lax
from jax.experimental import pallas as pl
from jax.experimental.pallas import tpu as pltpu


def _round_up(x, m):
    return ((x + m - 1) // m) * m


def _device_kind():
    try:
        return jax.devices()[0].device_kind.lower()
    except Exception:
        return ""


def _vmem_limit_bytes():
    """~75% of physical VMEM, capped at 100 MiB (leaves compiler scratch headroom on v7x)."""
    try:
        cap = int(pltpu.get_tpu_info().vmem_capacity_bytes)
        return min(cap * 3 // 4, 100 * 1024 * 1024)
    except Exception:
        return 64 * 1024 * 1024  # safe default (fits v5e/v6e; conservative enough elsewhere)


def _lstm_kernel(x_ref, wih_ref, whh_ref, b_ref,
                 out_ref, hn_ref, cn_ref,
                 h_sc, c_sc,
                 *, seq_len, time_block, batch_tile, hidden_pad, act_dtype, unroll):
    """Grid = (batch_tiles, time_blocks); one grid step processes `time_block` timesteps.

    x_ref   : (Tt*Bt, I)   bf16  time-major rows of this (batch_tile, time_block) block
    wih_ref : (I,  4*Hp)   bf16  VMEM-resident (constant index map)
    whh_ref : (Hp, 4*Hp)   bf16  VMEM-resident
    b_ref   : (1,  4*Hp)   f32   VMEM-resident
    out_ref : (Tt*Bt, Hp)  bf16  hidden-state stream for this block (halved HBM writeback)
    hn_ref  : (Bt, Hp)     f32   final hidden state of this batch tile
    cn_ref  : (Bt, Hp)     f32   final cell state of this batch tile
    h_sc/c_sc: (Bt, Hp)    f32   recurrent carry across time blocks (scratch)
    """
    Tt, Bt, Hp = time_block, batch_tile, hidden_pad
    t_blk = pl.program_id(1)

    @pl.when(t_blk == 0)
    def _():
        h_sc[...] = jnp.zeros_like(h_sc)
        c_sc[...] = jnp.zeros_like(c_sc)

    wih = wih_ref[...]    # (I, 4Hp)  bf16, resident
    whh = whh_ref[...]    # (Hp, 4Hp) bf16, resident
    bias = b_ref[...]     # (1, 4Hp)  f32

    def step(j, carry):
        h, c = carry                                    # f32 (Bt, Hp)
        r = pl.multiple_of(j * Bt, 16)                  # sublane-aligned row offset (Bt % 16 == 0)

        # Non-recurrent projection for this step.  Independent of h -> with the loop unrolled,
        # the scheduler issues these MXU pushes under earlier steps' EUP-bound gate math, so the
        # x-projection is effectively pipelined against the serial recurrence.
        gx = jnp.dot(x_ref[pl.ds(r, Bt), :], wih,
                     preferred_element_type=jnp.float32) + bias

        # Serial critical chain: only h_prev @ W_hh^T + gate math.
        gates = gx + jnp.dot(h.astype(jnp.bfloat16), whh,
                             preferred_element_type=jnp.float32)

        # 128-lane-aligned gate slices.  act_dtype = bf16 on v6e/v7x (bf16 EUP), f32 on v5e.
        g_act = gates.astype(act_dtype)
        i_g = jax.nn.sigmoid(g_act[:, 0 * Hp:1 * Hp]).astype(jnp.float32)
        f_g = jax.nn.sigmoid(g_act[:, 1 * Hp:2 * Hp]).astype(jnp.float32)
        g_g = jnp.tanh(g_act[:, 2 * Hp:3 * Hp]).astype(jnp.float32)
        o_g = jax.nn.sigmoid(g_act[:, 3 * Hp:4 * Hp]).astype(jnp.float32)

        c_new = f_g * c + i_g * g_g                     # f32 carry / FMAs
        h_new = o_g * jnp.tanh(c_new.astype(act_dtype)).astype(jnp.float32)

        out_ref[pl.ds(r, Bt), :] = h_new.astype(out_ref.dtype)   # bf16 store (lane-dense)

        # Capture (h_n, c_n) in f32 exactly at the last *real* timestep
        # (the time axis may carry up to n_tb-1 zero-padded steps).
        @pl.when(t_blk * Tt + j == seq_len - 1)
        def _():
            hn_ref[...] = h_new
            cn_ref[...] = c_new

        return h_new, c_new

    h_fin, c_fin = lax.fori_loop(0, Tt, step, (h_sc[...], c_sc[...]), unroll=unroll)
    h_sc[...] = h_fin
    c_sc[...] = c_fin


@functools.partial(jax.jit, static_argnames=("time_block", "batch_tile", "unroll"))
def rnn_block_lstm(x, w_ih, w_hh, b_ih, b_hh, *, time_block=32, batch_tile=None, unroll=8):
    """
    x:    [B, T, I]  (batch_first, like the PyTorch module)
    w_ih: [4H, I], w_hh: [4H, H], b_ih: [4H], b_hh: [4H]  (PyTorch layout)

    Returns (output [B, T, H], (hn [1, B, H], cn [1, B, H]))
    """
    B, T, I = x.shape
    H = w_hh.shape[1]
    Hp = _round_up(H, 128)                                    # lane-aligned gate width

    kind = _device_kind()
    # bf16 EUP path exists on v6e/v7x; keep f32 gate math on v5e / unknown chips.
    act_dtype = jnp.bfloat16 if any(s in kind for s in ("v6", "v7", "7x")) else jnp.float32
    n_cores = 2 if any(s in kind for s in ("v7", "7x")) else 1
    vmem_limit = _vmem_limit_bytes()

    # ---- Batch tiling: multiple of 16 rows (bf16 stream tiling); cap 128; split for 2 TCs ----
    if batch_tile is None:
        Bt = min(_round_up(B, 16), 128)
        if n_cores > 1:
            Bt = min(Bt, max(16, _round_up(-(-B // n_cores), 16)))
    else:
        Bt = _round_up(batch_tile, 16)
    n_bt = -(-B // Bt)
    Bp = n_bt * Bt

    # ---- Time tiling: largest Tt that fits the VMEM budget, then (nearly) divides T ----
    budget = int(vmem_limit * 0.9)
    const_bytes = 2 * ((I + Hp) * 4 * Hp * 2 + 4 * Hp * 4)    # double-buffered bf16 weights + bias
    const_bytes += 2 * Bt * Hp * 4 + 2 * 2 * Bt * Hp * 4      # h/c scratch + hn/cn out buffers
    Tt = max(1, min(time_block, T))
    while Tt > 1 and const_bytes + 2 * Tt * Bt * (I + Hp) * 2 > budget:
        Tt = max(1, Tt // 2)
    n_tb = -(-T // Tt)
    Tt = -(-T // n_tb)                                        # minimal padding: Tp - T < n_tb
    n_tb = -(-T // Tt)
    Tp = n_tb * Tt

    f32 = jnp.float32

    # ---- Parameters: PyTorch layout -> padded / transposed / bf16 ----
    # W_ih^T: (I, 4*Hp), each gate block lane-aligned at k*Hp.
    wih = jnp.pad(w_ih.astype(f32).reshape(4, H, I), ((0, 0), (0, Hp - H), (0, 0)))
    wih_t = wih.transpose(2, 0, 1).reshape(I, 4 * Hp).astype(jnp.bfloat16)
    # W_hh^T: (Hp, 4*Hp); padded h rows are zero (and padded h stays exactly 0 anyway).
    whh = jnp.pad(w_hh.astype(f32).reshape(4, H, H), ((0, 0), (0, Hp - H), (0, Hp - H)))
    whh_t = whh.transpose(2, 0, 1).reshape(Hp, 4 * Hp).astype(jnp.bfloat16)
    # Bias (f32, added after the f32 accumulation); padded gate lanes stay exactly 0.
    bias = jnp.pad((b_ih + b_hh).astype(f32).reshape(4, H), ((0, 0), (0, Hp - H)))
    bias = bias.reshape(1, 4 * Hp)

    # ---- x: [B, T, I] -> per batch-tile, time-major rows, bf16 (cast fused into the transpose) ----
    x_p = jnp.pad(x.astype(jnp.bfloat16), ((0, Bp - B), (0, Tp - T), (0, 0)))
    x_k = (x_p.reshape(n_bt, Bt, Tp, I)
               .transpose(0, 2, 1, 3)                         # (n_bt, Tp, Bt, I)
               .reshape(n_bt, Tp * Bt, I))

    kernel = functools.partial(
        _lstm_kernel, seq_len=T, time_block=Tt, batch_tile=Bt, hidden_pad=Hp,
        act_dtype=act_dtype, unroll=max(1, min(unroll, Tt)))

    out_k, hn_k, cn_k = pl.pallas_call(
        kernel,
        out_shape=(
            jax.ShapeDtypeStruct((n_bt, Tp * Bt, Hp), jnp.bfloat16),   # h stream (bf16 writeback)
            jax.ShapeDtypeStruct((n_bt, Bt, Hp), jnp.float32),         # h_n (f32)
            jax.ShapeDtypeStruct((n_bt, Bt, Hp), jnp.float32),         # c_n (f32)
        ),
        grid_spec=pltpu.PrefetchScalarGridSpec(
            num_scalar_prefetch=0,
            grid=(n_bt, n_tb),                                # batch tiles x time blocks
            in_specs=[
                pl.BlockSpec((None, Tt * Bt, I), lambda b, t: (b, t, 0)),   # x stream
                pl.BlockSpec((I, 4 * Hp), lambda b, t: (0, 0)),             # W_ih^T (resident)
                pl.BlockSpec((Hp, 4 * Hp), lambda b, t: (0, 0)),            # W_hh^T (resident)
                pl.BlockSpec((1, 4 * Hp), lambda b, t: (0, 0)),             # bias   (resident)
            ],
            out_specs=[
                pl.BlockSpec((None, Tt * Bt, Hp), lambda b, t: (b, t, 0)),  # h stream
                pl.BlockSpec((None, Bt, Hp), lambda b, t: (b, 0, 0)),       # h_n per batch tile
                pl.BlockSpec((None, Bt, Hp), lambda b, t: (b, 0, 0)),       # c_n per batch tile
            ],
            scratch_shapes=[
                pltpu.VMEM((Bt, Hp), jnp.float32),            # h carry
                pltpu.VMEM((Bt, Hp), jnp.float32),            # c carry
            ],
        ),
        compiler_params=pltpu.CompilerParams(
            # batch tiles are independent (megacore on v7x); time blocks are sequential
            dimension_semantics=("parallel", "arbitrary"),
            vmem_limit_bytes=vmem_limit,
        ),
    )(x_k, wih_t, whh_t, bias)

    out = (out_k.reshape(n_bt, Tp, Bt, Hp)
                .transpose(0, 2, 1, 3)
                .reshape(Bp, Tp, Hp)[:B, :T, :H]
                .astype(f32))                                 # [B, T, H]; cast fuses with transpose
    hn = hn_k.reshape(Bp, Hp)[:B, :H][None]                   # f32 h_n from dedicated kernel output
    cn = cn_k.reshape(Bp, Hp)[:B, :H][None]                   # f32 c_n
    return out, (hn, cn)


def _lstm_reference(x, w_ih, w_hh, b_ih, b_hh):
    """Pure-JAX f32 reference (PyTorch LSTM equations) for correctness checking."""
    B, T, I = x.shape
    H = w_hh.shape[1]
    bias = b_ih + b_hh

    def step(carry, x_t):
        h, c = carry
        gates = x_t @ w_ih.T + h @ w_hh.T + bias
        i = jax.nn.sigmoid(gates[:, 0 * H:1 * H])
        f = jax.nn.sigmoid(gates[:, 1 * H:2 * H])
        g = jnp.tanh(gates[:, 2 * H:3 * H])
        o = jax.nn.sigmoid(gates[:, 3 * H:4 * H])
        c_new = f * c + i * g
        h_new = o * jnp.tanh(c_new)
        return (h_new, c_new), h_new

    init = (jnp.zeros((B, H), jnp.float32), jnp.zeros((B, H), jnp.float32))
    (hn, cn), out_t = jax.lax.scan(step, init, jnp.transpose(x, (1, 0, 2)))
    return jnp.transpose(out_t, (1, 0, 2)), (hn[None], cn[None])


if __name__ == "__main__":
    # Small shapes consistent with RNNBlock('LSTM', input_size=16, hidden_size=32)
    B, T, I, H = 2, 8, 16, 32

    key = jax.random.PRNGKey(0)
    kx, k1, k2, k3, k4 = jax.random.split(key, 5)

    # PyTorch-style U(-1/sqrt(H), 1/sqrt(H)) init.
    bound = 1.0 / (H ** 0.5)
    w_ih = jax.random.uniform(k1, (4 * H, I), jnp.float32, -bound, bound)
    w_hh = jax.random.uniform(k2, (4 * H, H), jnp.float32, -bound, bound)
    b_ih = jax.random.uniform(k3, (4 * H,), jnp.float32, -bound, bound)
    b_hh = jax.random.uniform(k4, (4 * H,), jnp.float32, -bound, bound)

    x = jax.random.normal(kx, (B, T, I), jnp.float32)

    output, (hn, cn) = rnn_block_lstm(x, w_ih, w_hh, b_ih, b_hh)
    jax.block_until_ready((output, hn, cn))

    ref_out, (ref_hn, ref_cn) = _lstm_reference(x, w_ih, w_hh, b_ih, b_hh)
    assert output.shape == (B, T, H)
    assert hn.shape == (1, B, H) and cn.shape == (1, B, H)
    # bf16 MXU operands, bf16 output stream and (on v6e/v7x) bf16 gate activations, with f32
    # accumulation/carry -> small, bounded drift vs. the pure-f32 reference at this sequence length.
    assert bool(jnp.allclose(output, ref_out, atol=4e-2, rtol=0.0))
    assert bool(jnp.allclose(hn, ref_hn, atol=4e-2, rtol=0.0))
    assert bool(jnp.allclose(cn, ref_cn, atol=4e-2, rtol=0.0))

    print("KERNEL_OK")
</pallas_src>

<mosaic_0001>
module attributes {stable_mosaic.version = 11 : i64} {
  func.func @_lstm_kernel(%arg0: i32, %arg1: i32, %arg2: memref<1x128x16xbf16, #tpu.memory_space<vmem>>, %arg3: memref<16x512xbf16, #tpu.memory_space<vmem>>, %arg4: memref<128x512xbf16, #tpu.memory_space<vmem>>, %arg5: memref<1x512xf32, #tpu.memory_space<vmem>>, %arg6: memref<1x128x128xbf16, #tpu.memory_space<vmem>>, %arg7: memref<1x16x128xf32, #tpu.memory_space<vmem>>, %arg8: memref<1x16x128xf32, #tpu.memory_space<vmem>>, %arg9: memref<16x128xf32, #tpu.memory_space<vmem>>, %arg10: memref<16x128xf32, #tpu.memory_space<vmem>>) attributes {dimension_semantics = [#tpu.dimension_semantics<parallel>, #tpu.dimension_semantics<arbitrary>], iteration_bounds = array<i64: 1, 1>, scalar_prefetch = 0 : i64, scratch_operands = 2 : i64, tpu.core_type = #tpu.core_type<tc>, window_params = [{transform_indices = @transform_0, window_bounds = array<i64: 1, 128, 16>}, {pipeline_mode = #tpu.pipeline_mode<synchronous>, transform_indices = @transform_1, window_bounds = array<i64: 16, 512>}, {pipeline_mode = #tpu.pipeline_mode<synchronous>, transform_indices = @transform_2, window_bounds = array<i64: 128, 512>}, {pipeline_mode = #tpu.pipeline_mode<synchronous>, transform_indices = @transform_3, window_bounds = array<i64: 1, 512>}, {transform_indices = @transform_4, window_bounds = array<i64: 1, 128, 128>}, {transform_indices = @transform_5, window_bounds = array<i64: 1, 16, 128>}, {transform_indices = @transform_6, window_bounds = array<i64: 1, 16, 128>}]} {
    %c0_i32 = arith.constant 0 : i32
    %0 = arith.cmpi eq, %arg1, %c0_i32 : i32
    %1 = arith.extui %0 : i1 to i32
    %c0_i32_0 = arith.constant 0 : i32
    %2 = arith.cmpi ne, %1, %c0_i32_0 : i32
    scf.if %2 {
      %cst_117 = arith.constant 0.000000e+00 : f32
      %378 = vector.broadcast %cst_117 : f32 to vector<16x128xf32>
      %c0_118 = arith.constant 0 : index
      %c0_119 = arith.constant 0 : index
      %379 = vector.load %arg9[%c0_118, %c0_119] : memref<16x128xf32, #tpu.memory_space<vmem>>, vector<16x128xf32>
      tpu.vector_store %arg9[%c0_118, %c0_119], %378 {strides = array<i32>} : memref<16x128xf32, #tpu.memory_space<vmem>>, vector<16x128xf32>,
      %cst_120 = arith.constant 0.000000e+00 : f32
      %380 = vector.broadcast %cst_120 : f32 to vector<16x128xf32>
      %c0_121 = arith.constant 0 : index
      %c0_122 = arith.constant 0 : index
      %381 = vector.load %arg10[%c0_121, %c0_122] : memref<16x128xf32, #tpu.memory_space<vmem>>, vector<16x128xf32>
      tpu.vector_store %arg10[%c0_121, %c0_122], %380 {strides = array<i32>} : memref<16x128xf32, #tpu.memory_space<vmem>>, vector<16x128xf32>,
    } else {
    }
    %c0 = arith.constant 0 : index
    %c0_1 = arith.constant 0 : index
    %3 = vector.load %arg3[%c0, %c0_1] : memref<16x512xbf16, #tpu.memory_space<vmem>>, vector<16x512xbf16>
    %c0_2 = arith.constant 0 : index
    %c0_3 = arith.constant 0 : index
    %4 = vector.load %arg4[%c0_2, %c0_3] : memref<128x512xbf16, #tpu.memory_space<vmem>>, vector<128x512xbf16>
    %c0_4 = arith.constant 0 : index
    %c0_5 = arith.constant 0 : index
    %5 = vector.load %arg5[%c0_4, %c0_5] : memref<1x512xf32, #tpu.memory_space<vmem>>, vector<1x512xf32>
    %c0_6 = arith.constant 0 : index
    %c0_7 = arith.constant 0 : index
    %6 = vector.load %arg9[%c0_6, %c0_7] : memref<16x128xf32, #tpu.memory_space<vmem>>, vector<16x128xf32>
    %c0_8 = arith.constant 0 : index
    %c0_9 = arith.constant 0 : index
    %7 = vector.load %arg10[%c0_8, %c0_9] : memref<16x128xf32, #tpu.memory_space<vmem>>, vector<16x128xf32>
    %c0_i32_10 = arith.constant 0 : i32
    %c16_i32 = arith.constant 16 : i32
    %8 = arith.muli %c0_i32_10, %c16_i32 : i32
    %9 = tpu.assume_multiple %8, 16 : i32
    %c0_11 = arith.constant 0 : index
    %10 = arith.index_cast %9 : i32 to index
    %c0_12 = arith.constant 0 : index
    %11 = vector.load %arg2[%c0_11, %10, %c0_12] : memref<1x128x16xbf16, #tpu.memory_space<vmem>>, vector<1x16x16xbf16>
    %12 = vector.shape_cast %11 : vector<1x16x16xbf16> to vector<16x16xbf16>
    %cst = arith.constant dense<0.000000e+00> : vector<16x512xf32>
    %13 = tpu.matmul %12, %3, %cst {dimension_numbers = #tpu.dot_dimension_numbers<[1], [0], [0], [1], [0, 0, 1, 1], [], []>} : vector<16x16xbf16>, vector<16x512xbf16>, vector<16x512xf32> -> vector<16x512xf32>
    %14 = vector.broadcast %5 : vector<1x512xf32> to vector<16x512xf32>
    %15 = arith.addf %13, %14 : vector<16x512xf32>
    %16 = arith.truncf %6 : vector<16x128xf32> to vector<16x128xbf16>
    %cst_13 = arith.constant dense<0.000000e+00> : vector<16x512xf32>
    %17 = tpu.matmul %16, %4, %cst_13 {dimension_numbers = #tpu.dot_dimension_numbers<[1], [0], [0], [1], [0, 0, 1, 1], [], []>} : vector<16x128xbf16>, vector<128x512xbf16>, vector<16x512xf32> -> vector<16x512xf32>
    %18 = arith.addf %15, %17 : vector<16x512xf32>
    %19 = vector.extract_strided_slice %18 {offsets = [0, 0], sizes = [16, 128], strides = [1, 1]} : vector<16x512xf32> to vector<16x128xf32>
    %20 = arith.negf %19 : vector<16x128xf32>
    %21 = math.exp %20 : vector<16x128xf32>
    %cst_14 = arith.constant 1.000000e+00 : f32
    %22 = vector.broadcast %cst_14 : f32 to vector<16x128xf32>
    %23 = arith.addf %22, %21 : vector<16x128xf32>
    %24 = arith.divf %22, %23 : vector<16x128xf32>
    %25 = vector.extract_strided_slice %18 {offsets = [0, 128], sizes = [16, 128], strides = [1, 1]} : vector<16x512xf32> to vector<16x128xf32>
    %26 = arith.negf %25 : vector<16x128xf32>
    %27 = math.exp %26 : vector<16x128xf32>
    %cst_15 = arith.constant 1.000000e+00 : f32
    %28 = vector.broadcast %cst_15 : f32 to vector<16x128xf32>
    %29 = arith.addf %28, %27 : vector<16x128xf32>
    %30 = arith.divf %28, %29 : vector<16x128xf32>
    %31 = vector.extract_strided_slice %18 {offsets = [0, 256], sizes = [16, 128], strides = [1, 1]} : vector<16x512xf32> to vector<16x128xf32>
    %32 = math.tanh %31 : vector<16x128xf32>
    %33 = vector.extract_strided_slice %18 {offsets = [0, 384], sizes = [16, 128], strides = [1, 1]} : vector<16x512xf32> to vector<16x128xf32>
    %34 = arith.negf %33 : vector<16x128xf32>
    %35 = math.exp %34 : vector<16x128xf32>
    %cst_16 = arith.constant 1.000000e+00 : f32
    %36 = vector.broadcast %cst_16 : f32 to vector<16x128xf32>
    %37 = arith.addf %36, %35 : vector<16x128xf32>
    %38 = arith.divf %36, %37 : vector<16x128xf32>
    %39 = arith.mulf %30, %7 : vector<16x128xf32>
    %40 = arith.mulf %24, %32 : vector<16x128xf32>
    %41 = arith.addf %39, %40 : vector<16x128xf32>
    %42 = math.tanh %41 : vector<16x128xf32>
    %43 = arith.mulf %38, %42 : vector<16x128xf32>
    %44 = arith.truncf %43 : vector<16x128xf32> to vector<16x128xbf16>
    %c0_17 = arith.constant 0 : index
    %45 = arith.index_cast %9 : i32 to index
    %c0_18 = arith.constant 0 : index
    %46 = vector.load %arg6[%c0_17, %45, %c0_18] : memref<1x128x128xbf16, #tpu.memory_space<vmem>>, vector<1x16x128xbf16>
    %47 = vector.shape_cast %46 : vector<1x16x128xbf16> to vector<16x128xbf16>
    %48 = vector.shape_cast %44 : vector<16x128xbf16> to vector<1x16x128xbf16>
    tpu.vector_store %arg6[%c0_17, %45, %c0_18], %48 {strides = array<i32>} : memref<1x128x128xbf16, #tpu.memory_space<vmem>>, vector<1x16x128xbf16>,
    %c8_i32 = arith.constant 8 : i32
    %49 = arith.muli %arg1, %c8_i32 : i32
    %50 = arith.addi %49, %c0_i32_10 : i32
    %c7_i32 = arith.constant 7 : i32
    %51 = arith.cmpi eq, %50, %c7_i32 : i32
    %52 = arith.extui %51 : i1 to i32
    %c0_i32_19 = arith.constant 0 : i32
    %53 = arith.cmpi ne, %52, %c0_i32_19 : i32
    scf.if %53 {
      %c0_117 = arith.constant 0 : index
      %c0_118 = arith.constant 0 : index
      %c0_119 = arith.constant 0 : index
      %378 = vector.load %arg7[%c0_117, %c0_118, %c0_119] : memref<1x16x128xf32, #tpu.memory_space<vmem>>, vector<1x16x128xf32>
      %379 = vector.shape_cast %378 : vector<1x16x128xf32> to vector<16x128xf32>
      %380 = vector.shape_cast %43 : vector<16x128xf32> to vector<1x16x128xf32>
      tpu.vector_store %arg7[%c0_117, %c0_118, %c0_119], %380 {strides = array<i32>} : memref<1x16x128xf32, #tpu.memory_space<vmem>>, vector<1x16x128xf32>,
      %c0_120 = arith.constant 0 : index
      %c0_121 = arith.constant 0 : index
      %c0_122 = arith.constant 0 : index
      %381 = vector.load %arg8[%c0_120, %c0_121, %c0_122] : memref<1x16x128xf32, #tpu.memory_space<vmem>>, vector<1x16x128xf32>
      %382 = vector.shape_cast %381 : vector<1x16x128xf32> to vector<16x128xf32>
      %383 = vector.shape_cast %41 : vector<16x128xf32> to vector<1x16x128xf32>
      tpu.vector_store %arg8[%c0_120, %c0_121, %c0_122], %383 {strides = array<i32>} : memref<1x16x128xf32, #tpu.memory_space<vmem>>, vector<1x16x128xf32>,
    } else {
    }
    %c1_i32 = arith.constant 1 : i32
    %c16_i32_20 = arith.constant 16 : i32
    %54 = arith.muli %c1_i32, %c16_i32_20 : i32
    %55 = tpu.assume_multiple %54, 16 : i32
    %c0_21 = arith.constant 0 : index
    %56 = arith.index_cast %55 : i32 to index
    %c0_22 = arith.constant 0 : index
    %57 = vector.load %arg2[%c0_21, %56, %c0_22] : memref<1x128x16xbf16, #tpu.memory_space<vmem>>, vector<1x16x16xbf16>
    %58 = vector.shape_cast %57 : vector<1x16x16xbf16> to vector<16x16xbf16>
    %cst_23 = arith.constant dense<0.000000e+00> : vector<16x512xf32>
    %59 = tpu.matmul %58, %3, %cst_23 {dimension_numbers = #tpu.dot_dimension_numbers<[1], [0], [0], [1], [0, 0, 1, 1], [], []>} : vector<16x16xbf16>, vector<16x512xbf16>, vector<16x512xf32> -> vector<16x512xf32>
    %60 = vector.broadcast %5 : vector<1x512xf32> to vector<16x512xf32>
    %61 = arith.addf %59, %60 : vector<16x512xf32>
    %62 = arith.truncf %43 : vector<16x128xf32> to vector<16x128xbf16>
    %cst_24 = arith.constant dense<0.000000e+00> : vector<16x512xf32>
    %63 = tpu.matmul %62, %4, %cst_24 {dimension_numbers = #tpu.dot_dimension_numbers<[1], [0], [0], [1], [0, 0, 1, 1], [], []>} : vector<16x128xbf16>, vector<128x512xbf16>, vector<16x512xf32> -> vector<16x512xf32>
    %64 = arith.addf %61, %63 : vector<16x512xf32>
    %65 = vector.extract_strided_slice %64 {offsets = [0, 0], sizes = [16, 128], strides = [1, 1]} : vector<16x512xf32> to vector<16x128xf32>
    %66 = arith.negf %65 : vector<16x128xf32>
    %67 = math.exp %66 : vector<16x128xf32>
    %cst_25 = arith.constant 1.000000e+00 : f32
    %68 = vector.broadcast %cst_25 : f32 to vector<16x128xf32>
    %69 = arith.addf %68, %67 : vector<16x128xf32>
    %70 = arith.divf %68, %69 : vector<16x128xf32>
    %71 = vector.extract_strided_slice %64 {offsets = [0, 128], sizes = [16, 128], strides = [1, 1]} : vector<16x512xf32> to vector<16x128xf32>
    %72 = arith.negf %71 : vector<16x128xf32>
    %73 = math.exp %72 : vector<16x128xf32>
    %cst_26 = arith.constant 1.000000e+00 : f32
    %74 = vector.broadcast %cst_26 : f32 to vector<16x128xf32>
    %75 = arith.addf %74, %73 : vector<16x128xf32>
    %76 = arith.divf %74, %75 : vector<16x128xf32>
    %77 = vector.extract_strided_slice %64 {offsets = [0, 256], sizes = [16, 128], strides = [1, 1]} : vector<16x512xf32> to vector<16x128xf32>
    %78 = math.tanh %77 : vector<16x128xf32>
    %79 = vector.extract_strided_slice %64 {offsets = [0, 384], sizes = [16, 128], strides = [1, 1]} : vector<16x512xf32> to vector<16x128xf32>
    %80 = arith.negf %79 : vector<16x128xf32>
    %81 = math.exp %80 : vector<16x128xf32>
    %cst_27 = arith.constant 1.000000e+00 : f32
    %82 = vector.broadcast %cst_27 : f32 to vector<16x128xf32>
    %83 = arith.addf %82, %81 : vector<16x128xf32>
    %84 = arith.divf %82, %83 : vector<16x128xf32>
    %85 = arith.mulf %76, %41 : vector<16x128xf32>
    %86 = arith.mulf %70, %78 : vector<16x128xf32>
    %87 = arith.addf %85, %86 : vector<16x128xf32>
    %88 = math.tanh %87 : vector<16x128xf32>
    %89 = arith.mulf %84, %88 : vector<16x128xf32>
    %90 = arith.truncf %89 : vector<16x128xf32> to vector<16x128xbf16>
    %c0_28 = arith.constant 0 : index
    %91 = arith.index_cast %55 : i32 to index
    %c0_29 = arith.constant 0 : index
    %92 = vector.load %arg6[%c0_28, %91, %c0_29] : memref<1x128x128xbf16, #tpu.memory_space<vmem>>, vector<1x16x128xbf16>
    %93 = vector.shape_cast %92 : vector<1x16x128xbf16> to vector<16x128xbf16>
    %94 = vector.shape_cast %90 : vector<16x128xbf16> to vector<1x16x128xbf16>
    tpu.vector_store %arg6[%c0_28, %91, %c0_29], %94 {strides = array<i32>} : memref<1x128x128xbf16, #tpu.memory_space<vmem>>, vector<1x16x128xbf16>,
    %c8_i32_30 = arith.constant 8 : i32
    %95 = arith.muli %arg1, %c8_i32_30 : i32
    %96 = arith.addi %95, %c1_i32 : i32
    %c7_i32_31 = arith.constant 7 : i32
    %97 = arith.cmpi eq, %96, %c7_i32_31 : i32
    %98 = arith.extui %97 : i1 to i32
    %c0_i32_32 = arith.constant 0 : i32
    %99 = arith.cmpi ne, %98, %c0_i32_32 : i32
    scf.if %99 {
      %c0_117 = arith.constant 0 : index
      %c0_118 = arith.constant 0 : index
      %c0_119 = arith.constant 0 : index
      %378 = vector.load %arg7[%c0_117, %c0_118, %c0_119] : memref<1x16x128xf32, #tpu.memory_space<vmem>>, vector<1x16x128xf32>
      %379 = vector.shape_cast %378 : vector<1x16x128xf32> to vector<16x128xf32>
      %380 = vector.shape_cast %89 : vector<16x128xf32> to vector<1x16x128xf32>
      tpu.vector_store %arg7[%c0_117, %c0_118, %c0_119], %380 {strides = array<i32>} : memref<1x16x128xf32, #tpu.memory_space<vmem>>, vector<1x16x128xf32>,
      %c0_120 = arith.constant 0 : index
      %c0_121 = arith.constant 0 : index
      %c0_122 = arith.constant 0 : index
      %381 = vector.load %arg8[%c0_120, %c0_121, %c0_122] : memref<1x16x128xf32, #tpu.memory_space<vmem>>, vector<1x16x128xf32>
      %382 = vector.shape_cast %381 : vector<1x16x128xf32> to vector<16x128xf32>
      %383 = vector.shape_cast %87 : vector<16x128xf32> to vector<1x16x128xf32>
      tpu.vector_store %arg8[%c0_120, %c0_121, %c0_122], %383 {strides = array<i32>} : memref<1x16x128xf32, #tpu.memory_space<vmem>>, vector<1x16x128xf32>,
    } else {
    }
    %c2_i32 = arith.constant 2 : i32
    %c16_i32_33 = arith.constant 16 : i32
    %100 = arith.muli %c2_i32, %c16_i32_33 : i32
    %101 = tpu.assume_multiple %100, 16 : i32
    %c0_34 = arith.constant 0 : index
    %102 = arith.index_cast %101 : i32 to index
    %c0_35 = arith.constant 0 : index
    %103 = vector.load %arg2[%c0_34, %102, %c0_35] : memref<1x128x16xbf16, #tpu.memory_space<vmem>>, vector<1x16x16xbf16>
    %104 = vector.shape_cast %103 : vector<1x16x16xbf16> to vector<16x16xbf16>
    %cst_36 = arith.constant dense<0.000000e+00> : vector<16x512xf32>
    %105 = tpu.matmul %104, %3, %cst_36 {dimension_numbers = #tpu.dot_dimension_numbers<[1], [0], [0], [1], [0, 0, 1, 1], [], []>} : vector<16x16xbf16>, vector<16x512xbf16>, vector<16x512xf32> -> vector<16x512xf32>
    %106 = vector.broadcast %5 : vector<1x512xf32> to vector<16x512xf32>
    %107 = arith.addf %105, %106 : vector<16x512xf32>
    %108 = arith.truncf %89 : vector<16x128xf32> to vector<16x128xbf16>
    %cst_37 = arith.constant dense<0.000000e+00> : vector<16x512xf32>
    %109 = tpu.matmul %108, %4, %cst_37 {dimension_numbers = #tpu.dot_dimension_numbers<[1], [0], [0], [1], [0, 0, 1, 1], [], []>} : vector<16x128xbf16>, vector<128x512xbf16>, vector<16x512xf32> -> vector<16x512xf32>
    %110 = arith.addf %107, %109 : vector<16x512xf32>
    %111 = vector.extract_strided_slice %110 {offsets = [0, 0], sizes = [16, 128], strides = [1, 1]} : vector<16x512xf32> to vector<16x128xf32>
    %112 = arith.negf %111 : vector<16x128xf32>
    %113 = math.exp %112 : vector<16x128xf32>
    %cst_38 = arith.constant 1.000000e+00 : f32
    %114 = vector.broadcast %cst_38 : f32 to vector<16x128xf32>
    %115 = arith.addf %114, %113 : vector<16x128xf32>
    %116 = arith.divf %114, %115 : vector<16x128xf32>
    %117 = vector.extract_strided_slice %110 {offsets = [0, 128], sizes = [16, 128], strides = [1, 1]} : vector<16x512xf32> to vector<16x128xf32>
    %118 = arith.negf %117 : vector<16x128xf32>
    %119 = math.exp %118 : vector<16x128xf32>
    %cst_39 = arith.constant 1.000000e+00 : f32
    %120 = vector.broadcast %cst_39 : f32 to vector<16x128xf32>
    %121 = arith.addf %120, %119 : vector<16x128xf32>
    %122 = arith.divf %120, %121 : vector<16x128xf32>
    %123 = vector.extract_strided_slice %110 {offsets = [0, 256], sizes = [16, 128], strides = [1, 1]} : vector<16x512xf32> to vector<16x128xf32>
    %124 = math.tanh %123 : vector<16x128xf32>
    %125 = vector.extract_strided_slice %110 {offsets = [0, 384], sizes = [16, 128], strides = [1, 1]} : vector<16x512xf32> to vector<16x128xf32>
    %126 = arith.negf %125 : vector<16x128xf32>
    %127 = math.exp %126 : vector<16x128xf32>
    %cst_40 = arith.constant 1.000000e+00 : f32
    %128 = vector.broadcast %cst_40 : f32 to vector<16x128xf32>
    %129 = arith.addf %128, %127 : vector<16x128xf32>
    %130 = arith.divf %128, %129 : vector<16x128xf32>
    %131 = arith.mulf %122, %87 : vector<16x128xf32>
    %132 = arith.mulf %116, %124 : vector<16x128xf32>
    %133 = arith.addf %131, %132 : vector<16x128xf32>
    %134 = math.tanh %133 : vector<16x128xf32>
    %135 = arith.mulf %130, %134 : vector<16x128xf32>
    %136 = arith.truncf %135 : vector<16x128xf32> to vector<16x128xbf16>
    %c0_41 = arith.constant 0 : index
    %137 = arith.index_cast %101 : i32 to index
    %c0_42 = arith.constant 0 : index
    %138 = vector.load %arg6[%c0_41, %137, %c0_42] : memref<1x128x128xbf16, #tpu.memory_space<vmem>>, vector<1x16x128xbf16>
    %139 = vector.shape_cast %138 : vector<1x16x128xbf16> to vector<16x128xbf16>
    %140 = vector.shape_cast %136 : vector<16x128xbf16> to vector<1x16x128xbf16>
    tpu.vector_store %arg6[%c0_41, %137, %c0_42], %140 {strides = array<i32>} : memref<1x128x128xbf16, #tpu.memory_space<vmem>>, vector<1x16x128xbf16>,
    %c8_i32_43 = arith.constant 8 : i32
    %141 = arith.muli %arg1, %c8_i32_43 : i32
    %142 = arith.addi %141, %c2_i32 : i32
    %c7_i32_44 = arith.constant 7 : i32
    %143 = arith.cmpi eq, %142, %c7_i32_44 : i32
    %144 = arith.extui %143 : i1 to i32
    %c0_i32_45 = arith.constant 0 : i32
    %145 = arith.cmpi ne, %144, %c0_i32_45 : i32
    scf.if %145 {
      %c0_117 = arith.constant 0 : index
      %c0_118 = arith.constant 0 : index
      %c0_119 = arith.constant 0 : index
      %378 = vector.load %arg7[%c0_117, %c0_118, %c0_119] : memref<1x16x128xf32, #tpu.memory_space<vmem>>, vector<1x16x128xf32>
      %379 = vector.shape_cast %378 : vector<1x16x128xf32> to vector<16x128xf32>
      %380 = vector.shape_cast %135 : vector<16x128xf32> to vector<1x16x128xf32>
      tpu.vector_store %arg7[%c0_117, %c0_118, %c0_119], %380 {strides = array<i32>} : memref<1x16x128xf32, #tpu.memory_space<vmem>>, vector<1x16x128xf32>,
      %c0_120 = arith.constant 0 : index
      %c0_121 = arith.constant 0 : index
      %c0_122 = arith.constant 0 : index
      %381 = vector.load %arg8[%c0_120, %c0_121, %c0_122] : memref<1x16x128xf32, #tpu.memory_space<vmem>>, vector<1x16x128xf32>
      %382 = vector.shape_cast %381 : vector<1x16x128xf32> to vector<16x128xf32>
      %383 = vector.shape_cast %133 : vector<16x128xf32> to vector<1x16x128xf32>
      tpu.vector_store %arg8[%c0_120, %c0_121, %c0_122], %383 {strides = array<i32>} : memref<1x16x128xf32, #tpu.memory_space<vmem>>, vector<1x16x128xf32>,
    } else {
    }
    %c3_i32 = arith.constant 3 : i32
    %c16_i32_46 = arith.constant 16 : i32
    %146 = arith.muli %c3_i32, %c16_i32_46 : i32
    %147 = tpu.assume_multiple %146, 16 : i32
    %c0_47 = arith.constant 0 : index
    %148 = arith.index_cast %147 : i32 to index
    %c0_48 = arith.constant 0 : index
    %149 = vector.load %arg2[%c0_47, %148, %c0_48] : memref<1x128x16xbf16, #tpu.memory_space<vmem>>, vector<1x16x16xbf16>
    %150 = vector.shape_cast %149 : vector<1x16x16xbf16> to vector<16x16xbf16>
    %cst_49 = arith.constant dense<0.000000e+00> : vector<16x512xf32>
    %151 = tpu.matmul %150, %3, %cst_49 {dimension_numbers = #tpu.dot_dimension_numbers<[1], [0], [0], [1], [0, 0, 1, 1], [], []>} : vector<16x16xbf16>, vector<16x512xbf16>, vector<16x512xf32> -> vector<16x512xf32>
    %152 = vector.broadcast %5 : vector<1x512xf32> to vector<16x512xf32>
    %153 = arith.addf %151, %152 : vector<16x512xf32>
    %154 = arith.truncf %135 : vector<16x128xf32> to vector<16x128xbf16>
    %cst_50 = arith.constant dense<0.000000e+00> : vector<16x512xf32>
    %155 = tpu.matmul %154, %4, %cst_50 {dimension_numbers = #tpu.dot_dimension_numbers<[1], [0], [0], [1], [0, 0, 1, 1], [], []>} : vector<16x128xbf16>, vector<128x512xbf16>, vector<16x512xf32> -> vector<16x512xf32>
    %156 = arith.addf %153, %155 : vector<16x512xf32>
    %157 = vector.extract_strided_slice %156 {offsets = [0, 0], sizes = [16, 128], strides = [1, 1]} : vector<16x512xf32> to vector<16x128xf32>
    %158 = arith.negf %157 : vector<16x128xf32>
    %159 = math.exp %158 : vector<16x128xf32>
    %cst_51 = arith.constant 1.000000e+00 : f32
    %160 = vector.broadcast %cst_51 : f32 to vector<16x128xf32>
    %161 = arith.addf %160, %159 : vector<16x128xf32>
    %162 = arith.divf %160, %161 : vector<16x128xf32>
    %163 = vector.extract_strided_slice %156 {offsets = [0, 128], sizes = [16, 128], strides = [1, 1]} : vector<16x512xf32> to vector<16x128xf32>
    %164 = arith.negf %163 : vector<16x128xf32>
    %165 = math.exp %164 : vector<16x128xf32>
    %cst_52 = arith.constant 1.000000e+00 : f32
    %166 = vector.broadcast %cst_52 : f32 to vector<16x128xf32>
    %167 = arith.addf %166, %165 : vector<16x128xf32>
    %168 = arith.divf %166, %167 : vector<16x128xf32>
    %169 = vector.extract_strided_slice %156 {offsets = [0, 256], sizes = [16, 128], strides = [1, 1]} : vector<16x512xf32> to vector<16x128xf32>
    %170 = math.tanh %169 : vector<16x128xf32>
    %171 = vector.extract_strided_slice %156 {offsets = [0, 384], sizes = [16, 128], strides = [1, 1]} : vector<16x512xf32> to vector<16x128xf32>
    %172 = arith.negf %171 : vector<16x128xf32>
    %173 = math.exp %172 : vector<16x128xf32>
    %cst_53 = arith.constant 1.000000e+00 : f32
    %174 = vector.broadcast %cst_53 : f32 to vector<16x128xf32>
    %175 = arith.addf %174, %173 : vector<16x128xf32>
    %176 = arith.divf %174, %175 : vector<16x128xf32>
    %177 = arith.mulf %168, %133 : vector<16x128xf32>
    %178 = arith.mulf %162, %170 : vector<16x128xf32>
    %179 = arith.addf %177, %178 : vector<16x128xf32>
    %180 = math.tanh %179 : vector<16x128xf32>
    %181 = arith.mulf %176, %180 : vector<16x128xf32>
    %182 = arith.truncf %181 : vector<16x128xf32> to vector<16x128xbf16>
    %c0_54 = arith.constant 0 : index
    %183 = arith.index_cast %147 : i32 to index
    %c0_55 = arith.constant 0 : index
    %184 = vector.load %arg6[%c0_54, %183, %c0_55] : memref<1x128x128xbf16, #tpu.memory_space<vmem>>, vector<1x16x128xbf16>
    %185 = vector.shape_cast %184 : vector<1x16x128xbf16> to vector<16x128xbf16>
    %186 = vector.shape_cast %182 : vector<16x128xbf16> to vector<1x16x128xbf16>
    tpu.vector_store %arg6[%c0_54, %183, %c0_55], %186 {strides = array<i32>} : memref<1x128x128xbf16, #tpu.memory_space<vmem>>, vector<1x16x128xbf16>,
    %c8_i32_56 = arith.constant 8 : i32
    %187 = arith.muli %arg1, %c8_i32_56 : i32
    %188 = arith.addi %187, %c3_i32 : i32
    %c7_i32_57 = arith.constant 7 : i32
    %189 = arith.cmpi eq, %188, %c7_i32_57 : i32
    %190 = arith.extui %189 : i1 to i32
    %c0_i32_58 = arith.constant 0 : i32
    %191 = arith.cmpi ne, %190, %c0_i32_58 : i32
    scf.if %191 {
      %c0_117 = arith.constant 0 : index
      %c0_118 = arith.constant 0 : index
      %c0_119 = arith.constant 0 : index
      %378 = vector.load %arg7[%c0_117, %c0_118, %c0_119] : memref<1x16x128xf32, #tpu.memory_space<vmem>>, vector<1x16x128xf32>
      %379 = vector.shape_cast %378 : vector<1x16x128xf32> to vector<16x128xf32>
      %380 = vector.shape_cast %181 : vector<16x128xf32> to vector<1x16x128xf32>
      tpu.vector_store %arg7[%c0_117, %c0_118, %c0_119], %380 {strides = array<i32>} : memref<1x16x128xf32, #tpu.memory_space<vmem>>, vector<1x16x128xf32>,
      %c0_120 = arith.constant 0 : index
      %c0_121 = arith.constant 0 : index
      %c0_122 = arith.constant 0 : index
      %381 = vector.load %arg8[%c0_120, %c0_121, %c0_122] : memref<1x16x128xf32, #tpu.memory_space<vmem>>, vector<1x16x128xf32>
      %382 = vector.shape_cast %381 : vector<1x16x128xf32> to vector<16x128xf32>
      %383 = vector.shape_cast %179 : vector<16x128xf32> to vector<1x16x128xf32>
      tpu.vector_store %arg8[%c0_120, %c0_121, %c0_122], %383 {strides = array<i32>} : memref<1x16x128xf32, #tpu.memory_space<vmem>>, vector<1x16x128xf32>,
    } else {
    }
    %c4_i32 = arith.constant 4 : i32
    %c16_i32_59 = arith.constant 16 : i32
    %192 = arith.muli %c4_i32, %c16_i32_59 : i32
    %193 = tpu.assume_multiple %192, 16 : i32
    %c0_60 = arith.constant 0 : index
    %194 = arith.index_cast %193 : i32 to index
    %c0_61 = arith.constant 0 : index
    %195 = vector.load %arg2[%c0_60, %194, %c0_61] : memref<1x128x16xbf16, #tpu.memory_space<vmem>>, vector<1x16x16xbf16>
    %196 = vector.shape_cast %195 : vector<1x16x16xbf16> to vector<16x16xbf16>
    %cst_62 = arith.constant dense<0.000000e+00> : vector<16x512xf32>
    %197 = tpu.matmul %196, %3, %cst_62 {dimension_numbers = #tpu.dot_dimension_numbers<[1], [0], [0], [1], [0, 0, 1, 1], [], []>} : vector<16x16xbf16>, vector<16x512xbf16>, vector<16x512xf32> -> vector<16x512xf32>
    %198 = vector.broadcast %5 : vector<1x512xf32> to vector<16x512xf32>
    %199 = arith.addf %197, %198 : vector<16x512xf32>
    %200 = arith.truncf %181 : vector<16x128xf32> to vector<16x128xbf16>
    %cst_63 = arith.constant dense<0.000000e+00> : vector<16x512xf32>
    %201 = tpu.matmul %200, %4, %cst_63 {dimension_numbers = #tpu.dot_dimension_numbers<[1], [0], [0], [1], [0, 0, 1, 1], [], []>} : vector<16x128xbf16>, vector<128x512xbf16>, vector<16x512xf32> -> vector<16x512xf32>
    %202 = arith.addf %199, %201 : vector<16x512xf32>
    %203 = vector.extract_strided_slice %202 {offsets = [0, 0], sizes = [16, 128], strides = [1, 1]} : vector<16x512xf32> to vector<16x128xf32>
    %204 = arith.negf %203 : vector<16x128xf32>
    %205 = math.exp %204 : vector<16x128xf32>
    %cst_64 = arith.constant 1.000000e+00 : f32
    %206 = vector.broadcast %cst_64 : f32 to vector<16x128xf32>
    %207 = arith.addf %206, %205 : vector<16x128xf32>
    %208 = arith.divf %206, %207 : vector<16x128xf32>
    %209 = vector.extract_strided_slice %202 {offsets = [0, 128], sizes = [16, 128], strides = [1, 1]} : vector<16x512xf32> to vector<16x128xf32>
    %210 = arith.negf %209 : vector<16x128xf32>
    %211 = math.exp %210 : vector<16x128xf32>
    %cst_65 = arith.constant 1.000000e+00 : f32
    %212 = vector.broadcast %cst_65 : f32 to vector<16x128xf32>
    %213 = arith.addf %212, %211 : vector<16x128xf32>
    %214 = arith.divf %212, %213 : vector<16x128xf32>
    %215 = vector.extract_strided_slice %202 {offsets = [0, 256], sizes = [16, 128], strides = [1, 1]} : vector<16x512xf32> to vector<16x128xf32>
    %216 = math.tanh %215 : vector<16x128xf32>
    %217 = vector.extract_strided_slice %202 {offsets = [0, 384], sizes = [16, 128], strides = [1, 1]} : vector<16x512xf32> to vector<16x128xf32>
    %218 = arith.negf %217 : vector<16x128xf32>
    %219 = math.exp %218 : vector<16x128xf32>
    %cst_66 = arith.constant 1.000000e+00 : f32
    %220 = vector.broadcast %cst_66 : f32 to vector<16x128xf32>
    %221 = arith.addf %220, %219 : vector<16x128xf32>
    %222 = arith.divf %220, %221 : vector<16x128xf32>
    %223 = arith.mulf %214, %179 : vector<16x128xf32>
    %224 = arith.mulf %208, %216 : vector<16x128xf32>
    %225 = arith.addf %223, %224 : vector<16x128xf32>
    %226 = math.tanh %225 : vector<16x128xf32>
    %227 = arith.mulf %222, %226 : vector<16x128xf32>
    %228 = arith.truncf %227 : vector<16x128xf32> to vector<16x128xbf16>
    %c0_67 = arith.constant 0 : index
    %229 = arith.index_cast %193 : i32 to index
    %c0_68 = arith.constant 0 : index
    %230 = vector.load %arg6[%c0_67, %229, %c0_68] : memref<1x128x128xbf16, #tpu.memory_space<vmem>>, vector<1x16x128xbf16>
    %231 = vector.shape_cast %230 : vector<1x16x128xbf16> to vector<16x128xbf16>
    %232 = vector.shape_cast %228 : vector<16x128xbf16> to vector<1x16x128xbf16>
    tpu.vector_store %arg6[%c0_67, %229, %c0_68], %232 {strides = array<i32>} : memref<1x128x128xbf16, #tpu.memory_space<vmem>>, vector<1x16x128xbf16>,
    %c8_i32_69 = arith.constant 8 : i32
    %233 = arith.muli %arg1, %c8_i32_69 : i32
    %234 = arith.addi %233, %c4_i32 : i32
    %c7_i32_70 = arith.constant 7 : i32
    %235 = arith.cmpi eq, %234, %c7_i32_70 : i32
    %236 = arith.extui %235 : i1 to i32
    %c0_i32_71 = arith.constant 0 : i32
    %237 = arith.cmpi ne, %236, %c0_i32_71 : i32
    scf.if %237 {
      %c0_117 = arith.constant 0 : index
      %c0_118 = arith.constant 0 : index
      %c0_119 = arith.constant 0 : index
      %378 = vector.load %arg7[%c0_117, %c0_118, %c0_119] : memref<1x16x128xf32, #tpu.memory_space<vmem>>, vector<1x16x128xf32>
      %379 = vector.shape_cast %378 : vector<1x16x128xf32> to vector<16x128xf32>
      %380 = vector.shape_cast %227 : vector<16x128xf32> to vector<1x16x128xf32>
      tpu.vector_store %arg7[%c0_117, %c0_118, %c0_119], %380 {strides = array<i32>} : memref<1x16x128xf32, #tpu.memory_space<vmem>>, vector<1x16x128xf32>,
      %c0_120 = arith.constant 0 : index
      %c0_121 = arith.constant 0 : index
      %c0_122 = arith.constant 0 : index
      %381 = vector.load %arg8[%c0_120, %c0_121, %c0_122] : memref<1x16x128xf32, #tpu.memory_space<vmem>>, vector<1x16x128xf32>
      %382 = vector.shape_cast %381 : vector<1x16x128xf32> to vector<16x128xf32>
      %383 = vector.shape_cast %225 : vector<16x128xf32> to vector<1x16x128xf32>
      tpu.vector_store %arg8[%c0_120, %c0_121, %c0_122], %383 {strides = array<i32>} : memref<1x16x128xf32, #tpu.memory_space<vmem>>, vector<1x16x128xf32>,
    } else {
    }
    %c5_i32 = arith.constant 5 : i32
    %c16_i32_72 = arith.constant 16 : i32
    %238 = arith.muli %c5_i32, %c16_i32_72 : i32
    %239 = tpu.assume_multiple %238, 16 : i32
    %c0_73 = arith.constant 0 : index
    %240 = arith.index_cast %239 : i32 to index
    %c0_74 = arith.constant 0 : index
    %241 = vector.load %arg2[%c0_73, %240, %c0_74] : memref<1x128x16xbf16, #tpu.memory_space<vmem>>, vector<1x16x16xbf16>
    %242 = vector.shape_cast %241 : vector<1x16x16xbf16> to vector<16x16xbf16>
    %cst_75 = arith.constant dense<0.000000e+00> : vector<16x512xf32>
    %243 = tpu.matmul %242, %3, %cst_75 {dimension_numbers = #tpu.dot_dimension_numbers<[1], [0], [0], [1], [0, 0, 1, 1], [], []>} : vector<16x16xbf16>, vector<16x512xbf16>, vector<16x512xf32> -> vector<16x512xf32>
    %244 = vector.broadcast %5 : vector<1x512xf32> to vector<16x512xf32>
    %245 = arith.addf %243, %244 : vector<16x512xf32>
    %246 = arith.truncf %227 : vector<16x128xf32> to vector<16x128xbf16>
    %cst_76 = arith.constant dense<0.000000e+00> : vector<16x512xf32>
    %247 = tpu.matmul %246, %4, %cst_76 {dimension_numbers = #tpu.dot_dimension_numbers<[1], [0], [0], [1], [0, 0, 1, 1], [], []>} : vector<16x128xbf16>, vector<128x512xbf16>, vector<16x512xf32> -> vector<16x512xf32>
    %248 = arith.addf %245, %247 : vector<16x512xf32>
    %249 = vector.extract_strided_slice %248 {offsets = [0, 0], sizes = [16, 128], strides = [1, 1]} : vector<16x512xf32> to vector<16x128xf32>
    %250 = arith.negf %249 : vector<16x128xf32>
    %251 = math.exp %250 : vector<16x128xf32>
    %cst_77 = arith.constant 1.000000e+00 : f32
    %252 = vector.broadcast %cst_77 : f32 to vector<16x128xf32>
    %253 = arith.addf %252, %251 : vector<16x128xf32>
    %254 = arith.divf %252, %253 : vector<16x128xf32>
    %255 = vector.extract_strided_slice %248 {offsets = [0, 128], sizes = [16, 128], strides = [1, 1]} : vector<16x512xf32> to vector<16x128xf32>
    %256 = arith.negf %255 : vector<16x128xf32>
    %257 = math.exp %256 : vector<16x128xf32>
    %cst_78 = arith.constant 1.000000e+00 : f32
    %258 = vector.broadcast %cst_78 : f32 to vector<16x128xf32>
    %259 = arith.addf %258, %257 : vector<16x128xf32>
    %260 = arith.divf %258, %259 : vector<16x128xf32>
    %261 = vector.extract_strided_slice %248 {offsets = [0, 256], sizes = [16, 128], strides = [1, 1]} : vector<16x512xf32> to vector<16x128xf32>
    %262 = math.tanh %261 : vector<16x128xf32>
    %263 = vector.extract_strided_slice %248 {offsets = [0, 384], sizes = [16, 128], strides = [1, 1]} : vector<16x512xf32> to vector<16x128xf32>
    %264 = arith.negf %263 : vector<16x128xf32>
    %265 = math.exp %264 : vector<16x128xf32>
    %cst_79 = arith.constant 1.000000e+00 : f32
    %266 = vector.broadcast %cst_79 : f32 to vector<16x128xf32>
    %267 = arith.addf %266, %265 : vector<16x128xf32>
    %268 = arith.divf %266, %267 : vector<16x128xf32>
    %269 = arith.mulf %260, %225 : vector<16x128xf32>
    %270 = arith.mulf %254, %262 : vector<16x128xf32>
    %271 = arith.addf %269, %270 : vector<16x128xf32>
    %272 = math.tanh %271 : vector<16x128xf32>
    %273 = arith.mulf %268, %272 : vector<16x128xf32>
    %274 = arith.truncf %273 : vector<16x128xf32> to vector<16x128xbf16>
    %c0_80 = arith.constant 0 : index
    %275 = arith.index_cast %239 : i32 to index
    %c0_81 = arith.constant 0 : index
    %276 = vector.load %arg6[%c0_80, %275, %c0_81] : memref<1x128x128xbf16, #tpu.memory_space<vmem>>, vector<1x16x128xbf16>
    %277 = vector.shape_cast %276 : vector<1x16x128xbf16> to vector<16x128xbf16>
    %278 = vector.shape_cast %274 : vector<16x128xbf16> to vector<1x16x128xbf16>
    tpu.vector_store %arg6[%c0_80, %275, %c0_81], %278 {strides = array<i32>} : memref<1x128x128xbf16, #tpu.memory_space<vmem>>, vector<1x16x128xbf16>,
    %c8_i32_82 = arith.constant 8 : i32
    %279 = arith.muli %arg1, %c8_i32_82 : i32
    %280 = arith.addi %279, %c5_i32 : i32
    %c7_i32_83 = arith.constant 7 : i32
    %281 = arith.cmpi eq, %280, %c7_i32_83 : i32
    %282 = arith.extui %281 : i1 to i32
    %c0_i32_84 = arith.constant 0 : i32
    %283 = arith.cmpi ne, %282, %c0_i32_84 : i32
    scf.if %283 {
      %c0_117 = arith.constant 0 : index
      %c0_118 = arith.constant 0 : index
      %c0_119 = arith.constant 0 : index
      %378 = vector.load %arg7[%c0_117, %c0_118, %c0_119] : memref<1x16x128xf32, #tpu.memory_space<vmem>>, vector<1x16x128xf32>
      %379 = vector.shape_cast %378 : vector<1x16x128xf32> to vector<16x128xf32>
      %380 = vector.shape_cast %273 : vector<16x128xf32> to vector<1x16x128xf32>
      tpu.vector_store %arg7[%c0_117, %c0_118, %c0_119], %380 {strides = array<i32>} : memref<1x16x128xf32, #tpu.memory_space<vmem>>, vector<1x16x128xf32>,
      %c0_120 = arith.constant 0 : index
      %c0_121 = arith.constant 0 : index
      %c0_122 = arith.constant 0 : index
      %381 = vector.load %arg8[%c0_120, %c0_121, %c0_122] : memref<1x16x128xf32, #tpu.memory_space<vmem>>, vector<1x16x128xf32>
      %382 = vector.shape_cast %381 : vector<1x16x128xf32> to vector<16x128xf32>
      %383 = vector.shape_cast %271 : vector<16x128xf32> to vector<1x16x128xf32>
      tpu.vector_store %arg8[%c0_120, %c0_121, %c0_122], %383 {strides = array<i32>} : memref<1x16x128xf32, #tpu.memory_space<vmem>>, vector<1x16x128xf32>,
    } else {
    }
    %c6_i32 = arith.constant 6 : i32
    %c16_i32_85 = arith.constant 16 : i32
    %284 = arith.muli %c6_i32, %c16_i32_85 : i32
    %285 = tpu.assume_multiple %284, 16 : i32
    %c0_86 = arith.constant 0 : index
    %286 = arith.index_cast %285 : i32 to index
    %c0_87 = arith.constant 0 : index
    %287 = vector.load %arg2[%c0_86, %286, %c0_87] : memref<1x128x16xbf16, #tpu.memory_space<vmem>>, vector<1x16x16xbf16>
    %288 = vector.shape_cast %287 : vector<1x16x16xbf16> to vector<16x16xbf16>
    %cst_88 = arith.constant dense<0.000000e+00> : vector<16x512xf32>
    %289 = tpu.matmul %288, %3, %cst_88 {dimension_numbers = #tpu.dot_dimension_numbers<[1], [0], [0], [1], [0, 0, 1, 1], [], []>} : vector<16x16xbf16>, vector<16x512xbf16>, vector<16x512xf32> -> vector<16x512xf32>
    %290 = vector.broadcast %5 : vector<1x512xf32> to vector<16x512xf32>
    %291 = arith.addf %289, %290 : vector<16x512xf32>
    %292 = arith.truncf %273 : vector<16x128xf32> to vector<16x128xbf16>
    %cst_89 = arith.constant dense<0.000000e+00> : vector<16x512xf32>
    %293 = tpu.matmul %292, %4, %cst_89 {dimension_numbers = #tpu.dot_dimension_numbers<[1], [0], [0], [1], [0, 0, 1, 1], [], []>} : vector<16x128xbf16>, vector<128x512xbf16>, vector<16x512xf32> -> vector<16x512xf32>
    %294 = arith.addf %291, %293 : vector<16x512xf32>
    %295 = vector.extract_strided_slice %294 {offsets = [0, 0], sizes = [16, 128], strides = [1, 1]} : vector<16x512xf32> to vector<16x128xf32>
    %296 = arith.negf %295 : vector<16x128xf32>
    %297 = math.exp %296 : vector<16x128xf32>
    %cst_90 = arith.constant 1.000000e+00 : f32
    %298 = vector.broadcast %cst_90 : f32 to vector<16x128xf32>
    %299 = arith.addf %298, %297 : vector<16x128xf32>
    %300 = arith.divf %298, %299 : vector<16x128xf32>
    %301 = vector.extract_strided_slice %294 {offsets = [0, 128], sizes = [16, 128], strides = [1, 1]} : vector<16x512xf32> to vector<16x128xf32>
    %302 = arith.negf %301 : vector<16x128xf32>
    %303 = math.exp %302 : vector<16x128xf32>
    %cst_91 = arith.constant 1.000000e+00 : f32
    %304 = vector.broadcast %cst_91 : f32 to vector<16x128xf32>
    %305 = arith.addf %304, %303 : vector<16x128xf32>
    %306 = arith.divf %304, %305 : vector<16x128xf32>
    %307 = vector.extract_strided_slice %294 {offsets = [0, 256], sizes = [16, 128], strides = [1, 1]} : vector<16x512xf32> to vector<16x128xf32>
    %308 = math.tanh %307 : vector<16x128xf32>
    %309 = vector.extract_strided_slice %294 {offsets = [0, 384], sizes = [16, 128], strides = [1, 1]} : vector<16x512xf32> to vector<16x128xf32>
    %310 = arith.negf %309 : vector<16x128xf32>
    %311 = math.exp %310 : vector<16x128xf32>
    %cst_92 = arith.constant 1.000000e+00 : f32
    %312 = vector.broadcast %cst_92 : f32 to vector<16x128xf32>
    %313 = arith.addf %312, %311 : vector<16x128xf32>
    %314 = arith.divf %312, %313 : vector<16x128xf32>
    %315 = arith.mulf %306, %271 : vector<16x128xf32>
    %316 = arith.mulf %300, %308 : vector<16x128xf32>
    %317 = arith.addf %315, %316 : vector<16x128xf32>
    %318 = math.tanh %317 : vector<16x128xf32>
    %319 = arith.mulf %314, %318 : vector<16x128xf32>
    %320 = arith.truncf %319 : vector<16x128xf32> to vector<16x128xbf16>
    %c0_93 = arith.constant 0 : index
    %321 = arith.index_cast %285 : i32 to index
    %c0_94 = arith.constant 0 : index
    %322 = vector.load %arg6[%c0_93, %321, %c0_94] : memref<1x128x128xbf16, #tpu.memory_space<vmem>>, vector<1x16x128xbf16>
    %323 = vector.shape_cast %322 : vector<1x16x128xbf16> to vector<16x128xbf16>
    %324 = vector.shape_cast %320 : vector<16x128xbf16> to vector<1x16x128xbf16>
    tpu.vector_store %arg6[%c0_93, %321, %c0_94], %324 {strides = array<i32>} : memref<1x128x128xbf16, #tpu.memory_space<vmem>>, vector<1x16x128xbf16>,
    %c8_i32_95 = arith.constant 8 : i32
    %325 = arith.muli %arg1, %c8_i32_95 : i32
    %326 = arith.addi %325, %c6_i32 : i32
    %c7_i32_96 = arith.constant 7 : i32
    %327 = arith.cmpi eq, %326, %c7_i32_96 : i32
    %328 = arith.extui %327 : i1 to i32
    %c0_i32_97 = arith.constant 0 : i32
    %329 = arith.cmpi ne, %328, %c0_i32_97 : i32
    scf.if %329 {
      %c0_117 = arith.constant 0 : index
      %c0_118 = arith.constant 0 : index
      %c0_119 = arith.constant 0 : index
      %378 = vector.load %arg7[%c0_117, %c0_118, %c0_119] : memref<1x16x128xf32, #tpu.memory_space<vmem>>, vector<1x16x128xf32>
      %379 = vector.shape_cast %378 : vector<1x16x128xf32> to vector<16x128xf32>
      %380 = vector.shape_cast %319 : vector<16x128xf32> to vector<1x16x128xf32>
      tpu.vector_store %arg7[%c0_117, %c0_118, %c0_119], %380 {strides = array<i32>} : memref<1x16x128xf32, #tpu.memory_space<vmem>>, vector<1x16x128xf32>,
      %c0_120 = arith.constant 0 : index
      %c0_121 = arith.constant 0 : index
      %c0_122 = arith.constant 0 : index
      %381 = vector.load %arg8[%c0_120, %c0_121, %c0_122] : memref<1x16x128xf32, #tpu.memory_space<vmem>>, vector<1x16x128xf32>
      %382 = vector.shape_cast %381 : vector<1x16x128xf32> to vector<16x128xf32>
      %383 = vector.shape_cast %317 : vector<16x128xf32> to vector<1x16x128xf32>
      tpu.vector_store %arg8[%c0_120, %c0_121, %c0_122], %383 {strides = array<i32>} : memref<1x16x128xf32, #tpu.memory_space<vmem>>, vector<1x16x128xf32>,
    } else {
    }
    %c7_i32_98 = arith.constant 7 : i32
    %c16_i32_99 = arith.constant 16 : i32
    %330 = arith.muli %c7_i32_98, %c16_i32_99 : i32
    %331 = tpu.assume_multiple %330, 16 : i32
    %c0_100 = arith.constant 0 : index
    %332 = arith.index_cast %331 : i32 to index
    %c0_101 = arith.constant 0 : index
    %333 = vector.load %arg2[%c0_100, %332, %c0_101] : memref<1x128x16xbf16, #tpu.memory_space<vmem>>, vector<1x16x16xbf16>
    %334 = vector.shape_cast %333 : vector<1x16x16xbf16> to vector<16x16xbf16>
    %cst_102 = arith.constant dense<0.000000e+00> : vector<16x512xf32>
    %335 = tpu.matmul %334, %3, %cst_102 {dimension_numbers = #tpu.dot_dimension_numbers<[1], [0], [0], [1], [0, 0, 1, 1], [], []>} : vector<16x16xbf16>, vector<16x512xbf16>, vector<16x512xf32> -> vector<16x512xf32>
    %336 = vector.broadcast %5 : vector<1x512xf32> to vector<16x512xf32>
    %337 = arith.addf %335, %336 : vector<16x512xf32>
    %338 = arith.truncf %319 : vector<16x128xf32> to vector<16x128xbf16>
    %cst_103 = arith.constant dense<0.000000e+00> : vector<16x512xf32>
    %339 = tpu.matmul %338, %4, %cst_103 {dimension_numbers = #tpu.dot_dimension_numbers<[1], [0], [0], [1], [0, 0, 1, 1], [], []>} : vector<16x128xbf16>, vector<128x512xbf16>, vector<16x512xf32> -> vector<16x512xf32>
    %340 = arith.addf %337, %339 : vector<16x512xf32>
    %341 = vector.extract_strided_slice %340 {offsets = [0, 0], sizes = [16, 128], strides = [1, 1]} : vector<16x512xf32> to vector<16x128xf32>
    %342 = arith.negf %341 : vector<16x128xf32>
    %343 = math.exp %342 : vector<16x128xf32>
    %cst_104 = arith.constant 1.000000e+00 : f32
    %344 = vector.broadcast %cst_104 : f32 to vector<16x128xf32>
    %345 = arith.addf %344, %343 : vector<16x128xf32>
    %346 = arith.divf %344, %345 : vector<16x128xf32>
    %347 = vector.extract_strided_slice %340 {offsets = [0, 128], sizes = [16, 128], strides = [1, 1]} : vector<16x512xf32> to vector<16x128xf32>
    %348 = arith.negf %347 : vector<16x128xf32>
    %349 = math.exp %348 : vector<16x128xf32>
    %cst_105 = arith.constant 1.000000e+00 : f32
    %350 = vector.broadcast %cst_105 : f32 to vector<16x128xf32>
    %351 = arith.addf %350, %349 : vector<16x128xf32>
    %352 = arith.divf %350, %351 : vector<16x128xf32>
    %353 = vector.extract_strided_slice %340 {offsets = [0, 256], sizes = [16, 128], strides = [1, 1]} : vector<16x512xf32> to vector<16x128xf32>
    %354 = math.tanh %353 : vector<16x128xf32>
    %355 = vector.extract_strided_slice %340 {offsets = [0, 384], sizes = [16, 128], strides = [1, 1]} : vector<16x512xf32> to vector<16x128xf32>
    %356 = arith.negf %355 : vector<16x128xf32>
    %357 = math.exp %356 : vector<16x128xf32>
    %cst_106 = arith.constant 1.000000e+00 : f32
    %358 = vector.broadcast %cst_106 : f32 to vector<16x128xf32>
    %359 = arith.addf %358, %357 : vector<16x128xf32>
    %360 = arith.divf %358, %359 : vector<16x128xf32>
    %361 = arith.mulf %352, %317 : vector<16x128xf32>
    %362 = arith.mulf %346, %354 : vector<16x128xf32>
    %363 = arith.addf %361, %362 : vector<16x128xf32>
    %364 = math.tanh %363 : vector<16x128xf32>
    %365 = arith.mulf %360, %364 : vector<16x128xf32>
    %366 = arith.truncf %365 : vector<16x128xf32> to vector<16x128xbf16>
    %c0_107 = arith.constant 0 : index
    %367 = arith.index_cast %331 : i32 to index
    %c0_108 = arith.constant 0 : index
    %368 = vector.load %arg6[%c0_107, %367, %c0_108] : memref<1x128x128xbf16, #tpu.memory_space<vmem>>, vector<1x16x128xbf16>
    %369 = vector.shape_cast %368 : vector<1x16x128xbf16> to vector<16x128xbf16>
    %370 = vector.shape_cast %366 : vector<16x128xbf16> to vector<1x16x128xbf16>
    tpu.vector_store %arg6[%c0_107, %367, %c0_108], %370 {strides = array<i32>} : memref<1x128x128xbf16, #tpu.memory_space<vmem>>, vector<1x16x128xbf16>,
    %c8_i32_109 = arith.constant 8 : i32
    %371 = arith.muli %arg1, %c8_i32_109 : i32
    %372 = arith.addi %371, %c7_i32_98 : i32
    %c7_i32_110 = arith.constant 7 : i32
    %373 = arith.cmpi eq, %372, %c7_i32_110 : i32
    %374 = arith.extui %373 : i1 to i32
    %c0_i32_111 = arith.constant 0 : i32
    %375 = arith.cmpi ne, %374, %c0_i32_111 : i32
    scf.if %375 {
      %c0_117 = arith.constant 0 : index
      %c0_118 = arith.constant 0 : index
      %c0_119 = arith.constant 0 : index
      %378 = vector.load %arg7[%c0_117, %c0_118, %c0_119] : memref<1x16x128xf32, #tpu.memory_space<vmem>>, vector<1x16x128xf32>
      %379 = vector.shape_cast %378 : vector<1x16x128xf32> to vector<16x128xf32>
      %380 = vector.shape_cast %365 : vector<16x128xf32> to vector<1x16x128xf32>
      tpu.vector_store %arg7[%c0_117, %c0_118, %c0_119], %380 {strides = array<i32>} : memref<1x16x128xf32, #tpu.memory_space<vmem>>, vector<1x16x128xf32>,
      %c0_120 = arith.constant 0 : index
      %c0_121 = arith.constant 0 : index
      %c0_122 = arith.constant 0 : index
      %381 = vector.load %arg8[%c0_120, %c0_121, %c0_122] : memref<1x16x128xf32, #tpu.memory_space<vmem>>, vector<1x16x128xf32>
      %382 = vector.shape_cast %381 : vector<1x16x128xf32> to vector<16x128xf32>
      %383 = vector.shape_cast %363 : vector<16x128xf32> to vector<1x16x128xf32>
      tpu.vector_store %arg8[%c0_120, %c0_121, %c0_122], %383 {strides = array<i32>} : memref<1x16x128xf32, #tpu.memory_space<vmem>>, vector<1x16x128xf32>,
    } else {
    }
    %c8_i32_112 = arith.constant 8 : i32
    %c0_113 = arith.constant 0 : index
    %c0_114 = arith.constant 0 : index
    %376 = vector.load %arg9[%c0_113, %c0_114] : memref<16x128xf32, #tpu.memory_space<vmem>>, vector<16x128xf32>
    tpu.vector_store %arg9[%c0_113, %c0_114], %365 {strides = array<i32>} : memref<16x128xf32, #tpu.memory_space<vmem>>, vector<16x128xf32>,
    %c0_115 = arith.constant 0 : index
    %c0_116 = arith.constant 0 : index
    %377 = vector.load %arg10[%c0_115, %c0_116] : memref<16x128xf32, #tpu.memory_space<vmem>>, vector<16x128xf32>
    tpu.vector_store %arg10[%c0_115, %c0_116], %363 {strides = array<i32>} : memref<16x128xf32, #tpu.memory_space<vmem>>, vector<16x128xf32>,
    return
  }
  func.func @transform_0(%arg0: i32, %arg1: i32) -> (i32, i32, i32) {
    %c0_i32 = arith.constant 0 : i32
    %c0_i32_0 = arith.constant 0 : i32
    return %arg0, %arg1, %c0_i32 : i32, i32, i32
  }
  func.func @transform_1(%arg0: i32, %arg1: i32) -> (i32, i32) {
    %c0_i32 = arith.constant 0 : i32
    %c0_i32_0 = arith.constant 0 : i32
    %c0_i32_1 = arith.constant 0 : i32
    return %c0_i32, %c0_i32_0 : i32, i32
  }
  func.func @transform_2(%arg0: i32, %arg1: i32) -> (i32, i32) {
    %c0_i32 = arith.constant 0 : i32
    %c0_i32_0 = arith.constant 0 : i32
    %c0_i32_1 = arith.constant 0 : i32
    return %c0_i32, %c0_i32_0 : i32, i32
  }
  func.func @transform_3(%arg0: i32, %arg1: i32) -> (i32, i32) {
    %c0_i32 = arith.constant 0 : i32
    %c0_i32_0 = arith.constant 0 : i32
    %c0_i32_1 = arith.constant 0 : i32
    return %c0_i32, %c0_i32_0 : i32, i32
  }
  func.func @transform_4(%arg0: i32, %arg1: i32) -> (i32, i32, i32) {
    %c0_i32 = arith.constant 0 : i32
    %c0_i32_0 = arith.constant 0 : i32
    return %arg0, %arg1, %c0_i32 : i32, i32, i32
  }
  func.func @transform_5(%arg0: i32, %arg1: i32) -> (i32, i32, i32) {
    %c0_i32 = arith.constant 0 : i32
    %c0_i32_0 = arith.constant 0 : i32
    %c0_i32_1 = arith.constant 0 : i32
    return %arg0, %c0_i32, %c0_i32_0 : i32, i32, i32
  }
  func.func @transform_6(%arg0: i32, %arg1: i32) -> (i32, i32, i32) {
    %c0_i32 = arith.constant 0 : i32
    %c0_i32_0 = arith.constant 0 : i32
    %c0_i32_1 = arith.constant 0 : i32
    return %arg0, %c0_i32, %c0_i32_0 : i32, i32, i32
  }
}

</mosaic_0001>

<llo_original>
// kernel: rnn_block_lstm.1
$region0: #{rnn_block_lstm.1}
  #allocation0 [shape = 'u32[]', space=smem, size = 0x4, offset = 0x4, fixed_abs, tag = 'smem constant byte address 0x4 - core index']
  #allocation1 [shape = 'u32[144,128]{1,0:T(1,128)}', space=vmem, size = 0x12000, scoped, tag = 'internal scratch']
  #allocation2 [shape = 'f32[16,128]{1,0:T(8,128)}', space=vmem, size = 0x2000, scoped, tag = 'scratch operand']
  #allocation3 [shape = 'f32[16,128]{1,0:T(8,128)}', space=vmem, size = 0x2000, scoped, tag = 'scratch operand']
  %s0 = inlined_call_operand.vmem [shape: bf16[1,128,16], index: 0, kind: input, shape index: {}]
  %s1 = inlined_call_operand.vmem [shape: bf16[16,512], index: 1, kind: input, shape index: {}]
  %s2 = inlined_call_operand.vmem [shape: bf16[128,512], index: 2, kind: input, shape index: {}]
  %s3 = inlined_call_operand.vmem [shape: f32[1,512], index: 3, kind: input, shape index: {}]
  %s4 = inlined_call_operand.vmem [shape: bf16[1,128,128], index: 4, kind: output, shape index: {0}]
  %s5 = inlined_call_operand.vmem [shape: f32[1,16,128], index: 5, kind: output, shape index: {1}]
  %s6 = inlined_call_operand.vmem [shape: f32[1,16,128], index: 6, kind: output, shape index: {2}]
  %7 = xla_tuple %s4, %s5, %s6
  %s8 = sld [smem:[#allocation0]]
  $region78: #{rnn_block_lstm.1} parent=0
    _
  %s10 = ssub.s32 1, %s8
  %s11 = scalar_select 0, %s10, %s8
  // Predicated region
  $region2: #{rnn_block_lstm.1} parent=0 // pred_check
    _
  $region3: #{rnn_block_lstm.1} parent=0 // pred_check_branch
    %13 = sbr.rel (0) target = $region5
  $region4: #{rnn_block_lstm.1} parent=0 // pred_region
    _
  $region5: #{rnn_block_lstm.1} parent=0 // pred_fallthru
    _
  // Predicated region
  $region6: #{rnn_block_lstm.1} parent=0 // pred_check
    _
  $region7: #{rnn_block_lstm.1} parent=0 // pred_check_branch
    %15 = sbr.rel (0) target = $region9
  $region8: #{rnn_block_lstm.1} parent=0 // pred_region
    _
  $region9: #{rnn_block_lstm.1} parent=0 // pred_fallthru
    _
  // Predicated region
  $region10: #{rnn_block_lstm.1} parent=0 // pred_check
    _
  $region11: #{rnn_block_lstm.1} parent=0 // pred_check_branch
    %17 = sbr.rel (0) target = $region13
  $region12: #{rnn_block_lstm.1} parent=0 // pred_region
    _
  $region13: #{rnn_block_lstm.1} parent=0 // pred_fallthru
    _
  // Predicated region
  $region14: #{rnn_block_lstm.1} parent=0 // pred_check
    _
  $region15: #{rnn_block_lstm.1} parent=0 // pred_check_branch
    %19 = sbr.rel (0) target = $region17
  $region16: #{rnn_block_lstm.1} parent=0 // pred_region
    _
  $region17: #{rnn_block_lstm.1} parent=0 // pred_fallthru
    _
  %p21 = scmp.eq.s32.totalorder 0, 0
  // Predicated region
  $region18: #{rnn_block_lstm.1} parent=0 // pred_check
    %p22 = pneg %p21
  $region19: #{rnn_block_lstm.1} parent=0 // pred_check_branch
    %24 = sbr.rel (%p22) target = $region21
  $region20: #{rnn_block_lstm.1} parent=0 // pred_region
    %25 = vst [vmem:[#allocation2] sm:$0xff] 0.0
    %26 = vst [vmem:[#allocation2 + $0x8] sm:$0xff] 0.0
    %27 = vst [vmem:[#allocation3] sm:$0xff] 0.0
    %28 = vst [vmem:[#allocation3 + $0x8] sm:$0xff] 0.0
  $region21: #{rnn_block_lstm.1} parent=0 // pred_fallthru
    _
  %v29 = vld [vmem:[%s1] sm:$0xff]
  %v30 = vld [vmem:[%s1 + $0x8] sm:$0xff]
  %v31 = vld [vmem:[%s1 + $0x10] sm:$0xff]
  %v32 = vld [vmem:[%s1 + $0x18] sm:$0xff]
  %v33 = vld [vmem:[%s2] sm:$0xff]
  %v34 = vld [vmem:[%s2 + $0x8] sm:$0xff]
  %v35 = vld [vmem:[%s2 + $0x10] sm:$0xff]
  %v36 = vld [vmem:[%s2 + $0x18] sm:$0xff]
  %v37 = vld [vmem:[%s2 + $0x20] sm:$0xff]
  %v38 = vld [vmem:[%s2 + $0x28] sm:$0xff]
  %v39 = vld [vmem:[%s2 + $0x30] sm:$0xff]
  %v40 = vld [vmem:[%s2 + $0x38] sm:$0xff]
  %v41 = vld [vmem:[%s2 + $0x40] sm:$0xff]
  %v42 = vld [vmem:[%s2 + $0x48] sm:$0xff]
  %v43 = vld [vmem:[%s2 + $0x50] sm:$0xff]
  %v44 = vld [vmem:[%s2 + $0x58] sm:$0xff]
  %v45 = vld [vmem:[%s2 + $0x60] sm:$0xff]
  %v46 = vld [vmem:[%s2 + $0x68] sm:$0xff]
  %v47 = vld [vmem:[%s2 + $0x70] sm:$0xff]
  %v48 = vld [vmem:[%s2 + $0x78] sm:$0xff]
  %v49 = vld [vmem:[%s2 + $0x80] sm:$0xff]
  %v50 = vld [vmem:[%s2 + $0x88] sm:$0xff]
  %v51 = vld [vmem:[%s2 + $0x90] sm:$0xff]
  %v52 = vld [vmem:[%s2 + $0x98] sm:$0xff]
  %v53 = vld [vmem:[%s2 + $0xa0] sm:$0xff]
  %v54 = vld [vmem:[%s2 + $0xa8] sm:$0xff]
  %v55 = vld [vmem:[%s2 + $0xb0] sm:$0xff]
  %v56 = vld [vmem:[%s2 + $0xb8] sm:$0xff]
  %v57 = vld [vmem:[%s2 + $0xc0] sm:$0xff]
  %v58 = vld [vmem:[%s2 + $0xc8] sm:$0xff]
  %v59 = vld [vmem:[%s2 + $0xd0] sm:$0xff]
  %v60 = vld [vmem:[%s2 + $0xd8] sm:$0xff]
  %v61 = vld [vmem:[%s2 + $0xe0] sm:$0xff]
  %v62 = vld [vmem:[%s2 + $0xe8] sm:$0xff]
  %v63 = vld [vmem:[%s2 + $0xf0] sm:$0xff]
  %v64 = vld [vmem:[%s2 + $0xf8] sm:$0xff]
  %v65 = vld [vmem:[%s3] sm:$0xf]
  %v66 = vld [vmem:[#allocation2] sm:$0xff]
  %v67 = vld [vmem:[#allocation2 + $0x8] sm:$0xff]
  %v68 = vld [vmem:[#allocation3] sm:$0xff]
  %v69 = vld [vmem:[#allocation3 + $0x8] sm:$0xff]
  %v70 = vld [vmem:[%s0] sm:$0xf]
  %v71 = vld [vmem:[%s0 + $0x4] sm:$0xf]
  %v73 = vlaneseq
  %v74 = vshrl.u32 %v73, 7
  %v75 = vsub.s32 0, %v74
  %v76 = vrot.slane %v65, %v75
  %v77 = vlaneseq
  %v78 = vshrl.u32 %v77, 7
  %v79 = vsub.s32 1, %v78
  %v80 = vrot.slane %v65, %v79
  %v81 = vlaneseq
  %v82 = vshrl.u32 %v81, 7
  %v83 = vsub.s32 2, %v82
  %v84 = vrot.slane %v65, %v83
  %v85 = vlaneseq
  %v86 = vshrl.u32 %v85, 7
  %v87 = vsub.s32 3, %v86
  %v88 = vrot.slane %v65, %v87
  %v95 = vunpack.c.l.b16 %v70
  %v96 = vunpack.c.l.b16 %v71
  %v97 = vpack.c.b16 %v96, %v95
  %v102 = vunpack.c.l.b16 %v29
  %v103 = vunpack.c.h.b16 %v29
  %v104 = vunpack.c.l.b16 %v30
  %v105 = vunpack.c.h.b16 %v30
  %v106 = vunpack.c.l.b16 %v31
  %v107 = vunpack.c.h.b16 %v31
  %v108 = vunpack.c.l.b16 %v32
  %v109 = vunpack.c.h.b16 %v32
  %v110 = vpack.c.b16 %v106, %v102
  %v111 = vpack.c.b16 %v107, %v103
  %v112 = vpack.c.b16 %v108, %v104
  %v113 = vpack.c.b16 %v109, %v105
  %vm118 = vcmask 130048
  %v120 = vsel %vm118, %v97, 0
  %122 = vmatprep.subr.bf16.mxu0 0
  %123 = vmatpush1.bf16.msra.mxu0 0
  %124 = vmatprep.subr.bf16.mxu0 0
  %125 = vmatpush1.bf16.msra.mxu0 0
  %126 = vmatprep.subr.bf16.mxu0 0
  %127 = vmatpush1.bf16.msra.mxu0 0
  %128 = vmatprep.subr.bf16.mxu0 0
  %129 = vmatpush1.bf16.msra.mxu0 0
  %130 = vmatprep.subr.bf16.mxu0 0
  %131 = vmatpush1.bf16.msra.mxu0 0
  %132 = vmatprep.subr.bf16.mxu0 0
  %133 = vmatpush1.bf16.msra.mxu0 0
  %134 = vmatprep.subr.bf16.mxu0 0
  %135 = vmatpush1.bf16.msra.mxu0 0
  %136 = vmatprep.subr.bf16.mxu0 %v111
  %137 = vmatpush1.bf16.msra.mxu0 %v110
  %138 = vmatprep.subr.bf16.mxu0 0
  %139 = vmatpush2.bf16.msra.mxu0 0
  %140 = vmatprep.subr.bf16.mxu0 0
  %141 = vmatpush2.bf16.msra.mxu0 0
  %142 = vmatprep.subr.bf16.mxu0 0
  %143 = vmatpush2.bf16.msra.mxu0 0
  %144 = vmatprep.subr.bf16.mxu0 0
  %145 = vmatpush2.bf16.msra.mxu0 0
  %146 = vmatprep.subr.bf16.mxu0 0
  %147 = vmatpush2.bf16.msra.mxu0 0
  %148 = vmatprep.subr.bf16.mxu0 0
  %149 = vmatpush2.bf16.msra.mxu0 0
  %150 = vmatprep.subr.bf16.mxu0 0
  %151 = vmatpush2.bf16.msra.mxu0 0
  %152 = vmatprep.subr.bf16.mxu0 0
  %153 = vmatpush2.bf16.msra.mxu0 0
  %154 = vmatprep.mubr.bf16.mxu0 0
  %155 = vmatmul.mubr.bf16.gmra.mxu0 %v120
  %v156 = vpop.f32.mrf.mxu0
  %v157 = vadd.f32 %v76, %v156
  %v158 = vpop.f32.mrf.mxu0
  %v159 = vadd.f32 %v80, %v158
  %v160 = vpop.f32.mrf.mxu0
  %v161 = vadd.f32 %v76, %v160
  %v162 = vpop.f32.mrf.mxu0
  %v163 = vadd.f32 %v80, %v162
  %164 = vdwg.mxu0
  %165 = vmatprep.subr.bf16.mxu0 0
  %166 = vmatpush1.bf16.msra.mxu0 0
  %167 = vmatprep.subr.bf16.mxu0 0
  %168 = vmatpush1.bf16.msra.mxu0 0
  %169 = vmatprep.subr.bf16.mxu0 0
  %170 = vmatpush1.bf16.msra.mxu0 0
  %171 = vmatprep.subr.bf16.mxu0 0
  %172 = vmatpush1.bf16.msra.mxu0 0
  %173 = vmatprep.subr.bf16.mxu0 0
  %174 = vmatpush1.bf16.msra.mxu0 0
  %175 = vmatprep.subr.bf16.mxu0 0
  %176 = vmatpush1.bf16.msra.mxu0 0
  %177 = vmatprep.subr.bf16.mxu0 0
  %178 = vmatpush1.bf16.msra.mxu0 0
  %179 = vmatprep.subr.bf16.mxu0 %v113
  %180 = vmatpush1.bf16.msra.mxu0 %v112
  %181 = vmatprep.subr.bf16.mxu0 0
  %182 = vmatpush2.bf16.msra.mxu0 0
  %183 = vmatprep.subr.bf16.mxu0 0
  %184 = vmatpush2.bf16.msra.mxu0 0
  %185 = vmatprep.subr.bf16.mxu0 0
  %186 = vmatpush2.bf16.msra.mxu0 0
  %187 = vmatprep.subr.bf16.mxu0 0
  %188 = vmatpush2.bf16.msra.mxu0 0
  %189 = vmatprep.subr.bf16.mxu0 0
  %190 = vmatpush2.bf16.msra.mxu0 0
  %191 = vmatprep.subr.bf16.mxu0 0
  %192 = vmatpush2.bf16.msra.mxu0 0
  %193 = vmatprep.subr.bf16.mxu0 0
  %194 = vmatpush2.bf16.msra.mxu0 0
  %195 = vmatprep.subr.bf16.mxu0 0
  %196 = vmatpush2.bf16.msra.mxu0 0
  %197 = vmatprep.mubr.bf16.mxu0 0
  %198 = vmatmul.mubr.bf16.gmra.mxu0 %v120
  %v199 = vpop.f32.mrf.mxu0
  %v200 = vadd.f32 %v84, %v199
  %v201 = vpop.f32.mrf.mxu0
  %v202 = vadd.f32 %v88, %v201
  %v203 = vpop.f32.mrf.mxu0
  %v204 = vadd.f32 %v84, %v203
  %v205 = vpop.f32.mrf.mxu0
  %v206 = vadd.f32 %v88, %v205
  %207 = vdwg.mxu0
  %v208 = vpack.c.bf16 %v67, %v66
  %v241 = vunpack.c.l.b16 %v33
  %v242 = vunpack.c.h.b16 %v33
  %v243 = vunpack.c.l.b16 %v34
  %v244 = vunpack.c.h.b16 %v34
  %v245 = vunpack.c.l.b16 %v35
  %v246 = vunpack.c.h.b16 %v35
  %v247 = vunpack.c.l.b16 %v36
  %v248 = vunpack.c.h.b16 %v36
  %v249 = vunpack.c.l.b16 %v37
  %v250 = vunpack.c.h.b16 %v37
  %v251 = vunpack.c.l.b16 %v38
  %v252 = vunpack.c.h.b16 %v38
  %v253 = vunpack.c.l.b16 %v39
  %v254 = vunpack.c.h.b16 %v39
  %v255 = vunpack.c.l.b16 %v40
  %v256 = vunpack.c.h.b16 %v40
  %v257 = vunpack.c.l.b16 %v41
  %v258 = vunpack.c.h.b16 %v41
  %v259 = vunpack.c.l.b16 %v42
  %v260 = vunpack.c.h.b16 %v42
  %v261 = vunpack.c.l.b16 %v43
  %v262 = vunpack.c.h.b16 %v43
  %v263 = vunpack.c.l.b16 %v44
  %v264 = vunpack.c.h.b16 %v44
  %v265 = vunpack.c.l.b16 %v45
  %v266 = vunpack.c.h.b16 %v45
  %v267 = vunpack.c.l.b16 %v46
  %v268 = vunpack.c.h.b16 %v46
  %v269 = vunpack.c.l.b16 %v47
  %v270 = vunpack.c.h.b16 %v47
  %v271 = vunpack.c.l.b16 %v48
  %v272 = vunpack.c.h.b16 %v48
  %v273 = vunpack.c.l.b16 %v49
  %v274 = vunpack.c.h.b16 %v49
  %v275 = vunpack.c.l.b16 %v50
  %v276 = vunpack.c.h.b16 %v50
  %v277 = vunpack.c.l.b16 %v51
  %v278 = vunpack.c.h.b16 %v51
  %v279 = vunpack.c.l.b16 %v52
  %v280 = vunpack.c.h.b16 %v52
  %v281 = vunpack.c.l.b16 %v53
  %v282 = vunpack.c.h.b16 %v53
  %v283 = vunpack.c.l.b16 %v54
  %v284 = vunpack.c.h.b16 %v54
  %v285 = vunpack.c.l.b16 %v55
  %v286 = vunpack.c.h.b16 %v55
  %v287 = vunpack.c.l.b16 %v56
  %v288 = vunpack.c.h.b16 %v56
  %v289 = vunpack.c.l.b16 %v57
  %v290 = vunpack.c.h.b16 %v57
  %v291 = vunpack.c.l.b16 %v58
  %v292 = vunpack.c.h.b16 %v58
  %v293 = vunpack.c.l.b16 %v59
  %v294 = vunpack.c.h.b16 %v59
  %v295 = vunpack.c.l.b16 %v60
  %v296 = vunpack.c.h.b16 %v60
  %v297 = vunpack.c.l.b16 %v61
  %v298 = vunpack.c.h.b16 %v61
  %v299 = vunpack.c.l.b16 %v62
  %v300 = vunpack.c.h.b16 %v62
  %v301 = vunpack.c.l.b16 %v63
  %v302 = vunpack.c.h.b16 %v63
  %v303 = vunpack.c.l.b16 %v64
  %v304 = vunpack.c.h.b16 %v64
  %v305 = vpack.c.b16 %v245, %v241
  %v306 = vpack.c.b16 %v246, %v242
  %v307 = vpack.c.b16 %v247, %v243
  %v308 = vpack.c.b16 %v248, %v244
  %v309 = vpack.c.b16 %v253, %v249
  %v310 = vpack.c.b16 %v254, %v250
  %v311 = vpack.c.b16 %v255, %v251
  %v312 = vpack.c.b16 %v256, %v252
  %v313 = vpack.c.b16 %v261, %v257
  %v314 = vpack.c.b16 %v262, %v258
  %v315 = vpack.c.b16 %v263, %v259
  %v316 = vpack.c.b16 %v264, %v260
  %v317 = vpack.c.b16 %v269, %v265
  %v318 = vpack.c.b16 %v270, %v266
  %v319 = vpack.c.b16 %v271, %v267
  %v320 = vpack.c.b16 %v272, %v268
  %v321 = vpack.c.b16 %v277, %v273
  %v322 = vpack.c.b16 %v278, %v274
  %v323 = vpack.c.b16 %v279, %v275
  %v324 = vpack.c.b16 %v280, %v276
  %v325 = vpack.c.b16 %v285, %v281
  %v326 = vpack.c.b16 %v286, %v282
  %v327 = vpack.c.b16 %v287, %v283
  %v328 = vpack.c.b16 %v288, %v284
  %v329 = vpack.c.b16 %v293, %v289
  %v330 = vpack.c.b16 %v294, %v290
  %v331 = vpack.c.b16 %v295, %v291
  %v332 = vpack.c.b16 %v296, %v292
  %v333 = vpack.c.b16 %v301, %v297
  %v334 = vpack.c.b16 %v302, %v298
  %v335 = vpack.c.b16 %v303, %v299
  %v336 = vpack.c.b16 %v304, %v300
  %369 = vmatprep.subr.bf16.mxu0 %v334
  %370 = vmatpush1.bf16.msra.mxu0 %v333
  %371 = vmatprep.subr.bf16.mxu0 %v330
  %372 = vmatpush1.bf16.msra.mxu0 %v329
  %373 = vmatprep.subr.bf16.mxu0 %v326
  %374 = vmatpush1.bf16.msra.mxu0 %v325
  %375 = vmatprep.subr.bf16.mxu0 %v322
  %376 = vmatpush1.bf16.msra.mxu0 %v321
  %377 = vmatprep.subr.bf16.mxu0 %v318
  %378 = vmatpush1.bf16.msra.mxu0 %v317
  %379 = vmatprep.subr.bf16.mxu0 %v314
  %380 = vmatpush1.bf16.msra.mxu0 %v313
  %381 = vmatprep.subr.bf16.mxu0 %v310
  %382 = vmatpush1.bf16.msra.mxu0 %v309
  %383 = vmatprep.subr.bf16.mxu0 %v306
  %384 = vmatpush1.bf16.msra.mxu0 %v305
  %385 = vmatprep.subr.bf16.mxu0 0
  %386 = vmatpush2.bf16.msra.mxu0 0
  %387 = vmatprep.subr.bf16.mxu0 0
  %388 = vmatpush2.bf16.msra.mxu0 0
  %389 = vmatprep.subr.bf16.mxu0 0
  %390 = vmatpush2.bf16.msra.mxu0 0
  %391 = vmatprep.subr.bf16.mxu0 0
  %392 = vmatpush2.bf16.msra.mxu0 0
  %393 = vmatprep.subr.bf16.mxu0 0
  %394 = vmatpush2.bf16.msra.mxu0 0
  %395 = vmatprep.subr.bf16.mxu0 0
  %396 = vmatpush2.bf16.msra.mxu0 0
  %397 = vmatprep.subr.bf16.mxu0 0
  %398 = vmatpush2.bf16.msra.mxu0 0
  %399 = vmatprep.subr.bf16.mxu0 0
  %400 = vmatpush2.bf16.msra.mxu0 0
  %401 = vmatprep.mubr.bf16.mxu0 0
  %402 = vmatmul.mubr.bf16.gmra.mxu0 %v208
  %v403 = vpop.f32.mrf.mxu0
  %v404 = vadd.f32 0.0, %v403
  %v405 = vpop.f32.mrf.mxu0
  %v406 = vadd.f32 0.0, %v405
  %v407 = vpop.f32.mrf.mxu0
  %v408 = vadd.f32 0.0, %v407
  %v409 = vpop.f32.mrf.mxu0
  %v410 = vadd.f32 0.0, %v409
  %411 = vdwg.mxu0
  %412 = vmatprep.subr.bf16.mxu0 %v336
  %413 = vmatpush1.bf16.msra.mxu0 %v335
  %414 = vmatprep.subr.bf16.mxu0 %v332
  %415 = vmatpush1.bf16.msra.mxu0 %v331
  %416 = vmatprep.subr.bf16.mxu0 %v328
  %417 = vmatpush1.bf16.msra.mxu0 %v327
  %418 = vmatprep.subr.bf16.mxu0 %v324
  %419 = vmatpush1.bf16.msra.mxu0 %v323
  %420 = vmatprep.subr.bf16.mxu0 %v320
  %421 = vmatpush1.bf16.msra.mxu0 %v319
  %422 = vmatprep.subr.bf16.mxu0 %v316
  %423 = vmatpush1.bf16.msra.mxu0 %v315
  %424 = vmatprep.subr.bf16.mxu0 %v312
  %425 = vmatpush1.bf16.msra.mxu0 %v311
  %426 = vmatprep.subr.bf16.mxu0 %v308
  %427 = vmatpush1.bf16.msra.mxu0 %v307
  %428 = vmatprep.subr.bf16.mxu0 0
  %429 = vmatpush2.bf16.msra.mxu0 0
  %430 = vmatprep.subr.bf16.mxu0 0
  %431 = vmatpush2.bf16.msra.mxu0 0
  %432 = vmatprep.subr.bf16.mxu0 0
  %433 = vmatpush2.bf16.msra.mxu0 0
  %434 = vmatprep.subr.bf16.mxu0 0
  %435 = vmatpush2.bf16.msra.mxu0 0
  %436 = vmatprep.subr.bf16.mxu0 0
  %437 = vmatpush2.bf16.msra.mxu0 0
  %438 = vmatprep.subr.bf16.mxu0 0
  %439 = vmatpush2.bf16.msra.mxu0 0
  %440 = vmatprep.subr.bf16.mxu0 0
  %441 = vmatpush2.bf16.msra.mxu0 0
  %442 = vmatprep.subr.bf16.mxu0 0
  %443 = vmatpush2.bf16.msra.mxu0 0
  %444 = vmatprep.mubr.bf16.mxu0 0
  %445 = vmatmul.mubr.bf16.gmra.mxu0 %v208
  %v446 = vpop.f32.mrf.mxu0
  %v447 = vadd.f32 0.0, %v446
  %v448 = vpop.f32.mrf.mxu0
  %v449 = vadd.f32 0.0, %v448
  %v450 = vpop.f32.mrf.mxu0
  %v451 = vadd.f32 0.0, %v450
  %v452 = vpop.f32.mrf.mxu0
  %v453 = vadd.f32 0.0, %v452
  %454 = vdwg.mxu0
  %v455 = vadd.f32 %v157, %v404
  %v456 = vadd.f32 %v159, %v406
  %v457 = vadd.f32 %v200, %v447
  %v458 = vadd.f32 %v202, %v449
  %v459 = vadd.f32 %v161, %v408
  %v460 = vadd.f32 %v163, %v410
  %v461 = vadd.f32 %v204, %v451
  %v462 = vadd.f32 %v206, %v453
  %v463 = vxor.u32 %v455, 2147483648
  %v464 = vxor.u32 %v459, 2147483648
  %v465 = vmul.f32 %v463, 1.442695
  %v466 = vpow.pop %v465
  %v467 = vmul.f32 %v464, 1.442695
  %v468 = vpow.pop %v467
  %v469 = vadd.f32 %v466, 1.0
  %v470 = vadd.f32 %v468, 1.0
  %v471 = vrcp.pop %v469
  %v472 = vmul.f32 1.0, %v471
  %v473 = vrcp.pop %v470
  %v474 = vmul.f32 1.0, %v473
  %v475 = vxor.u32 %v456, 2147483648
  %v476 = vxor.u32 %v460, 2147483648
  %v477 = vmul.f32 %v475, 1.442695
  %v478 = vpow.pop %v477
  %v479 = vmul.f32 %v476, 1.442695
  %v480 = vpow.pop %v479
  %v481 = vadd.f32 %v478, 1.0
  %v482 = vadd.f32 %v480, 1.0
  %v483 = vrcp.pop %v481
  %v484 = vmul.f32 1.0, %v483
  %v485 = vrcp.pop %v482
  %v486 = vmul.f32 1.0, %v485
  %v487 = vtanh.pop %v457
  %v488 = vtanh.pop %v461
  %v489 = vxor.u32 %v458, 2147483648
  %v490 = vxor.u32 %v462, 2147483648
  %v491 = vmul.f32 %v489, 1.442695
  %v492 = vpow.pop %v491
  %v493 = vmul.f32 %v490, 1.442695
  %v494 = vpow.pop %v493
  %v495 = vadd.f32 %v492, 1.0
  %v496 = vadd.f32 %v494, 1.0
  %v497 = vrcp.pop %v495
  %v498 = vmul.f32 1.0, %v497
  %v499 = vrcp.pop %v496
  %v500 = vmul.f32 1.0, %v499
  %v501 = vmul.f32 %v484, %v68
  %v502 = vmul.f32 %v486, %v69
  %v503 = vmul.f32 %v472, %v487
  %v504 = vmul.f32 %v474, %v488
  %v505 = vadd.f32 %v501, %v503
  %v506 = vadd.f32 %v502, %v504
  %v507 = vtanh.pop %v505
  %v508 = vtanh.pop %v506
  %v509 = vmul.f32 %v498, %v507
  %v510 = vmul.f32 %v500, %v508
  %v511 = vpack.c.bf16 %v510, %v509
  %v513 = vunpack.c.l.b16 %v511
  %v514 = vunpack.c.h.b16 %v511
  %v515 = vpack.c.b16 %v513, %v513
  %v516 = vpack.c.b16 %v514, %v514
  %519 = vst [vmem:[%s4] sm:$0xf] %v515
  %520 = vst [vmem:[%s4 + $0x4] sm:$0xf] %v516
  %s521 = smul.u32 0, 8
  %p522 = scmp.eq.s32.totalorder %s521, 7
  // Predicated region
  $region22: #{rnn_block_lstm.1} parent=0 // pred_check
    %p523 = pneg %p522
  $region23: #{rnn_block_lstm.1} parent=0 // pred_check_branch
    %525 = sbr.rel (%p523) target = $region25
  $region24: #{rnn_block_lstm.1} parent=0 // pred_region
    %526 = vst [vmem:[%s5] sm:$0xff] %v509
    %527 = vst [vmem:[%s5 + $0x8] sm:$0xff] %v510
    %528 = vst [vmem:[%s6] sm:$0xff] %v505
    %529 = vst [vmem:[%s6 + $0x8] sm:$0xff] %v506
  $region25: #{rnn_block_lstm.1} parent=0 // pred_fallthru
    _
  %s530 = scalar_lea.vmem %s0, 8
  %v531 = vld [vmem:[%s530] sm:$0xf]
  %v532 = vld [vmem:[%s530 + $0x4] sm:$0xf]
  %v535 = vunpack.c.l.b16 %v531
  %v536 = vunpack.c.l.b16 %v532
  %v537 = vpack.c.b16 %v536, %v535
  %v539 = vsel %vm118, %v537, 0
  %541 = vmatprep.subr.bf16.mxu0 0
  %542 = vmatpush1.bf16.msra.mxu0 0
  %543 = vmatprep.subr.bf16.mxu0 0
  %544 = vmatpush1.bf16.msra.mxu0 0
  %545 = vmatprep.subr.bf16.mxu0 0
  %546 = vmatpush1.bf16.msra.mxu0 0
  %547 = vmatprep.subr.bf16.mxu0 0
  %548 = vmatpush1.bf16.msra.mxu0 0
  %549 = vmatprep.subr.bf16.mxu0 0
  %550 = vmatpush1.bf16.msra.mxu0 0
  %551 = vmatprep.subr.bf16.mxu0 0
  %552 = vmatpush1.bf16.msra.mxu0 0
  %553 = vmatprep.subr.bf16.mxu0 0
  %554 = vmatpush1.bf16.msra.mxu0 0
  %555 = vmatprep.subr.bf16.mxu0 %v111
  %556 = vmatpush1.bf16.msra.mxu0 %v110
  %557 = vmatprep.subr.bf16.mxu0 0
  %558 = vmatpush2.bf16.msra.mxu0 0
  %559 = vmatprep.subr.bf16.mxu0 0
  %560 = vmatpush2.bf16.msra.mxu0 0
  %561 = vmatprep.subr.bf16.mxu0 0
  %562 = vmatpush2.bf16.msra.mxu0 0
  %563 = vmatprep.subr.bf16.mxu0 0
  %564 = vmatpush2.bf16.msra.mxu0 0
  %565 = vmatprep.subr.bf16.mxu0 0
  %566 = vmatpush2.bf16.msra.mxu0 0
  %567 = vmatprep.subr.bf16.mxu0 0
  %568 = vmatpush2.bf16.msra.mxu0 0
  %569 = vmatprep.subr.bf16.mxu0 0
  %570 = vmatpush2.bf16.msra.mxu0 0
  %571 = vmatprep.subr.bf16.mxu0 0
  %572 = vmatpush2.bf16.msra.mxu0 0
  %573 = vmatprep.mubr.bf16.mxu0 0
  %574 = vmatmul.mubr.bf16.gmra.mxu0 %v539
  %v575 = vpop.f32.mrf.mxu0
  %v576 = vadd.f32 %v76, %v575
  %v577 = vpop.f32.mrf.mxu0
  %v578 = vadd.f32 %v80, %v577
  %v579 = vpop.f32.mrf.mxu0
  %v580 = vadd.f32 %v76, %v579
  %v581 = vpop.f32.mrf.mxu0
  %v582 = vadd.f32 %v80, %v581
  %583 = vdwg.mxu0
  %584 = vmatprep.subr.bf16.mxu0 0
  %585 = vmatpush1.bf16.msra.mxu0 0
  %586 = vmatprep.subr.bf16.mxu0 0
  %587 = vmatpush1.bf16.msra.mxu0 0
  %588 = vmatprep.subr.bf16.mxu0 0
  %589 = vmatpush1.bf16.msra.mxu0 0
  %590 = vmatprep.subr.bf16.mxu0 0
  %591 = vmatpush1.bf16.msra.mxu0 0
  %592 = vmatprep.subr.bf16.mxu0 0
  %593 = vmatpush1.bf16.msra.mxu0 0
  %594 = vmatprep.subr.bf16.mxu0 0
  %595 = vmatpush1.bf16.msra.mxu0 0
  %596 = vmatprep.subr.bf16.mxu0 0
  %597 = vmatpush1.bf16.msra.mxu0 0
  %598 = vmatprep.subr.bf16.mxu0 %v113
  %599 = vmatpush1.bf16.msra.mxu0 %v112
  %600 = vmatprep.subr.bf16.mxu0 0
  %601 = vmatpush2.bf16.msra.mxu0 0
  %602 = vmatprep.subr.bf16.mxu0 0
  %603 = vmatpush2.bf16.msra.mxu0 0
  %604 = vmatprep.subr.bf16.mxu0 0
  %605 = vmatpush2.bf16.msra.mxu0 0
  %606 = vmatprep.subr.bf16.mxu0 0
  %607 = vmatpush2.bf16.msra.mxu0 0
  %608 = vmatprep.subr.bf16.mxu0 0
  %609 = vmatpush2.bf16.msra.mxu0 0
  %610 = vmatprep.subr.bf16.mxu0 0
  %611 = vmatpush2.bf16.msra.mxu0 0
  %612 = vmatprep.subr.bf16.mxu0 0
  %613 = vmatpush2.bf16.msra.mxu0 0
  %614 = vmatprep.subr.bf16.mxu0 0
  %615 = vmatpush2.bf16.msra.mxu0 0
  %616 = vmatprep.mubr.bf16.mxu0 0
  %617 = vmatmul.mubr.bf16.gmra.mxu0 %v539
  %v618 = vpop.f32.mrf.mxu0
  %v619 = vadd.f32 %v84, %v618
  %v620 = vpop.f32.mrf.mxu0
  %v621 = vadd.f32 %v88, %v620
  %v622 = vpop.f32.mrf.mxu0
  %v623 = vadd.f32 %v84, %v622
  %v624 = vpop.f32.mrf.mxu0
  %v625 = vadd.f32 %v88, %v624
  %626 = vdwg.mxu0
  %627 = vmatprep.subr.bf16.mxu0 %v334
  %628 = vmatpush1.bf16.msra.mxu0 %v333
  %629 = vmatprep.subr.bf16.mxu0 %v330
  %630 = vmatpush1.bf16.msra.mxu0 %v329
  %631 = vmatprep.subr.bf16.mxu0 %v326
  %632 = vmatpush1.bf16.msra.mxu0 %v325
  %633 = vmatprep.subr.bf16.mxu0 %v322
  %634 = vmatpush1.bf16.msra.mxu0 %v321
  %635 = vmatprep.subr.bf16.mxu0 %v318
  %636 = vmatpush1.bf16.msra.mxu0 %v317
  %637 = vmatprep.subr.bf16.mxu0 %v314
  %638 = vmatpush1.bf16.msra.mxu0 %v313
  %639 = vmatprep.subr.bf16.mxu0 %v310
  %640 = vmatpush1.bf16.msra.mxu0 %v309
  %641 = vmatprep.subr.bf16.mxu0 %v306
  %642 = vmatpush1.bf16.msra.mxu0 %v305
  %643 = vmatprep.subr.bf16.mxu0 0
  %644 = vmatpush2.bf16.msra.mxu0 0
  %645 = vmatprep.subr.bf16.mxu0 0
  %646 = vmatpush2.bf16.msra.mxu0 0
  %647 = vmatprep.subr.bf16.mxu0 0
  %648 = vmatpush2.bf16.msra.mxu0 0
  %649 = vmatprep.subr.bf16.mxu0 0
  %650 = vmatpush2.bf16.msra.mxu0 0
  %651 = vmatprep.subr.bf16.mxu0 0
  %652 = vmatpush2.bf16.msra.mxu0 0
  %653 = vmatprep.subr.bf16.mxu0 0
  %654 = vmatpush2.bf16.msra.mxu0 0
  %655 = vmatprep.subr.bf16.mxu0 0
  %656 = vmatpush2.bf16.msra.mxu0 0
  %657 = vmatprep.subr.bf16.mxu0 0
  %658 = vmatpush2.bf16.msra.mxu0 0
  %659 = vmatprep.mubr.bf16.mxu0 0
  %660 = vmatmul.mubr.bf16.gmra.mxu0 %v511
  %v661 = vpop.f32.mrf.mxu0
  %v662 = vadd.f32 0.0, %v661
  %v663 = vpop.f32.mrf.mxu0
  %v664 = vadd.f32 0.0, %v663
  %v665 = vpop.f32.mrf.mxu0
  %v666 = vadd.f32 0.0, %v665
  %v667 = vpop.f32.mrf.mxu0
  %v668 = vadd.f32 0.0, %v667
  %669 = vdwg.mxu0
  %670 = vmatprep.subr.bf16.mxu0 %v336
  %671 = vmatpush1.bf16.msra.mxu0 %v335
  %672 = vmatprep.subr.bf16.mxu0 %v332
  %673 = vmatpush1.bf16.msra.mxu0 %v331
  %674 = vmatprep.subr.bf16.mxu0 %v328
  %675 = vmatpush1.bf16.msra.mxu0 %v327
  %676 = vmatprep.subr.bf16.mxu0 %v324
  %677 = vmatpush1.bf16.msra.mxu0 %v323
  %678 = vmatprep.subr.bf16.mxu0 %v320
  %679 = vmatpush1.bf16.msra.mxu0 %v319
  %680 = vmatprep.subr.bf16.mxu0 %v316
  %681 = vmatpush1.bf16.msra.mxu0 %v315
  %682 = vmatprep.subr.bf16.mxu0 %v312
  %683 = vmatpush1.bf16.msra.mxu0 %v311
  %684 = vmatprep.subr.bf16.mxu0 %v308
  %685 = vmatpush1.bf16.msra.mxu0 %v307
  %686 = vmatprep.subr.bf16.mxu0 0
  %687 = vmatpush2.bf16.msra.mxu0 0
  %688 = vmatprep.subr.bf16.mxu0 0
  %689 = vmatpush2.bf16.msra.mxu0 0
  %690 = vmatprep.subr.bf16.mxu0 0
  %691 = vmatpush2.bf16.msra.mxu0 0
  %692 = vmatprep.subr.bf16.mxu0 0
  %693 = vmatpush2.bf16.msra.mxu0 0
  %694 = vmatprep.subr.bf16.mxu0 0
  %695 = vmatpush2.bf16.msra.mxu0 0
  %696 = vmatprep.subr.bf16.mxu0 0
  %697 = vmatpush2.bf16.msra.mxu0 0
  %698 = vmatprep.subr.bf16.mxu0 0
  %699 = vmatpush2.bf16.msra.mxu0 0
  %700 = vmatprep.subr.bf16.mxu0 0
  %701 = vmatpush2.bf16.msra.mxu0 0
  %702 = vmatprep.mubr.bf16.mxu0 0
  %703 = vmatmul.mubr.bf16.gmra.mxu0 %v511
  %v704 = vpop.f32.mrf.mxu0
  %v705 = vadd.f32 0.0, %v704
  %v706 = vpop.f32.mrf.mxu0
  %v707 = vadd.f32 0.0, %v706
  %v708 = vpop.f32.mrf.mxu0
  %v709 = vadd.f32 0.0, %v708
  %v710 = vpop.f32.mrf.mxu0
  %v711 = vadd.f32 0.0, %v710
  %712 = vdwg.mxu0
  %v713 = vadd.f32 %v576, %v662
  %v714 = vadd.f32 %v578, %v664
  %v715 = vadd.f32 %v619, %v705
  %v716 = vadd.f32 %v621, %v707
  %v717 = vadd.f32 %v580, %v666
  %v718 = vadd.f32 %v582, %v668
  %v719 = vadd.f32 %v623, %v709
  %v720 = vadd.f32 %v625, %v711
  %v721 = vxor.u32 %v713, 2147483648
  %v722 = vxor.u32 %v717, 2147483648
  %v723 = vmul.f32 %v721, 1.442695
  %v724 = vpow.pop %v723
  %v725 = vmul.f32 %v722, 1.442695
  %v726 = vpow.pop %v725
  %v727 = vadd.f32 %v724, 1.0
  %v728 = vadd.f32 %v726, 1.0
  %v729 = vrcp.pop %v727
  %v730 = vmul.f32 1.0, %v729
  %v731 = vrcp.pop %v728
  %v732 = vmul.f32 1.0, %v731
  %v733 = vxor.u32 %v714, 2147483648
  %v734 = vxor.u32 %v718, 2147483648
  %v735 = vmul.f32 %v733, 1.442695
  %v736 = vpow.pop %v735
  %v737 = vmul.f32 %v734, 1.442695
  %v738 = vpow.pop %v737
  %v739 = vadd.f32 %v736, 1.0
  %v740 = vadd.f32 %v738, 1.0
  %v741 = vrcp.pop %v739
  %v742 = vmul.f32 1.0, %v741
  %v743 = vrcp.pop %v740
  %v744 = vmul.f32 1.0, %v743
  %v745 = vtanh.pop %v715
  %v746 = vtanh.pop %v719
  %v747 = vxor.u32 %v716, 2147483648
  %v748 = vxor.u32 %v720, 2147483648
  %v749 = vmul.f32 %v747, 1.442695
  %v750 = vpow.pop %v749
  %v751 = vmul.f32 %v748, 1.442695
  %v752 = vpow.pop %v751
  %v753 = vadd.f32 %v750, 1.0
  %v754 = vadd.f32 %v752, 1.0
  %v755 = vrcp.pop %v753
  %v756 = vmul.f32 1.0, %v755
  %v757 = vrcp.pop %v754
  %v758 = vmul.f32 1.0, %v757
  %v759 = vmul.f32 %v742, %v505
  %v760 = vmul.f32 %v744, %v506
  %v761 = vmul.f32 %v730, %v745
  %v762 = vmul.f32 %v732, %v746
  %v763 = vadd.f32 %v759, %v761
  %v764 = vadd.f32 %v760, %v762
  %v765 = vtanh.pop %v763
  %v766 = vtanh.pop %v764
  %v767 = vmul.f32 %v756, %v765
  %v768 = vmul.f32 %v758, %v766
  %v769 = vpack.c.bf16 %v768, %v767
  %v771 = vunpack.c.l.b16 %v769
  %v772 = vunpack.c.h.b16 %v769
  %v773 = vpack.c.b16 %v771, %v771
  %v774 = vpack.c.b16 %v772, %v772
  %s777 = scalar_lea.vmem %s4, 8
  %778 = vst [vmem:[%s777] sm:$0xf] %v773
  %779 = vst [vmem:[%s777 + $0x4] sm:$0xf] %v774
  %s780 = sadd.s32 %s521, 1
  %p781 = scmp.eq.s32.totalorder %s780, 7
  // Predicated region
  $region26: #{rnn_block_lstm.1} parent=0 // pred_check
    %p782 = pneg %p781
  $region27: #{rnn_block_lstm.1} parent=0 // pred_check_branch
    %784 = sbr.rel (%p782) target = $region29
  $region28: #{rnn_block_lstm.1} parent=0 // pred_region
    %785 = vst [vmem:[%s5] sm:$0xff] %v767
    %786 = vst [vmem:[%s5 + $0x8] sm:$0xff] %v768
    %787 = vst [vmem:[%s6] sm:$0xff] %v763
    %788 = vst [vmem:[%s6 + $0x8] sm:$0xff] %v764
  $region29: #{rnn_block_lstm.1} parent=0 // pred_fallthru
    _
  %s789 = scalar_lea.vmem %s0, 16
  %v790 = vld [vmem:[%s789] sm:$0xf]
  %v791 = vld [vmem:[%s789 + $0x4] sm:$0xf]
  %v794 = vunpack.c.l.b16 %v790
  %v795 = vunpack.c.l.b16 %v791
  %v796 = vpack.c.b16 %v795, %v794
  %v798 = vsel %vm118, %v796, 0
  %800 = vmatprep.subr.bf16.mxu0 0
  %801 = vmatpush1.bf16.msra.mxu0 0
  %802 = vmatprep.subr.bf16.mxu0 0
  %803 = vmatpush1.bf16.msra.mxu0 0
  %804 = vmatprep.subr.bf16.mxu0 0
  %805 = vmatpush1.bf16.msra.mxu0 0
  %806 = vmatprep.subr.bf16.mxu0 0
  %807 = vmatpush1.bf16.msra.mxu0 0
  %808 = vmatprep.subr.bf16.mxu0 0
  %809 = vmatpush1.bf16.msra.mxu0 0
  %810 = vmatprep.subr.bf16.mxu0 0
  %811 = vmatpush1.bf16.msra.mxu0 0
  %812 = vmatprep.subr.bf16.mxu0 0
  %813 = vmatpush1.bf16.msra.mxu0 0
  %814 = vmatprep.subr.bf16.mxu0 %v111
  %815 = vmatpush1.bf16.msra.mxu0 %v110
  %816 = vmatprep.subr.bf16.mxu0 0
  %817 = vmatpush2.bf16.msra.mxu0 0
  %818 = vmatprep.subr.bf16.mxu0 0
  %819 = vmatpush2.bf16.msra.mxu0 0
  %820 = vmatprep.subr.bf16.mxu0 0
  %821 = vmatpush2.bf16.msra.mxu0 0
  %822 = vmatprep.subr.bf16.mxu0 0
  %823 = vmatpush2.bf16.msra.mxu0 0
  %824 = vmatprep.subr.bf16.mxu0 0
  %825 = vmatpush2.bf16.msra.mxu0 0
  %826 = vmatprep.subr.bf16.mxu0 0
  %827 = vmatpush2.bf16.msra.mxu0 0
  %828 = vmatprep.subr.bf16.mxu0 0
  %829 = vmatpush2.bf16.msra.mxu0 0
  %830 = vmatprep.subr.bf16.mxu0 0
  %831 = vmatpush2.bf16.msra.mxu0 0
  %832 = vmatprep.mubr.bf16.mxu0 0
  %833 = vmatmul.mubr.bf16.gmra.mxu0 %v798
  %v834 = vpop.f32.mrf.mxu0
  %v835 = vadd.f32 %v76, %v834
  %v836 = vpop.f32.mrf.mxu0
  %v837 = vadd.f32 %v80, %v836
  %v838 = vpop.f32.mrf.mxu0
  %v839 = vadd.f32 %v76, %v838
  %v840 = vpop.f32.mrf.mxu0
  %v841 = vadd.f32 %v80, %v840
  %842 = vdwg.mxu0
  %843 = vmatprep.subr.bf16.mxu0 0
  %844 = vmatpush1.bf16.msra.mxu0 0
  %845 = vmatprep.subr.bf16.mxu0 0
  %846 = vmatpush1.bf16.msra.mxu0 0
  %847 = vmatprep.subr.bf16.mxu0 0
  %848 = vmatpush1.bf16.msra.mxu0 0
  %849 = vmatprep.subr.bf16.mxu0 0
  %850 = vmatpush1.bf16.msra.mxu0 0
  %851 = vmatprep.subr.bf16.mxu0 0
  %852 = vmatpush1.bf16.msra.mxu0 0
  %853 = vmatprep.subr.bf16.mxu0 0
  %854 = vmatpush1.bf16.msra.mxu0 0
  %855 = vmatprep.subr.bf16.mxu0 0
  %856 = vmatpush1.bf16.msra.mxu0 0
  %857 = vmatprep.subr.bf16.mxu0 %v113
  %858 = vmatpush1.bf16.msra.mxu0 %v112
  %859 = vmatprep.subr.bf16.mxu0 0
  %860 = vmatpush2.bf16.msra.mxu0 0
  %861 = vmatprep.subr.bf16.mxu0 0
  %862 = vmatpush2.bf16.msra.mxu0 0
  %863 = vmatprep.subr.bf16.mxu0 0
  %864 = vmatpush2.bf16.msra.mxu0 0
  %865 = vmatprep.subr.bf16.mxu0 0
  %866 = vmatpush2.bf16.msra.mxu0 0
  %867 = vmatprep.subr.bf16.mxu0 0
  %868 = vmatpush2.bf16.msra.mxu0 0
  %869 = vmatprep.subr.bf16.mxu0 0
  %870 = vmatpush2.bf16.msra.mxu0 0
  %871 = vmatprep.subr.bf16.mxu0 0
  %872 = vmatpush2.bf16.msra.mxu0 0
  %873 = vmatprep.subr.bf16.mxu0 0
  %874 = vmatpush2.bf16.msra.mxu0 0
  %875 = vmatprep.mubr.bf16.mxu0 0
  %876 = vmatmul.mubr.bf16.gmra.mxu0 %v798
  %v877 = vpop.f32.mrf.mxu0
  %v878 = vadd.f32 %v84, %v877
  %v879 = vpop.f32.mrf.mxu0
  %v880 = vadd.f32 %v88, %v879
  %v881 = vpop.f32.mrf.mxu0
  %v882 = vadd.f32 %v84, %v881
  %v883 = vpop.f32.mrf.mxu0
  %v884 = vadd.f32 %v88, %v883
  %885 = vdwg.mxu0
  %886 = vmatprep.subr.bf16.mxu0 %v334
  %887 = vmatpush1.bf16.msra.mxu0 %v333
  %888 = vmatprep.subr.bf16.mxu0 %v330
  %889 = vmatpush1.bf16.msra.mxu0 %v329
  %890 = vmatprep.subr.bf16.mxu0 %v326
  %891 = vmatpush1.bf16.msra.mxu0 %v325
  %892 = vmatprep.subr.bf16.mxu0 %v322
  %893 = vmatpush1.bf16.msra.mxu0 %v321
  %894 = vmatprep.subr.bf16.mxu0 %v318
  %895 = vmatpush1.bf16.msra.mxu0 %v317
  %896 = vmatprep.subr.bf16.mxu0 %v314
  %897 = vmatpush1.bf16.msra.mxu0 %v313
  %898 = vmatprep.subr.bf16.mxu0 %v310
  %899 = vmatpush1.bf16.msra.mxu0 %v309
  %900 = vmatprep.subr.bf16.mxu0 %v306
  %901 = vmatpush1.bf16.msra.mxu0 %v305
  %902 = vmatprep.subr.bf16.mxu0 0
  %903 = vmatpush2.bf16.msra.mxu0 0
  %904 = vmatprep.subr.bf16.mxu0 0
  %905 = vmatpush2.bf16.msra.mxu0 0
  %906 = vmatprep.subr.bf16.mxu0 0
  %907 = vmatpush2.bf16.msra.mxu0 0
  %908 = vmatprep.subr.bf16.mxu0 0
  %909 = vmatpush2.bf16.msra.mxu0 0
  %910 = vmatprep.subr.bf16.mxu0 0
  %911 = vmatpush2.bf16.msra.mxu0 0
  %912 = vmatprep.subr.bf16.mxu0 0
  %913 = vmatpush2.bf16.msra.mxu0 0
  %914 = vmatprep.subr.bf16.mxu0 0
  %915 = vmatpush2.bf16.msra.mxu0 0
  %916 = vmatprep.subr.bf16.mxu0 0
  %917 = vmatpush2.bf16.msra.mxu0 0
  %918 = vmatprep.mubr.bf16.mxu0 0
  %919 = vmatmul.mubr.bf16.gmra.mxu0 %v769
  %v920 = vpop.f32.mrf.mxu0
  %v921 = vadd.f32 0.0, %v920
  %v922 = vpop.f32.mrf.mxu0
  %v923 = vadd.f32 0.0, %v922
  %v924 = vpop.f32.mrf.mxu0
  %v925 = vadd.f32 0.0, %v924
  %v926 = vpop.f32.mrf.mxu0
  %v927 = vadd.f32 0.0, %v926
  %928 = vdwg.mxu0
  %929 = vmatprep.subr.bf16.mxu0 %v336
  %930 = vmatpush1.bf16.msra.mxu0 %v335
  %931 = vmatprep.subr.bf16.mxu0 %v332
  %932 = vmatpush1.bf16.msra.mxu0 %v331
  %933 = vmatprep.subr.bf16.mxu0 %v328
  %934 = vmatpush1.bf16.msra.mxu0 %v327
  %935 = vmatprep.subr.bf16.mxu0 %v324
  %936 = vmatpush1.bf16.msra.mxu0 %v323
  %937 = vmatprep.subr.bf16.mxu0 %v320
  %938 = vmatpush1.bf16.msra.mxu0 %v319
  %939 = vmatprep.subr.bf16.mxu0 %v316
  %940 = vmatpush1.bf16.msra.mxu0 %v315
  %941 = vmatprep.subr.bf16.mxu0 %v312
  %942 = vmatpush1.bf16.msra.mxu0 %v311
  %943 = vmatprep.subr.bf16.mxu0 %v308
  %944 = vmatpush1.bf16.msra.mxu0 %v307
  %945 = vmatprep.subr.bf16.mxu0 0
  %946 = vmatpush2.bf16.msra.mxu0 0
  %947 = vmatprep.subr.bf16.mxu0 0
  %948 = vmatpush2.bf16.msra.mxu0 0
  %949 = vmatprep.subr.bf16.mxu0 0
  %950 = vmatpush2.bf16.msra.mxu0 0
  %951 = vmatprep.subr.bf16.mxu0 0
  %952 = vmatpush2.bf16.msra.mxu0 0
  %953 = vmatprep.subr.bf16.mxu0 0
  %954 = vmatpush2.bf16.msra.mxu0 0
  %955 = vmatprep.subr.bf16.mxu0 0
  %956 = vmatpush2.bf16.msra.mxu0 0
  %957 = vmatprep.subr.bf16.mxu0 0
  %958 = vmatpush2.bf16.msra.mxu0 0
  %959 = vmatprep.subr.bf16.mxu0 0
  %960 = vmatpush2.bf16.msra.mxu0 0
  %961 = vmatprep.mubr.bf16.mxu0 0
  %962 = vmatmul.mubr.bf16.gmra.mxu0 %v769
  %v963 = vpop.f32.mrf.mxu0
  %v964 = vadd.f32 0.0, %v963
  %v965 = vpop.f32.mrf.mxu0
  %v966 = vadd.f32 0.0, %v965
  %v967 = vpop.f32.mrf.mxu0
  %v968 = vadd.f32 0.0, %v967
  %v969 = vpop.f32.mrf.mxu0
  %v970 = vadd.f32 0.0, %v969
  %971 = vdwg.mxu0
  %v972 = vadd.f32 %v835, %v921
  %v973 = vadd.f32 %v837, %v923
  %v974 = vadd.f32 %v878, %v964
  %v975 = vadd.f32 %v880, %v966
  %v976 = vadd.f32 %v839, %v925
  %v977 = vadd.f32 %v841, %v927
  %v978 = vadd.f32 %v882, %v968
  %v979 = vadd.f32 %v884, %v970
  %v980 = vxor.u32 %v972, 2147483648
  %v981 = vxor.u32 %v976, 2147483648
  %v982 = vmul.f32 %v980, 1.442695
  %v983 = vpow.pop %v982
  %v984 = vmul.f32 %v981, 1.442695
  %v985 = vpow.pop %v984
  %v986 = vadd.f32 %v983, 1.0
  %v987 = vadd.f32 %v985, 1.0
  %v988 = vrcp.pop %v986
  %v989 = vmul.f32 1.0, %v988
  %v990 = vrcp.pop %v987
  %v991 = vmul.f32 1.0, %v990
  %v992 = vxor.u32 %v973, 2147483648
  %v993 = vxor.u32 %v977, 2147483648
  %v994 = vmul.f32 %v992, 1.442695
  %v995 = vpow.pop %v994
  %v996 = vmul.f32 %v993, 1.442695
  %v997 = vpow.pop %v996
  %v998 = vadd.f32 %v995, 1.0
  %v999 = vadd.f32 %v997, 1.0
  %v1000 = vrcp.pop %v998
  %v1001 = vmul.f32 1.0, %v1000
  %v1002 = vrcp.pop %v999
  %v1003 = vmul.f32 1.0, %v1002
  %v1004 = vtanh.pop %v974
  %v1005 = vtanh.pop %v978
  %v1006 = vxor.u32 %v975, 2147483648
  %v1007 = vxor.u32 %v979, 2147483648
  %v1008 = vmul.f32 %v1006, 1.442695
  %v1009 = vpow.pop %v1008
  %v1010 = vmul.f32 %v1007, 1.442695
  %v1011 = vpow.pop %v1010
  %v1012 = vadd.f32 %v1009, 1.0
  %v1013 = vadd.f32 %v1011, 1.0
  %v1014 = vrcp.pop %v1012
  %v1015 = vmul.f32 1.0, %v1014
  %v1016 = vrcp.pop %v1013
  %v1017 = vmul.f32 1.0, %v1016
  %v1018 = vmul.f32 %v1001, %v763
  %v1019 = vmul.f32 %v1003, %v764
  %v1020 = vmul.f32 %v989, %v1004
  %v1021 = vmul.f32 %v991, %v1005
  %v1022 = vadd.f32 %v1018, %v1020
  %v1023 = vadd.f32 %v1019, %v1021
  %v1024 = vtanh.pop %v1022
  %v1025 = vtanh.pop %v1023
  %v1026 = vmul.f32 %v1015, %v1024
  %v1027 = vmul.f32 %v1017, %v1025
  %v1028 = vpack.c.bf16 %v1027, %v1026
  %v1030 = vunpack.c.l.b16 %v1028
  %v1031 = vunpack.c.h.b16 %v1028
  %v1032 = vpack.c.b16 %v1030, %v1030
  %v1033 = vpack.c.b16 %v1031, %v1031
  %s1036 = scalar_lea.vmem %s4, 16
  %1037 = vst [vmem:[%s1036] sm:$0xf] %v1032
  %1038 = vst [vmem:[%s1036 + $0x4] sm:$0xf] %v1033
  %s1039 = sadd.s32 %s521, 2
  %p1040 = scmp.eq.s32.totalorder %s1039, 7
  // Predicated region
  $region30: #{rnn_block_lstm.1} parent=0 // pred_check
    %p1041 = pneg %p1040
  $region31: #{rnn_block_lstm.1} parent=0 // pred_check_branch
    %1043 = sbr.rel (%p1041) target = $region33
  $region32: #{rnn_block_lstm.1} parent=0 // pred_region
    %1044 = vst [vmem:[%s5] sm:$0xff] %v1026
    %1045 = vst [vmem:[%s5 + $0x8] sm:$0xff] %v1027
    %1046 = vst [vmem:[%s6] sm:$0xff] %v1022
    %1047 = vst [vmem:[%s6 + $0x8] sm:$0xff] %v1023
  $region33: #{rnn_block_lstm.1} parent=0 // pred_fallthru
    _
  %s1048 = scalar_lea.vmem %s0, 24
  %v1049 = vld [vmem:[%s1048] sm:$0xf]
  %v1050 = vld [vmem:[%s1048 + $0x4] sm:$0xf]
  %v1053 = vunpack.c.l.b16 %v1049
  %v1054 = vunpack.c.l.b16 %v1050
  %v1055 = vpack.c.b16 %v1054, %v1053
  %v1057 = vsel %vm118, %v1055, 0
  %1059 = vmatprep.subr.bf16.mxu0 0
  %1060 = vmatpush1.bf16.msra.mxu0 0
  %1061 = vmatprep.subr.bf16.mxu0 0
  %1062 = vmatpush1.bf16.msra.mxu0 0
  %1063 = vmatprep.subr.bf16.mxu0 0
  %1064 = vmatpush1.bf16.msra.mxu0 0
  %1065 = vmatprep.subr.bf16.mxu0 0
  %1066 = vmatpush1.bf16.msra.mxu0 0
  %1067 = vmatprep.subr.bf16.mxu0 0
  %1068 = vmatpush1.bf16.msra.mxu0 0
  %1069 = vmatprep.subr.bf16.mxu0 0
  %1070 = vmatpush1.bf16.msra.mxu0 0
  %1071 = vmatprep.subr.bf16.mxu0 0
  %1072 = vmatpush1.bf16.msra.mxu0 0
  %1073 = vmatprep.subr.bf16.mxu0 %v111
  %1074 = vmatpush1.bf16.msra.mxu0 %v110
  %1075 = vmatprep.subr.bf16.mxu0 0
  %1076 = vmatpush2.bf16.msra.mxu0 0
  %1077 = vmatprep.subr.bf16.mxu0 0
  %1078 = vmatpush2.bf16.msra.mxu0 0
  %1079 = vmatprep.subr.bf16.mxu0 0
  %1080 = vmatpush2.bf16.msra.mxu0 0
  %1081 = vmatprep.subr.bf16.mxu0 0
  %1082 = vmatpush2.bf16.msra.mxu0 0
  %1083 = vmatprep.subr.bf16.mxu0 0
  %1084 = vmatpush2.bf16.msra.mxu0 0
  %1085 = vmatprep.subr.bf16.mxu0 0
  %1086 = vmatpush2.bf16.msra.mxu0 0
  %1087 = vmatprep.subr.bf16.mxu0 0
  %1088 = vmatpush2.bf16.msra.mxu0 0
  %1089 = vmatprep.subr.bf16.mxu0 0
  %1090 = vmatpush2.bf16.msra.mxu0 0
  %1091 = vmatprep.mubr.bf16.mxu0 0
  %1092 = vmatmul.mubr.bf16.gmra.mxu0 %v1057
  %v1093 = vpop.f32.mrf.mxu0
  %v1094 = vadd.f32 %v76, %v1093
  %v1095 = vpop.f32.mrf.mxu0
  %v1096 = vadd.f32 %v80, %v1095
  %v1097 = vpop.f32.mrf.mxu0
  %v1098 = vadd.f32 %v76, %v1097
  %v1099 = vpop.f32.mrf.mxu0
  %v1100 = vadd.f32 %v80, %v1099
  %1101 = vdwg.mxu0
  %1102 = vmatprep.subr.bf16.mxu0 0
  %1103 = vmatpush1.bf16.msra.mxu0 0
  %1104 = vmatprep.subr.bf16.mxu0 0
  %1105 = vmatpush1.bf16.msra.mxu0 0
  %1106 = vmatprep.subr.bf16.mxu0 0
  %1107 = vmatpush1.bf16.msra.mxu0 0
  %1108 = vmatprep.subr.bf16.mxu0 0
  %1109 = vmatpush1.bf16.msra.mxu0 0
  %1110 = vmatprep.subr.bf16.mxu0 0
  %1111 = vmatpush1.bf16.msra.mxu0 0
  %1112 = vmatprep.subr.bf16.mxu0 0
  %1113 = vmatpush1.bf16.msra.mxu0 0
  %1114 = vmatprep.subr.bf16.mxu0 0
  %1115 = vmatpush1.bf16.msra.mxu0 0
  %1116 = vmatprep.subr.bf16.mxu0 %v113
  %1117 = vmatpush1.bf16.msra.mxu0 %v112
  %1118 = vmatprep.subr.bf16.mxu0 0
  %1119 = vmatpush2.bf16.msra.mxu0 0
  %1120 = vmatprep.subr.bf16.mxu0 0
  %1121 = vmatpush2.bf16.msra.mxu0 0
  %1122 = vmatprep.subr.bf16.mxu0 0
  %1123 = vmatpush2.bf16.msra.mxu0 0
  %1124 = vmatprep.subr.bf16.mxu0 0
  %1125 = vmatpush2.bf16.msra.mxu0 0
  %1126 = vmatprep.subr.bf16.mxu0 0
  %1127 = vmatpush2.bf16.msra.mxu0 0
  %1128 = vmatprep.subr.bf16.mxu0 0
  %1129 = vmatpush2.bf16.msra.mxu0 0
  %1130 = vmatprep.subr.bf16.mxu0 0
  %1131 = vmatpush2.bf16.msra.mxu0 0
  %1132 = vmatprep.subr.bf16.mxu0 0
  %1133 = vmatpush2.bf16.msra.mxu0 0
  %1134 = vmatprep.mubr.bf16.mxu0 0
  %1135 = vmatmul.mubr.bf16.gmra.mxu0 %v1057
  %v1136 = vpop.f32.mrf.mxu0
  %v1137 = vadd.f32 %v84, %v1136
  %v1138 = vpop.f32.mrf.mxu0
  %v1139 = vadd.f32 %v88, %v1138
  %v1140 = vpop.f32.mrf.mxu0
  %v1141 = vadd.f32 %v84, %v1140
  %v1142 = vpop.f32.mrf.mxu0
  %v1143 = vadd.f32 %v88, %v1142
  %1144 = vdwg.mxu0
  %1145 = vmatprep.subr.bf16.mxu0 %v334
  %1146 = vmatpush1.bf16.msra.mxu0 %v333
  %1147 = vmatprep.subr.bf16.mxu0 %v330
  %1148 = vmatpush1.bf16.msra.mxu0 %v329
  %1149 = vmatprep.subr.bf16.mxu0 %v326
  %1150 = vmatpush1.bf16.msra.mxu0 %v325
  %1151 = vmatprep.subr.bf16.mxu0 %v322
  %1152 = vmatpush1.bf16.msra.mxu0 %v321
  %1153 = vmatprep.subr.bf16.mxu0 %v318
  %1154 = vmatpush1.bf16.msra.mxu0 %v317
  %1155 = vmatprep.subr.bf16.mxu0 %v314
  %1156 = vmatpush1.bf16.msra.mxu0 %v313
  %1157 = vmatprep.subr.bf16.mxu0 %v310
  %1158 = vmatpush1.bf16.msra.mxu0 %v309
  %1159 = vmatprep.subr.bf16.mxu0 %v306
  %1160 = vmatpush1.bf16.msra.mxu0 %v305
  %1161 = vmatprep.subr.bf16.mxu0 0
  %1162 = vmatpush2.bf16.msra.mxu0 0
  %1163 = vmatprep.subr.bf16.mxu0 0
  %1164 = vmatpush2.bf16.msra.mxu0 0
  %1165 = vmatprep.subr.bf16.mxu0 0
  %1166 = vmatpush2.bf16.msra.mxu0 0
  %1167 = vmatprep.subr.bf16.mxu0 0
  %1168 = vmatpush2.bf16.msra.mxu0 0
  %1169 = vmatprep.subr.bf16.mxu0 0
  %1170 = vmatpush2.bf16.msra.mxu0 0
  %1171 = vmatprep.subr.bf16.mxu0 0
  %1172 = vmatpush2.bf16.msra.mxu0 0
  %1173 = vmatprep.subr.bf16.mxu0 0
  %1174 = vmatpush2.bf16.msra.mxu0 0
  %1175 = vmatprep.subr.bf16.mxu0 0
  %1176 = vmatpush2.bf16.msra.mxu0 0
  %1177 = vmatprep.mubr.bf16.mxu0 0
  %1178 = vmatmul.mubr.bf16.gmra.mxu0 %v1028
  %v1179 = vpop.f32.mrf.mxu0
  %v1180 = vadd.f32 0.0, %v1179
  %v1181 = vpop.f32.mrf.mxu0
  %v1182 = vadd.f32 0.0, %v1181
  %v1183 = vpop.f32.mrf.mxu0
  %v1184 = vadd.f32 0.0, %v1183
  %v1185 = vpop.f32.mrf.mxu0
  %v1186 = vadd.f32 0.0, %v1185
  %1187 = vdwg.mxu0
  %1188 = vmatprep.subr.bf16.mxu0 %v336
  %1189 = vmatpush1.bf16.msra.mxu0 %v335
  %1190 = vmatprep.subr.bf16.mxu0 %v332
  %1191 = vmatpush1.bf16.msra.mxu0 %v331
  %1192 = vmatprep.subr.bf16.mxu0 %v328
  %1193 = vmatpush1.bf16.msra.mxu0 %v327
  %1194 = vmatprep.subr.bf16.mxu0 %v324
  %1195 = vmatpush1.bf16.msra.mxu0 %v323
  %1196 = vmatprep.subr.bf16.mxu0 %v320
  %1197 = vmatpush1.bf16.msra.mxu0 %v319
  %1198 = vmatprep.subr.bf16.mxu0 %v316
  %1199 = vmatpush1.bf16.msra.mxu0 %v315
  %1200 = vmatprep.subr.bf16.mxu0 %v312
  %1201 = vmatpush1.bf16.msra.mxu0 %v311
  %1202 = vmatprep.subr.bf16.mxu0 %v308
  %1203 = vmatpush1.bf16.msra.mxu0 %v307
  %1204 = vmatprep.subr.bf16.mxu0 0
  %1205 = vmatpush2.bf16.msra.mxu0 0
  %1206 = vmatprep.subr.bf16.mxu0 0
  %1207 = vmatpush2.bf16.msra.mxu0 0
  %1208 = vmatprep.subr.bf16.mxu0 0
  %1209 = vmatpush2.bf16.msra.mxu0 0
  %1210 = vmatprep.subr.bf16.mxu0 0
  %1211 = vmatpush2.bf16.msra.mxu0 0
  %1212 = vmatprep.subr.bf16.mxu0 0
  %1213 = vmatpush2.bf16.msra.mxu0 0
  %1214 = vmatprep.subr.bf16.mxu0 0
  %1215 = vmatpush2.bf16.msra.mxu0 0
  %1216 = vmatprep.subr.bf16.mxu0 0
  %1217 = vmatpush2.bf16.msra.mxu0 0
  %1218 = vmatprep.subr.bf16.mxu0 0
  %1219 = vmatpush2.bf16.msra.mxu0 0
  %1220 = vmatprep.mubr.bf16.mxu0 0
  %1221 = vmatmul.mubr.bf16.gmra.mxu0 %v1028
  %v1222 = vpop.f32.mrf.mxu0
  %v1223 = vadd.f32 0.0, %v1222
  %v1224 = vpop.f32.mrf.mxu0
  %v1225 = vadd.f32 0.0, %v1224
  %v1226 = vpop.f32.mrf.mxu0
  %v1227 = vadd.f32 0.0, %v1226
  %v1228 = vpop.f32.mrf.mxu0
  %v1229 = vadd.f32 0.0, %v1228
  %1230 = vdwg.mxu0
  %v1231 = vadd.f32 %v1094, %v1180
  %v1232 = vadd.f32 %v1096, %v1182
  %v1233 = vadd.f32 %v1137, %v1223
  %v1234 = vadd.f32 %v1139, %v1225
  %v1235 = vadd.f32 %v1098, %v1184
  %v1236 = vadd.f32 %v1100, %v1186
  %v1237 = vadd.f32 %v1141, %v1227
  %v1238 = vadd.f32 %v1143, %v1229
  %v1239 = vxor.u32 %v1231, 2147483648
  %v1240 = vxor.u32 %v1235, 2147483648
  %v1241 = vmul.f32 %v1239, 1.442695
  %v1242 = vpow.pop %v1241
  %v1243 = vmul.f32 %v1240, 1.442695
  %v1244 = vpow.pop %v1243
  %v1245 = vadd.f32 %v1242, 1.0
  %v1246 = vadd.f32 %v1244, 1.0
  %v1247 = vrcp.pop %v1245
  %v1248 = vmul.f32 1.0, %v1247
  %v1249 = vrcp.pop %v1246
  %v1250 = vmul.f32 1.0, %v1249
  %v1251 = vxor.u32 %v1232, 2147483648
  %v1252 = vxor.u32 %v1236, 2147483648
  %v1253 = vmul.f32 %v1251, 1.442695
  %v1254 = vpow.pop %v1253
  %v1255 = vmul.f32 %v1252, 1.442695
  %v1256 = vpow.pop %v1255
  %v1257 = vadd.f32 %v1254, 1.0
  %v1258 = vadd.f32 %v1256, 1.0
  %v1259 = vrcp.pop %v1257
  %v1260 = vmul.f32 1.0, %v1259
  %v1261 = vrcp.pop %v1258
  %v1262 = vmul.f32 1.0, %v1261
  %v1263 = vtanh.pop %v1233
  %v1264 = vtanh.pop %v1237
  %v1265 = vxor.u32 %v1234, 2147483648
  %v1266 = vxor.u32 %v1238, 2147483648
  %v1267 = vmul.f32 %v1265, 1.442695
  %v1268 = vpow.pop %v1267
  %v1269 = vmul.f32 %v1266, 1.442695
  %v1270 = vpow.pop %v1269
  %v1271 = vadd.f32 %v1268, 1.0
  %v1272 = vadd.f32 %v1270, 1.0
  %v1273 = vrcp.pop %v1271
  %v1274 = vmul.f32 1.0, %v1273
  %v1275 = vrcp.pop %v1272
  %v1276 = vmul.f32 1.0, %v1275
  %v1277 = vmul.f32 %v1260, %v1022
  %v1278 = vmul.f32 %v1262, %v1023
  %v1279 = vmul.f32 %v1248, %v1263
  %v1280 = vmul.f32 %v1250, %v1264
  %v1281 = vadd.f32 %v1277, %v1279
  %v1282 = vadd.f32 %v1278, %v1280
  %v1283 = vtanh.pop %v1281
  %v1284 = vtanh.pop %v1282
  %v1285 = vmul.f32 %v1274, %v1283
  %v1286 = vmul.f32 %v1276, %v1284
  %v1287 = vpack.c.bf16 %v1286, %v1285
  %v1289 = vunpack.c.l.b16 %v1287
  %v1290 = vunpack.c.h.b16 %v1287
  %v1291 = vpack.c.b16 %v1289, %v1289
  %v1292 = vpack.c.b16 %v1290, %v1290
  %s1295 = scalar_lea.vmem %s4, 24
  %1296 = vst [vmem:[%s1295] sm:$0xf] %v1291
  %1297 = vst [vmem:[%s1295 + $0x4] sm:$0xf] %v1292
  %s1298 = sadd.s32 %s521, 3
  %p1299 = scmp.eq.s32.totalorder %s1298, 7
  // Predicated region
  $region34: #{rnn_block_lstm.1} parent=0 // pred_check
    %p1300 = pneg %p1299
  $region35: #{rnn_block_lstm.1} parent=0 // pred_check_branch
    %1302 = sbr.rel (%p1300) target = $region37
  $region36: #{rnn_block_lstm.1} parent=0 // pred_region
    %1303 = vst [vmem:[%s5] sm:$0xff] %v1285
    %1304 = vst [vmem:[%s5 + $0x8] sm:$0xff] %v1286
    %1305 = vst [vmem:[%s6] sm:$0xff] %v1281
    %1306 = vst [vmem:[%s6 + $0x8] sm:$0xff] %v1282
  $region37: #{rnn_block_lstm.1} parent=0 // pred_fallthru
    _
  %s1307 = scalar_lea.vmem %s0, 32
  %v1308 = vld [vmem:[%s1307] sm:$0xf]
  %v1309 = vld [vmem:[%s1307 + $0x4] sm:$0xf]
  %v1312 = vunpack.c.l.b16 %v1308
  %v1313 = vunpack.c.l.b16 %v1309
  %v1314 = vpack.c.b16 %v1313, %v1312
  %v1316 = vsel %vm118, %v1314, 0
  %1318 = vmatprep.subr.bf16.mxu0 0
  %1319 = vmatpush1.bf16.msra.mxu0 0
  %1320 = vmatprep.subr.bf16.mxu0 0
  %1321 = vmatpush1.bf16.msra.mxu0 0
  %1322 = vmatprep.subr.bf16.mxu0 0
  %1323 = vmatpush1.bf16.msra.mxu0 0
  %1324 = vmatprep.subr.bf16.mxu0 0
  %1325 = vmatpush1.bf16.msra.mxu0 0
  %1326 = vmatprep.subr.bf16.mxu0 0
  %1327 = vmatpush1.bf16.msra.mxu0 0
  %1328 = vmatprep.subr.bf16.mxu0 0
  %1329 = vmatpush1.bf16.msra.mxu0 0
  %1330 = vmatprep.subr.bf16.mxu0 0
  %1331 = vmatpush1.bf16.msra.mxu0 0
  %1332 = vmatprep.subr.bf16.mxu0 %v111
  %1333 = vmatpush1.bf16.msra.mxu0 %v110
  %1334 = vmatprep.subr.bf16.mxu0 0
  %1335 = vmatpush2.bf16.msra.mxu0 0
  %1336 = vmatprep.subr.bf16.mxu0 0
  %1337 = vmatpush2.bf16.msra.mxu0 0
  %1338 = vmatprep.subr.bf16.mxu0 0
  %1339 = vmatpush2.bf16.msra.mxu0 0
  %1340 = vmatprep.subr.bf16.mxu0 0
  %1341 = vmatpush2.bf16.msra.mxu0 0
  %1342 = vmatprep.subr.bf16.mxu0 0
  %1343 = vmatpush2.bf16.msra.mxu0 0
  %1344 = vmatprep.subr.bf16.mxu0 0
  %1345 = vmatpush2.bf16.msra.mxu0 0
  %1346 = vmatprep.subr.bf16.mxu0 0
  %1347 = vmatpush2.bf16.msra.mxu0 0
  %1348 = vmatprep.subr.bf16.mxu0 0
  %1349 = vmatpush2.bf16.msra.mxu0 0
  %1350 = vmatprep.mubr.bf16.mxu0 0
  %1351 = vmatmul.mubr.bf16.gmra.mxu0 %v1316
  %v1352 = vpop.f32.mrf.mxu0
  %v1353 = vadd.f32 %v76, %v1352
  %v1354 = vpop.f32.mrf.mxu0
  %v1355 = vadd.f32 %v80, %v1354
  %v1356 = vpop.f32.mrf.mxu0
  %v1357 = vadd.f32 %v76, %v1356
  %v1358 = vpop.f32.mrf.mxu0
  %v1359 = vadd.f32 %v80, %v1358
  %1360 = vdwg.mxu0
  %1361 = vmatprep.subr.bf16.mxu0 0
  %1362 = vmatpush1.bf16.msra.mxu0 0
  %1363 = vmatprep.subr.bf16.mxu0 0
  %1364 = vmatpush1.bf16.msra.mxu0 0
  %1365 = vmatprep.subr.bf16.mxu0 0
  %1366 = vmatpush1.bf16.msra.mxu0 0
  %1367 = vmatprep.subr.bf16.mxu0 0
  %1368 = vmatpush1.bf16.msra.mxu0 0
  %1369 = vmatprep.subr.bf16.mxu0 0
  %1370 = vmatpush1.bf16.msra.mxu0 0
  %1371 = vmatprep.subr.bf16.mxu0 0
  %1372 = vmatpush1.bf16.msra.mxu0 0
  %1373 = vmatprep.subr.bf16.mxu0 0
  %1374 = vmatpush1.bf16.msra.mxu0 0
  %1375 = vmatprep.subr.bf16.mxu0 %v113
  %1376 = vmatpush1.bf16.msra.mxu0 %v112
  %1377 = vmatprep.subr.bf16.mxu0 0
  %1378 = vmatpush2.bf16.msra.mxu0 0
  %1379 = vmatprep.subr.bf16.mxu0 0
  %1380 = vmatpush2.bf16.msra.mxu0 0
  %1381 = vmatprep.subr.bf16.mxu0 0
  %1382 = vmatpush2.bf16.msra.mxu0 0
  %1383 = vmatprep.subr.bf16.mxu0 0
  %1384 = vmatpush2.bf16.msra.mxu0 0
  %1385 = vmatprep.subr.bf16.mxu0 0
  %1386 = vmatpush2.bf16.msra.mxu0 0
  %1387 = vmatprep.subr.bf16.mxu0 0
  %1388 = vmatpush2.bf16.msra.mxu0 0
  %1389 = vmatprep.subr.bf16.mxu0 0
  %1390 = vmatpush2.bf16.msra.mxu0 0
  %1391 = vmatprep.subr.bf16.mxu0 0
  %1392 = vmatpush2.bf16.msra.mxu0 0
  %1393 = vmatprep.mubr.bf16.mxu0 0
  %1394 = vmatmul.mubr.bf16.gmra.mxu0 %v1316
  %v1395 = vpop.f32.mrf.mxu0
  %v1396 = vadd.f32 %v84, %v1395
  %v1397 = vpop.f32.mrf.mxu0
  %v1398 = vadd.f32 %v88, %v1397
  %v1399 = vpop.f32.mrf.mxu0
  %v1400 = vadd.f32 %v84, %v1399
  %v1401 = vpop.f32.mrf.mxu0
  %v1402 = vadd.f32 %v88, %v1401
  %1403 = vdwg.mxu0
  %1404 = vmatprep.subr.bf16.mxu0 %v334
  %1405 = vmatpush1.bf16.msra.mxu0 %v333
  %1406 = vmatprep.subr.bf16.mxu0 %v330
  %1407 = vmatpush1.bf16.msra.mxu0 %v329
  %1408 = vmatprep.subr.bf16.mxu0 %v326
  %1409 = vmatpush1.bf16.msra.mxu0 %v325
  %1410 = vmatprep.subr.bf16.mxu0 %v322
  %1411 = vmatpush1.bf16.msra.mxu0 %v321
  %1412 = vmatprep.subr.bf16.mxu0 %v318
  %1413 = vmatpush1.bf16.msra.mxu0 %v317
  %1414 = vmatprep.subr.bf16.mxu0 %v314
  %1415 = vmatpush1.bf16.msra.mxu0 %v313
  %1416 = vmatprep.subr.bf16.mxu0 %v310
  %1417 = vmatpush1.bf16.msra.mxu0 %v309
  %1418 = vmatprep.subr.bf16.mxu0 %v306
  %1419 = vmatpush1.bf16.msra.mxu0 %v305
  %1420 = vmatprep.subr.bf16.mxu0 0
  %1421 = vmatpush2.bf16.msra.mxu0 0
  %1422 = vmatprep.subr.bf16.mxu0 0
  %1423 = vmatpush2.bf16.msra.mxu0 0
  %1424 = vmatprep.subr.bf16.mxu0 0
  %1425 = vmatpush2.bf16.msra.mxu0 0
  %1426 = vmatprep.subr.bf16.mxu0 0
  %1427 = vmatpush2.bf16.msra.mxu0 0
  %1428 = vmatprep.subr.bf16.mxu0 0
  %1429 = vmatpush2.bf16.msra.mxu0 0
  %1430 = vmatprep.subr.bf16.mxu0 0
  %1431 = vmatpush2.bf16.msra.mxu0 0
  %1432 = vmatprep.subr.bf16.mxu0 0
  %1433 = vmatpush2.bf16.msra.mxu0 0
  %1434 = vmatprep.subr.bf16.mxu0 0
  %1435 = vmatpush2.bf16.msra.mxu0 0
  %1436 = vmatprep.mubr.bf16.mxu0 0
  %1437 = vmatmul.mubr.bf16.gmra.mxu0 %v1287
  %v1438 = vpop.f32.mrf.mxu0
  %v1439 = vadd.f32 0.0, %v1438
  %v1440 = vpop.f32.mrf.mxu0
  %v1441 = vadd.f32 0.0, %v1440
  %v1442 = vpop.f32.mrf.mxu0
  %v1443 = vadd.f32 0.0, %v1442
  %v1444 = vpop.f32.mrf.mxu0
  %v1445 = vadd.f32 0.0, %v1444
  %1446 = vdwg.mxu0
  %1447 = vmatprep.subr.bf16.mxu0 %v336
  %1448 = vmatpush1.bf16.msra.mxu0 %v335
  %1449 = vmatprep.subr.bf16.mxu0 %v332
  %1450 = vmatpush1.bf16.msra.mxu0 %v331
  %1451 = vmatprep.subr.bf16.mxu0 %v328
  %1452 = vmatpush1.bf16.msra.mxu0 %v327
  %1453 = vmatprep.subr.bf16.mxu0 %v324
  %1454 = vmatpush1.bf16.msra.mxu0 %v323
  %1455 = vmatprep.subr.bf16.mxu0 %v320
  %1456 = vmatpush1.bf16.msra.mxu0 %v319
  %1457 = vmatprep.subr.bf16.mxu0 %v316
  %1458 = vmatpush1.bf16.msra.mxu0 %v315
  %1459 = vmatprep.subr.bf16.mxu0 %v312
  %1460 = vmatpush1.bf16.msra.mxu0 %v311
  %1461 = vmatprep.subr.bf16.mxu0 %v308
  %1462 = vmatpush1.bf16.msra.mxu0 %v307
  %1463 = vmatprep.subr.bf16.mxu0 0
  %1464 = vmatpush2.bf16.msra.mxu0 0
  %1465 = vmatprep.subr.bf16.mxu0 0
  %1466 = vmatpush2.bf16.msra.mxu0 0
  %1467 = vmatprep.subr.bf16.mxu0 0
  %1468 = vmatpush2.bf16.msra.mxu0 0
  %1469 = vmatprep.subr.bf16.mxu0 0
  %1470 = vmatpush2.bf16.msra.mxu0 0
  %1471 = vmatprep.subr.bf16.mxu0 0
  %1472 = vmatpush2.bf16.msra.mxu0 0
  %1473 = vmatprep.subr.bf16.mxu0 0
  %1474 = vmatpush2.bf16.msra.mxu0 0
  %1475 = vmatprep.subr.bf16.mxu0 0
  %1476 = vmatpush2.bf16.msra.mxu0 0
  %1477 = vmatprep.subr.bf16.mxu0 0
  %1478 = vmatpush2.bf16.msra.mxu0 0
  %1479 = vmatprep.mubr.bf16.mxu0 0
  %1480 = vmatmul.mubr.bf16.gmra.mxu0 %v1287
  %v1481 = vpop.f32.mrf.mxu0
  %v1482 = vadd.f32 0.0, %v1481
  %v1483 = vpop.f32.mrf.mxu0
  %v1484 = vadd.f32 0.0, %v1483
  %v1485 = vpop.f32.mrf.mxu0
  %v1486 = vadd.f32 0.0, %v1485
  %v1487 = vpop.f32.mrf.mxu0
  %v1488 = vadd.f32 0.0, %v1487
  %1489 = vdwg.mxu0
  %v1490 = vadd.f32 %v1353, %v1439
  %v1491 = vadd.f32 %v1355, %v1441
  %v1492 = vadd.f32 %v1396, %v1482
  %v1493 = vadd.f32 %v1398, %v1484
  %v1494 = vadd.f32 %v1357, %v1443
  %v1495 = vadd.f32 %v1359, %v1445
  %v1496 = vadd.f32 %v1400, %v1486
  %v1497 = vadd.f32 %v1402, %v1488
  %v1498 = vxor.u32 %v1490, 2147483648
  %v1499 = vxor.u32 %v1494, 2147483648
  %v1500 = vmul.f32 %v1498, 1.442695
  %v1501 = vpow.pop %v1500
  %v1502 = vmul.f32 %v1499, 1.442695
  %v1503 = vpow.pop %v1502
  %v1504 = vadd.f32 %v1501, 1.0
  %v1505 = vadd.f32 %v1503, 1.0
  %v1506 = vrcp.pop %v1504
  %v1507 = vmul.f32 1.0, %v1506
  %v1508 = vrcp.pop %v1505
  %v1509 = vmul.f32 1.0, %v1508
  %v1510 = vxor.u32 %v1491, 2147483648
  %v1511 = vxor.u32 %v1495, 2147483648
  %v1512 = vmul.f32 %v1510, 1.442695
  %v1513 = vpow.pop %v1512
  %v1514 = vmul.f32 %v1511, 1.442695
  %v1515 = vpow.pop %v1514
  %v1516 = vadd.f32 %v1513, 1.0
  %v1517 = vadd.f32 %v1515, 1.0
  %v1518 = vrcp.pop %v1516
  %v1519 = vmul.f32 1.0, %v1518
  %v1520 = vrcp.pop %v1517
  %v1521 = vmul.f32 1.0, %v1520
  %v1522 = vtanh.pop %v1492
  %v1523 = vtanh.pop %v1496
  %v1524 = vxor.u32 %v1493, 2147483648
  %v1525 = vxor.u32 %v1497, 2147483648
  %v1526 = vmul.f32 %v1524, 1.442695
  %v1527 = vpow.pop %v1526
  %v1528 = vmul.f32 %v1525, 1.442695
  %v1529 = vpow.pop %v1528
  %v1530 = vadd.f32 %v1527, 1.0
  %v1531 = vadd.f32 %v1529, 1.0
  %v1532 = vrcp.pop %v1530
  %v1533 = vmul.f32 1.0, %v1532
  %v1534 = vrcp.pop %v1531
  %v1535 = vmul.f32 1.0, %v1534
  %v1536 = vmul.f32 %v1519, %v1281
  %v1537 = vmul.f32 %v1521, %v1282
  %v1538 = vmul.f32 %v1507, %v1522
  %v1539 = vmul.f32 %v1509, %v1523
  %v1540 = vadd.f32 %v1536, %v1538
  %v1541 = vadd.f32 %v1537, %v1539
  %v1542 = vtanh.pop %v1540
  %v1543 = vtanh.pop %v1541
  %v1544 = vmul.f32 %v1533, %v1542
  %v1545 = vmul.f32 %v1535, %v1543
  %v1546 = vpack.c.bf16 %v1545, %v1544
  %v1548 = vunpack.c.l.b16 %v1546
  %v1549 = vunpack.c.h.b16 %v1546
  %v1550 = vpack.c.b16 %v1548, %v1548
  %v1551 = vpack.c.b16 %v1549, %v1549
  %s1554 = scalar_lea.vmem %s4, 32
  %1555 = vst [vmem:[%s1554] sm:$0xf] %v1550
  %1556 = vst [vmem:[%s1554 + $0x4] sm:$0xf] %v1551
  %s1557 = sadd.s32 %s521, 4
  %p1558 = scmp.eq.s32.totalorder %s1557, 7
  // Predicated region
  $region38: #{rnn_block_lstm.1} parent=0 // pred_check
    %p1559 = pneg %p1558
  $region39: #{rnn_block_lstm.1} parent=0 // pred_check_branch
    %1561 = sbr.rel (%p1559) target = $region41
  $region40: #{rnn_block_lstm.1} parent=0 // pred_region
    %1562 = vst [vmem:[%s5] sm:$0xff] %v1544
    %1563 = vst [vmem:[%s5 + $0x8] sm:$0xff] %v1545
    %1564 = vst [vmem:[%s6] sm:$0xff] %v1540
    %1565 = vst [vmem:[%s6 + $0x8] sm:$0xff] %v1541
  $region41: #{rnn_block_lstm.1} parent=0 // pred_fallthru
    _
  %s1566 = scalar_lea.vmem %s0, 40
  %v1567 = vld [vmem:[%s1566] sm:$0xf]
  %v1568 = vld [vmem:[%s1566 + $0x4] sm:$0xf]
  %v1571 = vunpack.c.l.b16 %v1567
  %v1572 = vunpack.c.l.b16 %v1568
  %v1573 = vpack.c.b16 %v1572, %v1571
  %v1575 = vsel %vm118, %v1573, 0
  %1577 = vmatprep.subr.bf16.mxu0 0
  %1578 = vmatpush1.bf16.msra.mxu0 0
  %1579 = vmatprep.subr.bf16.mxu0 0
  %1580 = vmatpush1.bf16.msra.mxu0 0
  %1581 = vmatprep.subr.bf16.mxu0 0
  %1582 = vmatpush1.bf16.msra.mxu0 0
  %1583 = vmatprep.subr.bf16.mxu0 0
  %1584 = vmatpush1.bf16.msra.mxu0 0
  %1585 = vmatprep.subr.bf16.mxu0 0
  %1586 = vmatpush1.bf16.msra.mxu0 0
  %1587 = vmatprep.subr.bf16.mxu0 0
  %1588 = vmatpush1.bf16.msra.mxu0 0
  %1589 = vmatprep.subr.bf16.mxu0 0
  %1590 = vmatpush1.bf16.msra.mxu0 0
  %1591 = vmatprep.subr.bf16.mxu0 %v111
  %1592 = vmatpush1.bf16.msra.mxu0 %v110
  %1593 = vmatprep.subr.bf16.mxu0 0
  %1594 = vmatpush2.bf16.msra.mxu0 0
  %1595 = vmatprep.subr.bf16.mxu0 0
  %1596 = vmatpush2.bf16.msra.mxu0 0
  %1597 = vmatprep.subr.bf16.mxu0 0
  %1598 = vmatpush2.bf16.msra.mxu0 0
  %1599 = vmatprep.subr.bf16.mxu0 0
  %1600 = vmatpush2.bf16.msra.mxu0 0
  %1601 = vmatprep.subr.bf16.mxu0 0
  %1602 = vmatpush2.bf16.msra.mxu0 0
  %1603 = vmatprep.subr.bf16.mxu0 0
  %1604 = vmatpush2.bf16.msra.mxu0 0
  %1605 = vmatprep.subr.bf16.mxu0 0
  %1606 = vmatpush2.bf16.msra.mxu0 0
  %1607 = vmatprep.subr.bf16.mxu0 0
  %1608 = vmatpush2.bf16.msra.mxu0 0
  %1609 = vmatprep.mubr.bf16.mxu0 0
  %1610 = vmatmul.mubr.bf16.gmra.mxu0 %v1575
  %v1611 = vpop.f32.mrf.mxu0
  %v1612 = vadd.f32 %v76, %v1611
  %v1613 = vpop.f32.mrf.mxu0
  %v1614 = vadd.f32 %v80, %v1613
  %v1615 = vpop.f32.mrf.mxu0
  %v1616 = vadd.f32 %v76, %v1615
  %v1617 = vpop.f32.mrf.mxu0
  %v1618 = vadd.f32 %v80, %v1617
  %1619 = vdwg.mxu0
  %1620 = vmatprep.subr.bf16.mxu0 0
  %1621 = vmatpush1.bf16.msra.mxu0 0
  %1622 = vmatprep.subr.bf16.mxu0 0
  %1623 = vmatpush1.bf16.msra.mxu0 0
  %1624 = vmatprep.subr.bf16.mxu0 0
  %1625 = vmatpush1.bf16.msra.mxu0 0
  %1626 = vmatprep.subr.bf16.mxu0 0
  %1627 = vmatpush1.bf16.msra.mxu0 0
  %1628 = vmatprep.subr.bf16.mxu0 0
  %1629 = vmatpush1.bf16.msra.mxu0 0
  %1630 = vmatprep.subr.bf16.mxu0 0
  %1631 = vmatpush1.bf16.msra.mxu0 0
  %1632 = vmatprep.subr.bf16.mxu0 0
  %1633 = vmatpush1.bf16.msra.mxu0 0
  %1634 = vmatprep.subr.bf16.mxu0 %v113
  %1635 = vmatpush1.bf16.msra.mxu0 %v112
  %1636 = vmatprep.subr.bf16.mxu0 0
  %1637 = vmatpush2.bf16.msra.mxu0 0
  %1638 = vmatprep.subr.bf16.mxu0 0
  %1639 = vmatpush2.bf16.msra.mxu0 0
  %1640 = vmatprep.subr.bf16.mxu0 0
  %1641 = vmatpush2.bf16.msra.mxu0 0
  %1642 = vmatprep.subr.bf16.mxu0 0
  %1643 = vmatpush2.bf16.msra.mxu0 0
  %1644 = vmatprep.subr.bf16.mxu0 0
  %1645 = vmatpush2.bf16.msra.mxu0 0
  %1646 = vmatprep.subr.bf16.mxu0 0
  %1647 = vmatpush2.bf16.msra.mxu0 0
  %1648 = vmatprep.subr.bf16.mxu0 0
  %1649 = vmatpush2.bf16.msra.mxu0 0
  %1650 = vmatprep.subr.bf16.mxu0 0
  %1651 = vmatpush2.bf16.msra.mxu0 0
  %1652 = vmatprep.mubr.bf16.mxu0 0
  %1653 = vmatmul.mubr.bf16.gmra.mxu0 %v1575
  %v1654 = vpop.f32.mrf.mxu0
  %v1655 = vadd.f32 %v84, %v1654
  %v1656 = vpop.f32.mrf.mxu0
  %v1657 = vadd.f32 %v88, %v1656
  %v1658 = vpop.f32.mrf.mxu0
  %v1659 = vadd.f32 %v84, %v1658
  %v1660 = vpop.f32.mrf.mxu0
  %v1661 = vadd.f32 %v88, %v1660
  %1662 = vdwg.mxu0
  %1663 = vmatprep.subr.bf16.mxu0 %v334
  %1664 = vmatpush1.bf16.msra.mxu0 %v333
  %1665 = vmatprep.subr.bf16.mxu0 %v330
  %1666 = vmatpush1.bf16.msra.mxu0 %v329
  %1667 = vmatprep.subr.bf16.mxu0 %v326
  %1668 = vmatpush1.bf16.msra.mxu0 %v325
  %1669 = vmatprep.subr.bf16.mxu0 %v322
  %1670 = vmatpush1.bf16.msra.mxu0 %v321
  %1671 = vmatprep.subr.bf16.mxu0 %v318
  %1672 = vmatpush1.bf16.msra.mxu0 %v317
  %1673 = vmatprep.subr.bf16.mxu0 %v314
  %1674 = vmatpush1.bf16.msra.mxu0 %v313
  %1675 = vmatprep.subr.bf16.mxu0 %v310
  %1676 = vmatpush1.bf16.msra.mxu0 %v309
  %1677 = vmatprep.subr.bf16.mxu0 %v306
  %1678 = vmatpush1.bf16.msra.mxu0 %v305
  %1679 = vmatprep.subr.bf16.mxu0 0
  %1680 = vmatpush2.bf16.msra.mxu0 0
  %1681 = vmatprep.subr.bf16.mxu0 0
  %1682 = vmatpush2.bf16.msra.mxu0 0
  %1683 = vmatprep.subr.bf16.mxu0 0
  %1684 = vmatpush2.bf16.msra.mxu0 0
  %1685 = vmatprep.subr.bf16.mxu0 0
  %1686 = vmatpush2.bf16.msra.mxu0 0
  %1687 = vmatprep.subr.bf16.mxu0 0
  %1688 = vmatpush2.bf16.msra.mxu0 0
  %1689 = vmatprep.subr.bf16.mxu0 0
  %1690 = vmatpush2.bf16.msra.mxu0 0
  %1691 = vmatprep.subr.bf16.mxu0 0
  %1692 = vmatpush2.bf16.msra.mxu0 0
  %1693 = vmatprep.subr.bf16.mxu0 0
  %1694 = vmatpush2.bf16.msra.mxu0 0
  %1695 = vmatprep.mubr.bf16.mxu0 0
  %1696 = vmatmul.mubr.bf16.gmra.mxu0 %v1546
  %v1697 = vpop.f32.mrf.mxu0
  %v1698 = vadd.f32 0.0, %v1697
  %v1699 = vpop.f32.mrf.mxu0
  %v1700 = vadd.f32 0.0, %v1699
  %v1701 = vpop.f32.mrf.mxu0
  %v1702 = vadd.f32 0.0, %v1701
  %v1703 = vpop.f32.mrf.mxu0
  %v1704 = vadd.f32 0.0, %v1703
  %1705 = vdwg.mxu0
  %1706 = vmatprep.subr.bf16.mxu0 %v336
  %1707 = vmatpush1.bf16.msra.mxu0 %v335
  %1708 = vmatprep.subr.bf16.mxu0 %v332
  %1709 = vmatpush1.bf16.msra.mxu0 %v331
  %1710 = vmatprep.subr.bf16.mxu0 %v328
  %1711 = vmatpush1.bf16.msra.mxu0 %v327
  %1712 = vmatprep.subr.bf16.mxu0 %v324
  %1713 = vmatpush1.bf16.msra.mxu0 %v323
  %1714 = vmatprep.subr.bf16.mxu0 %v320
  %1715 = vmatpush1.bf16.msra.mxu0 %v319
  %1716 = vmatprep.subr.bf16.mxu0 %v316
  %1717 = vmatpush1.bf16.msra.mxu0 %v315
  %1718 = vmatprep.subr.bf16.mxu0 %v312
  %1719 = vmatpush1.bf16.msra.mxu0 %v311
  %1720 = vmatprep.subr.bf16.mxu0 %v308
  %1721 = vmatpush1.bf16.msra.mxu0 %v307
  %1722 = vmatprep.subr.bf16.mxu0 0
  %1723 = vmatpush2.bf16.msra.mxu0 0
  %1724 = vmatprep.subr.bf16.mxu0 0
  %1725 = vmatpush2.bf16.msra.mxu0 0
  %1726 = vmatprep.subr.bf16.mxu0 0
  %1727 = vmatpush2.bf16.msra.mxu0 0
  %1728 = vmatprep.subr.bf16.mxu0 0
  %1729 = vmatpush2.bf16.msra.mxu0 0
  %1730 = vmatprep.subr.bf16.mxu0 0
  %1731 = vmatpush2.bf16.msra.mxu0 0
  %1732 = vmatprep.subr.bf16.mxu0 0
  %1733 = vmatpush2.bf16.msra.mxu0 0
  %1734 = vmatprep.subr.bf16.mxu0 0
  %1735 = vmatpush2.bf16.msra.mxu0 0
  %1736 = vmatprep.subr.bf16.mxu0 0
  %1737 = vmatpush2.bf16.msra.mxu0 0
  %1738 = vmatprep.mubr.bf16.mxu0 0
  %1739 = vmatmul.mubr.bf16.gmra.mxu0 %v1546
  %v1740 = vpop.f32.mrf.mxu0
  %v1741 = vadd.f32 0.0, %v1740
  %v1742 = vpop.f32.mrf.mxu0
  %v1743 = vadd.f32 0.0, %v1742
  %v1744 = vpop.f32.mrf.mxu0
  %v1745 = vadd.f32 0.0, %v1744
  %v1746 = vpop.f32.mrf.mxu0
  %v1747 = vadd.f32 0.0, %v1746
  %1748 = vdwg.mxu0
  %v1749 = vadd.f32 %v1612, %v1698
  %v1750 = vadd.f32 %v1614, %v1700
  %v1751 = vadd.f32 %v1655, %v1741
  %v1752 = vadd.f32 %v1657, %v1743
  %v1753 = vadd.f32 %v1616, %v1702
  %v1754 = vadd.f32 %v1618, %v1704
  %v1755 = vadd.f32 %v1659, %v1745
  %v1756 = vadd.f32 %v1661, %v1747
  %v1757 = vxor.u32 %v1749, 2147483648
  %v1758 = vxor.u32 %v1753, 2147483648
  %v1759 = vmul.f32 %v1757, 1.442695
  %v1760 = vpow.pop %v1759
  %v1761 = vmul.f32 %v1758, 1.442695
  %v1762 = vpow.pop %v1761
  %v1763 = vadd.f32 %v1760, 1.0
  %v1764 = vadd.f32 %v1762, 1.0
  %v1765 = vrcp.pop %v1763
  %v1766 = vmul.f32 1.0, %v1765
  %v1767 = vrcp.pop %v1764
  %v1768 = vmul.f32 1.0, %v1767
  %v1769 = vxor.u32 %v1750, 2147483648
  %v1770 = vxor.u32 %v1754, 2147483648
  %v1771 = vmul.f32 %v1769, 1.442695
  %v1772 = vpow.pop %v1771
  %v1773 = vmul.f32 %v1770, 1.442695
  %v1774 = vpow.pop %v1773
  %v1775 = vadd.f32 %v1772, 1.0
  %v1776 = vadd.f32 %v1774, 1.0
  %v1777 = vrcp.pop %v1775
  %v1778 = vmul.f32 1.0, %v1777
  %v1779 = vrcp.pop %v1776
  %v1780 = vmul.f32 1.0, %v1779
  %v1781 = vtanh.pop %v1751
  %v1782 = vtanh.pop %v1755
  %v1783 = vxor.u32 %v1752, 2147483648
  %v1784 = vxor.u32 %v1756, 2147483648
  %v1785 = vmul.f32 %v1783, 1.442695
  %v1786 = vpow.pop %v1785
  %v1787 = vmul.f32 %v1784, 1.442695
  %v1788 = vpow.pop %v1787
  %v1789 = vadd.f32 %v1786, 1.0
  %v1790 = vadd.f32 %v1788, 1.0
  %v1791 = vrcp.pop %v1789
  %v1792 = vmul.f32 1.0, %v1791
  %v1793 = vrcp.pop %v1790
  %v1794 = vmul.f32 1.0, %v1793
  %v1795 = vmul.f32 %v1778, %v1540
  %v1796 = vmul.f32 %v1780, %v1541
  %v1797 = vmul.f32 %v1766, %v1781
  %v1798 = vmul.f32 %v1768, %v1782
  %v1799 = vadd.f32 %v1795, %v1797
  %v1800 = vadd.f32 %v1796, %v1798
  %v1801 = vtanh.pop %v1799
  %v1802 = vtanh.pop %v1800
  %v1803 = vmul.f32 %v1792, %v1801
  %v1804 = vmul.f32 %v1794, %v1802
  %v1805 = vpack.c.bf16 %v1804, %v1803
  %v1807 = vunpack.c.l.b16 %v1805
  %v1808 = vunpack.c.h.b16 %v1805
  %v1809 = vpack.c.b16 %v1807, %v1807
  %v1810 = vpack.c.b16 %v1808, %v1808
  %s1813 = scalar_lea.vmem %s4, 40
  %1814 = vst [vmem:[%s1813] sm:$0xf] %v1809
  %1815 = vst [vmem:[%s1813 + $0x4] sm:$0xf] %v1810
  %s1816 = sadd.s32 %s521, 5
  %p1817 = scmp.eq.s32.totalorder %s1816, 7
  // Predicated region
  $region42: #{rnn_block_lstm.1} parent=0 // pred_check
    %p1818 = pneg %p1817
  $region43: #{rnn_block_lstm.1} parent=0 // pred_check_branch
    %1820 = sbr.rel (%p1818) target = $region45
  $region44: #{rnn_block_lstm.1} parent=0 // pred_region
    %1821 = vst [vmem:[%s5] sm:$0xff] %v1803
    %1822 = vst [vmem:[%s5 + $0x8] sm:$0xff] %v1804
    %1823 = vst [vmem:[%s6] sm:$0xff] %v1799
    %1824 = vst [vmem:[%s6 + $0x8] sm:$0xff] %v1800
  $region45: #{rnn_block_lstm.1} parent=0 // pred_fallthru
    _
  %s1825 = scalar_lea.vmem %s0, 48
  %v1826 = vld [vmem:[%s1825] sm:$0xf]
  %v1827 = vld [vmem:[%s1825 + $0x4] sm:$0xf]
  %v1830 = vunpack.c.l.b16 %v1826
  %v1831 = vunpack.c.l.b16 %v1827
  %v1832 = vpack.c.b16 %v1831, %v1830
  %v1834 = vsel %vm118, %v1832, 0
  %1836 = vmatprep.subr.bf16.mxu0 0
  %1837 = vmatpush1.bf16.msra.mxu0 0
  %1838 = vmatprep.subr.bf16.mxu0 0
  %1839 = vmatpush1.bf16.msra.mxu0 0
  %1840 = vmatprep.subr.bf16.mxu0 0
  %1841 = vmatpush1.bf16.msra.mxu0 0
  %1842 = vmatprep.subr.bf16.mxu0 0
  %1843 = vmatpush1.bf16.msra.mxu0 0
  %1844 = vmatprep.subr.bf16.mxu0 0
  %1845 = vmatpush1.bf16.msra.mxu0 0
  %1846 = vmatprep.subr.bf16.mxu0 0
  %1847 = vmatpush1.bf16.msra.mxu0 0
  %1848 = vmatprep.subr.bf16.mxu0 0
  %1849 = vmatpush1.bf16.msra.mxu0 0
  %1850 = vmatprep.subr.bf16.mxu0 %v111
  %1851 = vmatpush1.bf16.msra.mxu0 %v110
  %1852 = vmatprep.subr.bf16.mxu0 0
  %1853 = vmatpush2.bf16.msra.mxu0 0
  %1854 = vmatprep.subr.bf16.mxu0 0
  %1855 = vmatpush2.bf16.msra.mxu0 0
  %1856 = vmatprep.subr.bf16.mxu0 0
  %1857 = vmatpush2.bf16.msra.mxu0 0
  %1858 = vmatprep.subr.bf16.mxu0 0
  %1859 = vmatpush2.bf16.msra.mxu0 0
  %1860 = vmatprep.subr.bf16.mxu0 0
  %1861 = vmatpush2.bf16.msra.mxu0 0
  %1862 = vmatprep.subr.bf16.mxu0 0
  %1863 = vmatpush2.bf16.msra.mxu0 0
  %1864 = vmatprep.subr.bf16.mxu0 0
  %1865 = vmatpush2.bf16.msra.mxu0 0
  %1866 = vmatprep.subr.bf16.mxu0 0
  %1867 = vmatpush2.bf16.msra.mxu0 0
  %1868 = vmatprep.mubr.bf16.mxu0 0
  %1869 = vmatmul.mubr.bf16.gmra.mxu0 %v1834
  %v1870 = vpop.f32.mrf.mxu0
  %v1871 = vadd.f32 %v76, %v1870
  %v1872 = vpop.f32.mrf.mxu0
  %v1873 = vadd.f32 %v80, %v1872
  %v1874 = vpop.f32.mrf.mxu0
  %v1875 = vadd.f32 %v76, %v1874
  %v1876 = vpop.f32.mrf.mxu0
  %v1877 = vadd.f32 %v80, %v1876
  %1878 = vdwg.mxu0
  %1879 = vmatprep.subr.bf16.mxu0 0
  %1880 = vmatpush1.bf16.msra.mxu0 0
  %1881 = vmatprep.subr.bf16.mxu0 0
  %1882 = vmatpush1.bf16.msra.mxu0 0
  %1883 = vmatprep.subr.bf16.mxu0 0
  %1884 = vmatpush1.bf16.msra.mxu0 0
  %1885 = vmatprep.subr.bf16.mxu0 0
  %1886 = vmatpush1.bf16.msra.mxu0 0
  %1887 = vmatprep.subr.bf16.mxu0 0
  %1888 = vmatpush1.bf16.msra.mxu0 0
  %1889 = vmatprep.subr.bf16.mxu0 0
  %1890 = vmatpush1.bf16.msra.mxu0 0
  %1891 = vmatprep.subr.bf16.mxu0 0
  %1892 = vmatpush1.bf16.msra.mxu0 0
  %1893 = vmatprep.subr.bf16.mxu0 %v113
  %1894 = vmatpush1.bf16.msra.mxu0 %v112
  %1895 = vmatprep.subr.bf16.mxu0 0
  %1896 = vmatpush2.bf16.msra.mxu0 0
  %1897 = vmatprep.subr.bf16.mxu0 0
  %1898 = vmatpush2.bf16.msra.mxu0 0
  %1899 = vmatprep.subr.bf16.mxu0 0
  %1900 = vmatpush2.bf16.msra.mxu0 0
  %1901 = vmatprep.subr.bf16.mxu0 0
  %1902 = vmatpush2.bf16.msra.mxu0 0
  %1903 = vmatprep.subr.bf16.mxu0 0
  %1904 = vmatpush2.bf16.msra.mxu0 0
  %1905 = vmatprep.subr.bf16.mxu0 0
  %1906 = vmatpush2.bf16.msra.mxu0 0
  %1907 = vmatprep.subr.bf16.mxu0 0
  %1908 = vmatpush2.bf16.msra.mxu0 0
  %1909 = vmatprep.subr.bf16.mxu0 0
  %1910 = vmatpush2.bf16.msra.mxu0 0
  %1911 = vmatprep.mubr.bf16.mxu0 0
  %1912 = vmatmul.mubr.bf16.gmra.mxu0 %v1834
  %v1913 = vpop.f32.mrf.mxu0
  %v1914 = vadd.f32 %v84, %v1913
  %v1915 = vpop.f32.mrf.mxu0
  %v1916 = vadd.f32 %v88, %v1915
  %v1917 = vpop.f32.mrf.mxu0
  %v1918 = vadd.f32 %v84, %v1917
  %v1919 = vpop.f32.mrf.mxu0
  %v1920 = vadd.f32 %v88, %v1919
  %1921 = vdwg.mxu0
  %1922 = vmatprep.subr.bf16.mxu0 %v334
  %1923 = vmatpush1.bf16.msra.mxu0 %v333
  %1924 = vmatprep.subr.bf16.mxu0 %v330
  %1925 = vmatpush1.bf16.msra.mxu0 %v329
  %1926 = vmatprep.subr.bf16.mxu0 %v326
  %1927 = vmatpush1.bf16.msra.mxu0 %v325
  %1928 = vmatprep.subr.bf16.mxu0 %v322
  %1929 = vmatpush1.bf16.msra.mxu0 %v321
  %1930 = vmatprep.subr.bf16.mxu0 %v318
  %1931 = vmatpush1.bf16.msra.mxu0 %v317
  %1932 = vmatprep.subr.bf16.mxu0 %v314
  %1933 = vmatpush1.bf16.msra.mxu0 %v313
  %1934 = vmatprep.subr.bf16.mxu0 %v310
  %1935 = vmatpush1.bf16.msra.mxu0 %v309
  %1936 = vmatprep.subr.bf16.mxu0 %v306
  %1937 = vmatpush1.bf16.msra.mxu0 %v305
  %1938 = vmatprep.subr.bf16.mxu0 0
  %1939 = vmatpush2.bf16.msra.mxu0 0
  %1940 = vmatprep.subr.bf16.mxu0 0
  %1941 = vmatpush2.bf16.msra.mxu0 0
  %1942 = vmatprep.subr.bf16.mxu0 0
  %1943 = vmatpush2.bf16.msra.mxu0 0
  %1944 = vmatprep.subr.bf16.mxu0 0
  %1945 = vmatpush2.bf16.msra.mxu0 0
  %1946 = vmatprep.subr.bf16.mxu0 0
  %1947 = vmatpush2.bf16.msra.mxu0 0
  %1948 = vmatprep.subr.bf16.mxu0 0
  %1949 = vmatpush2.bf16.msra.mxu0 0
  %1950 = vmatprep.subr.bf16.mxu0 0
  %1951 = vmatpush2.bf16.msra.mxu0 0
  %1952 = vmatprep.subr.bf16.mxu0 0
  %1953 = vmatpush2.bf16.msra.mxu0 0
  %1954 = vmatprep.mubr.bf16.mxu0 0
  %1955 = vmatmul.mubr.bf16.gmra.mxu0 %v1805
  %v1956 = vpop.f32.mrf.mxu0
  %v1957 = vadd.f32 0.0, %v1956
  %v1958 = vpop.f32.mrf.mxu0
  %v1959 = vadd.f32 0.0, %v1958
  %v1960 = vpop.f32.mrf.mxu0
  %v1961 = vadd.f32 0.0, %v1960
  %v1962 = vpop.f32.mrf.mxu0
  %v1963 = vadd.f32 0.0, %v1962
  %1964 = vdwg.mxu0
  %1965 = vmatprep.subr.bf16.mxu0 %v336
  %1966 = vmatpush1.bf16.msra.mxu0 %v335
  %1967 = vmatprep.subr.bf16.mxu0 %v332
  %1968 = vmatpush1.bf16.msra.mxu0 %v331
  %1969 = vmatprep.subr.bf16.mxu0 %v328
  %1970 = vmatpush1.bf16.msra.mxu0 %v327
  %1971 = vmatprep.subr.bf16.mxu0 %v324
  %1972 = vmatpush1.bf16.msra.mxu0 %v323
  %1973 = vmatprep.subr.bf16.mxu0 %v320
  %1974 = vmatpush1.bf16.msra.mxu0 %v319
  %1975 = vmatprep.subr.bf16.mxu0 %v316
  %1976 = vmatpush1.bf16.msra.mxu0 %v315
  %1977 = vmatprep.subr.bf16.mxu0 %v312
  %1978 = vmatpush1.bf16.msra.mxu0 %v311
  %1979 = vmatprep.subr.bf16.mxu0 %v308
  %1980 = vmatpush1.bf16.msra.mxu0 %v307
  %1981 = vmatprep.subr.bf16.mxu0 0
  %1982 = vmatpush2.bf16.msra.mxu0 0
  %1983 = vmatprep.subr.bf16.mxu0 0
  %1984 = vmatpush2.bf16.msra.mxu0 0
  %1985 = vmatprep.subr.bf16.mxu0 0
  %1986 = vmatpush2.bf16.msra.mxu0 0
  %1987 = vmatprep.subr.bf16.mxu0 0
  %1988 = vmatpush2.bf16.msra.mxu0 0
  %1989 = vmatprep.subr.bf16.mxu0 0
  %1990 = vmatpush2.bf16.msra.mxu0 0
  %1991 = vmatprep.subr.bf16.mxu0 0
  %1992 = vmatpush2.bf16.msra.mxu0 0
  %1993 = vmatprep.subr.bf16.mxu0 0
  %1994 = vmatpush2.bf16.msra.mxu0 0
  %1995 = vmatprep.subr.bf16.mxu0 0
  %1996 = vmatpush2.bf16.msra.mxu0 0
  %1997 = vmatprep.mubr.bf16.mxu0 0
  %1998 = vmatmul.mubr.bf16.gmra.mxu0 %v1805
  %v1999 = vpop.f32.mrf.mxu0
  %v2000 = vadd.f32 0.0, %v1999
  %v2001 = vpop.f32.mrf.mxu0
  %v2002 = vadd.f32 0.0, %v2001
  %v2003 = vpop.f32.mrf.mxu0
  %v2004 = vadd.f32 0.0, %v2003
  %v2005 = vpop.f32.mrf.mxu0
  %v2006 = vadd.f32 0.0, %v2005
  %2007 = vdwg.mxu0
  %v2008 = vadd.f32 %v1871, %v1957
  %v2009 = vadd.f32 %v1873, %v1959
  %v2010 = vadd.f32 %v1914, %v2000
  %v2011 = vadd.f32 %v1916, %v2002
  %v2012 = vadd.f32 %v1875, %v1961
  %v2013 = vadd.f32 %v1877, %v1963
  %v2014 = vadd.f32 %v1918, %v2004
  %v2015 = vadd.f32 %v1920, %v2006
  %v2016 = vxor.u32 %v2008, 2147483648
  %v2017 = vxor.u32 %v2012, 2147483648
  %v2018 = vmul.f32 %v2016, 1.442695
  %v2019 = vpow.pop %v2018
  %v2020 = vmul.f32 %v2017, 1.442695
  %v2021 = vpow.pop %v2020
  %v2022 = vadd.f32 %v2019, 1.0
  %v2023 = vadd.f32 %v2021, 1.0
  %v2024 = vrcp.pop %v2022
  %v2025 = vmul.f32 1.0, %v2024
  %v2026 = vrcp.pop %v2023
  %v2027 = vmul.f32 1.0, %v2026
  %v2028 = vxor.u32 %v2009, 2147483648
  %v2029 = vxor.u32 %v2013, 2147483648
  %v2030 = vmul.f32 %v2028, 1.442695
  %v2031 = vpow.pop %v2030
  %v2032 = vmul.f32 %v2029, 1.442695
  %v2033 = vpow.pop %v2032
  %v2034 = vadd.f32 %v2031, 1.0
  %v2035 = vadd.f32 %v2033, 1.0
  %v2036 = vrcp.pop %v2034
  %v2037 = vmul.f32 1.0, %v2036
  %v2038 = vrcp.pop %v2035
  %v2039 = vmul.f32 1.0, %v2038
  %v2040 = vtanh.pop %v2010
  %v2041 = vtanh.pop %v2014
  %v2042 = vxor.u32 %v2011, 2147483648
  %v2043 = vxor.u32 %v2015, 2147483648
  %v2044 = vmul.f32 %v2042, 1.442695
  %v2045 = vpow.pop %v2044
  %v2046 = vmul.f32 %v2043, 1.442695
  %v2047 = vpow.pop %v2046
  %v2048 = vadd.f32 %v2045, 1.0
  %v2049 = vadd.f32 %v2047, 1.0
  %v2050 = vrcp.pop %v2048
  %v2051 = vmul.f32 1.0, %v2050
  %v2052 = vrcp.pop %v2049
  %v2053 = vmul.f32 1.0, %v2052
  %v2054 = vmul.f32 %v2037, %v1799
  %v2055 = vmul.f32 %v2039, %v1800
  %v2056 = vmul.f32 %v2025, %v2040
  %v2057 = vmul.f32 %v2027, %v2041
  %v2058 = vadd.f32 %v2054, %v2056
  %v2059 = vadd.f32 %v2055, %v2057
  %v2060 = vtanh.pop %v2058
  %v2061 = vtanh.pop %v2059
  %v2062 = vmul.f32 %v2051, %v2060
  %v2063 = vmul.f32 %v2053, %v2061
  %v2064 = vpack.c.bf16 %v2063, %v2062
  %v2066 = vunpack.c.l.b16 %v2064
  %v2067 = vunpack.c.h.b16 %v2064
  %v2068 = vpack.c.b16 %v2066, %v2066
  %v2069 = vpack.c.b16 %v2067, %v2067
  %s2072 = scalar_lea.vmem %s4, 48
  %2073 = vst [vmem:[%s2072] sm:$0xf] %v2068
  %2074 = vst [vmem:[%s2072 + $0x4] sm:$0xf] %v2069
  %s2075 = sadd.s32 %s521, 6
  %p2076 = scmp.eq.s32.totalorder %s2075, 7
  // Predicated region
  $region46: #{rnn_block_lstm.1} parent=0 // pred_check
    %p2077 = pneg %p2076
  $region47: #{rnn_block_lstm.1} parent=0 // pred_check_branch
    %2079 = sbr.rel (%p2077) target = $region49
  $region48: #{rnn_block_lstm.1} parent=0 // pred_region
    %2080 = vst [vmem:[%s5] sm:$0xff] %v2062
    %2081 = vst [vmem:[%s5 + $0x8] sm:$0xff] %v2063
    %2082 = vst [vmem:[%s6] sm:$0xff] %v2058
    %2083 = vst [vmem:[%s6 + $0x8] sm:$0xff] %v2059
  $region49: #{rnn_block_lstm.1} parent=0 // pred_fallthru
    _
  %s2084 = scalar_lea.vmem %s0, 56
  %v2085 = vld [vmem:[%s2084] sm:$0xf]
  %v2086 = vld [vmem:[%s2084 + $0x4] sm:$0xf]
  %v2089 = vunpack.c.l.b16 %v2085
  %v2090 = vunpack.c.l.b16 %v2086
  %v2091 = vpack.c.b16 %v2090, %v2089
  %v2093 = vsel %vm118, %v2091, 0
  %2095 = vmatprep.subr.bf16.mxu0 0
  %2096 = vmatpush1.bf16.msra.mxu0 0
  %2097 = vmatprep.subr.bf16.mxu0 0
  %2098 = vmatpush1.bf16.msra.mxu0 0
  %2099 = vmatprep.subr.bf16.mxu0 0
  %2100 = vmatpush1.bf16.msra.mxu0 0
  %2101 = vmatprep.subr.bf16.mxu0 0
  %2102 = vmatpush1.bf16.msra.mxu0 0
  %2103 = vmatprep.subr.bf16.mxu0 0
  %2104 = vmatpush1.bf16.msra.mxu0 0
  %2105 = vmatprep.subr.bf16.mxu0 0
  %2106 = vmatpush1.bf16.msra.mxu0 0
  %2107 = vmatprep.subr.bf16.mxu0 0
  %2108 = vmatpush1.bf16.msra.mxu0 0
  %2109 = vmatprep.subr.bf16.mxu0 %v111
  %2110 = vmatpush1.bf16.msra.mxu0 %v110
  %2111 = vmatprep.subr.bf16.mxu0 0
  %2112 = vmatpush2.bf16.msra.mxu0 0
  %2113 = vmatprep.subr.bf16.mxu0 0
  %2114 = vmatpush2.bf16.msra.mxu0 0
  %2115 = vmatprep.subr.bf16.mxu0 0
  %2116 = vmatpush2.bf16.msra.mxu0 0
  %2117 = vmatprep.subr.bf16.mxu0 0
  %2118 = vmatpush2.bf16.msra.mxu0 0
  %2119 = vmatprep.subr.bf16.mxu0 0
  %2120 = vmatpush2.bf16.msra.mxu0 0
  %2121 = vmatprep.subr.bf16.mxu0 0
  %2122 = vmatpush2.bf16.msra.mxu0 0
  %2123 = vmatprep.subr.bf16.mxu0 0
  %2124 = vmatpush2.bf16.msra.mxu0 0
  %2125 = vmatprep.subr.bf16.mxu0 0
  %2126 = vmatpush2.bf16.msra.mxu0 0
  %2127 = vmatprep.mubr.bf16.mxu0 0
  %2128 = vmatmul.mubr.bf16.gmra.mxu0 %v2093
  %v2129 = vpop.f32.mrf.mxu0
  %v2130 = vadd.f32 %v76, %v2129
  %v2131 = vpop.f32.mrf.mxu0
  %v2132 = vadd.f32 %v80, %v2131
  %v2133 = vpop.f32.mrf.mxu0
  %v2134 = vadd.f32 %v76, %v2133
  %v2135 = vpop.f32.mrf.mxu0
  %v2136 = vadd.f32 %v80, %v2135
  %2137 = vdwg.mxu0
  %2138 = vmatprep.subr.bf16.mxu0 0
  %2139 = vmatpush1.bf16.msra.mxu0 0
  %2140 = vmatprep.subr.bf16.mxu0 0
  %2141 = vmatpush1.bf16.msra.mxu0 0
  %2142 = vmatprep.subr.bf16.mxu0 0
  %2143 = vmatpush1.bf16.msra.mxu0 0
  %2144 = vmatprep.subr.bf16.mxu0 0
  %2145 = vmatpush1.bf16.msra.mxu0 0
  %2146 = vmatprep.subr.bf16.mxu0 0
  %2147 = vmatpush1.bf16.msra.mxu0 0
  %2148 = vmatprep.subr.bf16.mxu0 0
  %2149 = vmatpush1.bf16.msra.mxu0 0
  %2150 = vmatprep.subr.bf16.mxu0 0
  %2151 = vmatpush1.bf16.msra.mxu0 0
  %2152 = vmatprep.subr.bf16.mxu0 %v113
  %2153 = vmatpush1.bf16.msra.mxu0 %v112
  %2154 = vmatprep.subr.bf16.mxu0 0
  %2155 = vmatpush2.bf16.msra.mxu0 0
  %2156 = vmatprep.subr.bf16.mxu0 0
  %2157 = vmatpush2.bf16.msra.mxu0 0
  %2158 = vmatprep.subr.bf16.mxu0 0
  %2159 = vmatpush2.bf16.msra.mxu0 0
  %2160 = vmatprep.subr.bf16.mxu0 0
  %2161 = vmatpush2.bf16.msra.mxu0 0
  %2162 = vmatprep.subr.bf16.mxu0 0
  %2163 = vmatpush2.bf16.msra.mxu0 0
  %2164 = vmatprep.subr.bf16.mxu0 0
  %2165 = vmatpush2.bf16.msra.mxu0 0
  %2166 = vmatprep.subr.bf16.mxu0 0
  %2167 = vmatpush2.bf16.msra.mxu0 0
  %2168 = vmatprep.subr.bf16.mxu0 0
  %2169 = vmatpush2.bf16.msra.mxu0 0
  %2170 = vmatprep.mubr.bf16.mxu0 0
  %2171 = vmatmul.mubr.bf16.gmra.mxu0 %v2093
  %v2172 = vpop.f32.mrf.mxu0
  %v2173 = vadd.f32 %v84, %v2172
  %v2174 = vpop.f32.mrf.mxu0
  %v2175 = vadd.f32 %v88, %v2174
  %v2176 = vpop.f32.mrf.mxu0
  %v2177 = vadd.f32 %v84, %v2176
  %v2178 = vpop.f32.mrf.mxu0
  %v2179 = vadd.f32 %v88, %v2178
  %2180 = vdwg.mxu0
  %2181 = vmatprep.subr.bf16.mxu0 %v334
  %2182 = vmatpush1.bf16.msra.mxu0 %v333
  %2183 = vmatprep.subr.bf16.mxu0 %v330
  %2184 = vmatpush1.bf16.msra.mxu0 %v329
  %2185 = vmatprep.subr.bf16.mxu0 %v326
  %2186 = vmatpush1.bf16.msra.mxu0 %v325
  %2187 = vmatprep.subr.bf16.mxu0 %v322
  %2188 = vmatpush1.bf16.msra.mxu0 %v321
  %2189 = vmatprep.subr.bf16.mxu0 %v318
  %2190 = vmatpush1.bf16.msra.mxu0 %v317
  %2191 = vmatprep.subr.bf16.mxu0 %v314
  %2192 = vmatpush1.bf16.msra.mxu0 %v313
  %2193 = vmatprep.subr.bf16.mxu0 %v310
  %2194 = vmatpush1.bf16.msra.mxu0 %v309
  %2195 = vmatprep.subr.bf16.mxu0 %v306
  %2196 = vmatpush1.bf16.msra.mxu0 %v305
  %2197 = vmatprep.subr.bf16.mxu0 0
  %2198 = vmatpush2.bf16.msra.mxu0 0
  %2199 = vmatprep.subr.bf16.mxu0 0
  %2200 = vmatpush2.bf16.msra.mxu0 0
  %2201 = vmatprep.subr.bf16.mxu0 0
  %2202 = vmatpush2.bf16.msra.mxu0 0
  %2203 = vmatprep.subr.bf16.mxu0 0
  %2204 = vmatpush2.bf16.msra.mxu0 0
  %2205 = vmatprep.subr.bf16.mxu0 0
  %2206 = vmatpush2.bf16.msra.mxu0 0
  %2207 = vmatprep.subr.bf16.mxu0 0
  %2208 = vmatpush2.bf16.msra.mxu0 0
  %2209 = vmatprep.subr.bf16.mxu0 0
  %2210 = vmatpush2.bf16.msra.mxu0 0
  %2211 = vmatprep.subr.bf16.mxu0 0
  %2212 = vmatpush2.bf16.msra.mxu0 0
  %2213 = vmatprep.mubr.bf16.mxu0 0
  %2214 = vmatmul.mubr.bf16.gmra.mxu0 %v2064
  %v2215 = vpop.f32.mrf.mxu0
  %v2216 = vadd.f32 0.0, %v2215
  %v2217 = vpop.f32.mrf.mxu0
  %v2218 = vadd.f32 0.0, %v2217
  %v2219 = vpop.f32.mrf.mxu0
  %v2220 = vadd.f32 0.0, %v2219
  %v2221 = vpop.f32.mrf.mxu0
  %v2222 = vadd.f32 0.0, %v2221
  %2223 = vdwg.mxu0
  %2224 = vmatprep.subr.bf16.mxu0 %v336
  %2225 = vmatpush1.bf16.msra.mxu0 %v335
  %2226 = vmatprep.subr.bf16.mxu0 %v332
  %2227 = vmatpush1.bf16.msra.mxu0 %v331
  %2228 = vmatprep.subr.bf16.mxu0 %v328
  %2229 = vmatpush1.bf16.msra.mxu0 %v327
  %2230 = vmatprep.subr.bf16.mxu0 %v324
  %2231 = vmatpush1.bf16.msra.mxu0 %v323
  %2232 = vmatprep.subr.bf16.mxu0 %v320
  %2233 = vmatpush1.bf16.msra.mxu0 %v319
  %2234 = vmatprep.subr.bf16.mxu0 %v316
  %2235 = vmatpush1.bf16.msra.mxu0 %v315
  %2236 = vmatprep.subr.bf16.mxu0 %v312
  %2237 = vmatpush1.bf16.msra.mxu0 %v311
  %2238 = vmatprep.subr.bf16.mxu0 %v308
  %2239 = vmatpush1.bf16.msra.mxu0 %v307
  %2240 = vmatprep.subr.bf16.mxu0 0
  %2241 = vmatpush2.bf16.msra.mxu0 0
  %2242 = vmatprep.subr.bf16.mxu0 0
  %2243 = vmatpush2.bf16.msra.mxu0 0
  %2244 = vmatprep.subr.bf16.mxu0 0
  %2245 = vmatpush2.bf16.msra.mxu0 0
  %2246 = vmatprep.subr.bf16.mxu0 0
  %2247 = vmatpush2.bf16.msra.mxu0 0
  %2248 = vmatprep.subr.bf16.mxu0 0
  %2249 = vmatpush2.bf16.msra.mxu0 0
  %2250 = vmatprep.subr.bf16.mxu0 0
  %2251 = vmatpush2.bf16.msra.mxu0 0
  %2252 = vmatprep.subr.bf16.mxu0 0
  %2253 = vmatpush2.bf16.msra.mxu0 0
  %2254 = vmatprep.subr.bf16.mxu0 0
  %2255 = vmatpush2.bf16.msra.mxu0 0
  %2256 = vmatprep.mubr.bf16.mxu0 0
  %2257 = vmatmul.mubr.bf16.gmra.mxu0 %v2064
  %v2258 = vpop.f32.mrf.mxu0
  %v2259 = vadd.f32 0.0, %v2258
  %v2260 = vpop.f32.mrf.mxu0
  %v2261 = vadd.f32 0.0, %v2260
  %v2262 = vpop.f32.mrf.mxu0
  %v2263 = vadd.f32 0.0, %v2262
  %v2264 = vpop.f32.mrf.mxu0
  %v2265 = vadd.f32 0.0, %v2264
  %2266 = vdwg.mxu0
  %v2267 = vadd.f32 %v2130, %v2216
  %v2268 = vadd.f32 %v2132, %v2218
  %v2269 = vadd.f32 %v2173, %v2259
  %v2270 = vadd.f32 %v2175, %v2261
  %v2271 = vadd.f32 %v2134, %v2220
  %v2272 = vadd.f32 %v2136, %v2222
  %v2273 = vadd.f32 %v2177, %v2263
  %v2274 = vadd.f32 %v2179, %v2265
  %v2275 = vxor.u32 %v2267, 2147483648
  %v2276 = vxor.u32 %v2271, 2147483648
  %v2277 = vmul.f32 %v2275, 1.442695
  %v2278 = vpow.pop %v2277
  %v2279 = vmul.f32 %v2276, 1.442695
  %v2280 = vpow.pop %v2279
  %v2281 = vadd.f32 %v2278, 1.0
  %v2282 = vadd.f32 %v2280, 1.0
  %v2283 = vrcp.pop %v2281
  %v2284 = vmul.f32 1.0, %v2283
  %v2285 = vrcp.pop %v2282
  %v2286 = vmul.f32 1.0, %v2285
  %v2287 = vxor.u32 %v2268, 2147483648
  %v2288 = vxor.u32 %v2272, 2147483648
  %v2289 = vmul.f32 %v2287, 1.442695
  %v2290 = vpow.pop %v2289
  %v2291 = vmul.f32 %v2288, 1.442695
  %v2292 = vpow.pop %v2291
  %v2293 = vadd.f32 %v2290, 1.0
  %v2294 = vadd.f32 %v2292, 1.0
  %v2295 = vrcp.pop %v2293
  %v2296 = vmul.f32 1.0, %v2295
  %v2297 = vrcp.pop %v2294
  %v2298 = vmul.f32 1.0, %v2297
  %v2299 = vtanh.pop %v2269
  %v2300 = vtanh.pop %v2273
  %v2301 = vxor.u32 %v2270, 2147483648
  %v2302 = vxor.u32 %v2274, 2147483648
  %v2303 = vmul.f32 %v2301, 1.442695
  %v2304 = vpow.pop %v2303
  %v2305 = vmul.f32 %v2302, 1.442695
  %v2306 = vpow.pop %v2305
  %v2307 = vadd.f32 %v2304, 1.0
  %v2308 = vadd.f32 %v2306, 1.0
  %v2309 = vrcp.pop %v2307
  %v2310 = vmul.f32 1.0, %v2309
  %v2311 = vrcp.pop %v2308
  %v2312 = vmul.f32 1.0, %v2311
  %v2313 = vmul.f32 %v2296, %v2058
  %v2314 = vmul.f32 %v2298, %v2059
  %v2315 = vmul.f32 %v2284, %v2299
  %v2316 = vmul.f32 %v2286, %v2300
  %v2317 = vadd.f32 %v2313, %v2315
  %v2318 = vadd.f32 %v2314, %v2316
  %v2319 = vtanh.pop %v2317
  %v2320 = vtanh.pop %v2318
  %v2321 = vmul.f32 %v2310, %v2319
  %v2322 = vmul.f32 %v2312, %v2320
  %v2323 = vpack.c.bf16 %v2322, %v2321
  %v2325 = vunpack.c.l.b16 %v2323
  %v2326 = vunpack.c.h.b16 %v2323
  %v2327 = vpack.c.b16 %v2325, %v2325
  %v2328 = vpack.c.b16 %v2326, %v2326
  %s2331 = scalar_lea.vmem %s4, 56
  %2332 = vst [vmem:[%s2331] sm:$0xf] %v2327
  %2333 = vst [vmem:[%s2331 + $0x4] sm:$0xf] %v2328
  %s2334 = sadd.s32 %s521, 7
  %p2335 = scmp.eq.s32.totalorder %s2334, 7
  // Predicated region
  $region50: #{rnn_block_lstm.1} parent=0 // pred_check
    %p2336 = pneg %p2335
  $region51: #{rnn_block_lstm.1} parent=0 // pred_check_branch
    %2338 = sbr.rel (%p2336) target = $region53
  $region52: #{rnn_block_lstm.1} parent=0 // pred_region
    %2339 = vst [vmem:[%s5] sm:$0xff] %v2321
    %2340 = vst [vmem:[%s5 + $0x8] sm:$0xff] %v2322
    %2341 = vst [vmem:[%s6] sm:$0xff] %v2317
    %2342 = vst [vmem:[%s6 + $0x8] sm:$0xff] %v2318
  $region53: #{rnn_block_lstm.1} parent=0 // pred_fallthru
    _
  %2343 = vst [vmem:[#allocation2] sm:$0xff] %v2321
  %2344 = vst [vmem:[#allocation2 + $0x8] sm:$0xff] %v2322
  %2345 = vst [vmem:[#allocation3] sm:$0xff] %v2317
  %2346 = vst [vmem:[#allocation3 + $0x8] sm:$0xff] %v2318
  // Predicated region
  $region54: #{rnn_block_lstm.1} parent=0 // pred_check
    _
  $region55: #{rnn_block_lstm.1} parent=0 // pred_check_branch
    %2348 = sbr.rel (0) target = $region57
  $region56: #{rnn_block_lstm.1} parent=0 // pred_region
    _
  $region57: #{rnn_block_lstm.1} parent=0 // pred_fallthru
    _
  // Predicated region
  $region58: #{rnn_block_lstm.1} parent=0 // pred_check
    _
  $region59: #{rnn_block_lstm.1} parent=0 // pred_check_branch
    %2350 = sbr.rel (0) target = $region61
  $region60: #{rnn_block_lstm.1} parent=0 // pred_region
    _
  $region61: #{rnn_block_lstm.1} parent=0 // pred_fallthru
    _
  // Predicated region
  $region62: #{rnn_block_lstm.1} parent=0 // pred_check
    _
  $region63: #{rnn_block_lstm.1} parent=0 // pred_check_branch
    %2352 = sbr.rel (0) target = $region65
  $region64: #{rnn_block_lstm.1} parent=0 // pred_region
    _
  $region65: #{rnn_block_lstm.1} parent=0 // pred_fallthru
    _
  // Predicated region
  $region66: #{rnn_block_lstm.1} parent=0 // pred_check
    _
  $region67: #{rnn_block_lstm.1} parent=0 // pred_check_branch
    %2354 = sbr.rel (0) target = $region69
  $region68: #{rnn_block_lstm.1} parent=0 // pred_region
    _
  $region69: #{rnn_block_lstm.1} parent=0 // pred_fallthru
    _
  // Predicated region
  $region70: #{rnn_block_lstm.1} parent=0 // pred_check
    _
  $region71: #{rnn_block_lstm.1} parent=0 // pred_check_branch
    %2356 = sbr.rel (0) target = $region73
  $region72: #{rnn_block_lstm.1} parent=0 // pred_region
    _
  $region73: #{rnn_block_lstm.1} parent=0 // pred_fallthru
    _
  // Predicated region
  $region74: #{rnn_block_lstm.1} parent=0 // pred_check
    _
  $region75: #{rnn_block_lstm.1} parent=0 // pred_check_branch
    %2358 = sbr.rel (0) target = $region77
  $region76: #{rnn_block_lstm.1} parent=0 // pred_region
    _
  $region77: #{rnn_block_lstm.1} parent=0 // pred_fallthru
    _

</llo_original>
